<compile_context>
chip_gen: v7x
topology: tpu7x:2x2x1
jax: 0.10.0
libtpu: 0.0.40
codegen_flags: <defaults>
</compile_context>

<pallas_src>
import functools

import jax
import jax.numpy as jnp
from jax.experimental import pallas as pl
from jax.experimental.pallas import tpu as pltpu


def _decoder_core_kernel(x_ref, zg_ref, h0_ref, c0_ref, wihx_ref, whh_ref,
                         wout_ref, bout_ref, y_ref, px_scr, hall_scr,
                         *, seq_len, b_pad, h_pad):
    """One-shot kernel: big input matmul + unrolled LSTM recurrence + batched fc_out.

    Shapes (padded): x (T*Bp, In) bf16, zg (Bp, 4Hp) f32, h0/c0 (Bp, Hp) f32,
    wihx (In, 4Hp) bf16, whh (Hp, 4Hp) bf16, wout (Hp, Op) bf16, bout (1, Op) f32,
    y (T*Bp, Op) f32.
    """
    Bp = b_pad
    Hp = h_pad

    # (1) Input contribution for ALL timesteps: one dense bf16 MXU matmul, f32 accum.
    px_scr[...] = jnp.dot(x_ref[...], wihx_ref[...],
                          preferred_element_type=jnp.float32)

    # Time-invariant z gate term, hoisted: lives in vregs across the unrolled loop.
    zg = zg_ref[...]

    # (2) Serial recurrence, fully unrolled (T is small and static).  Per step the only
    #     matmul is h @ W_hh (bf16 operands, f32 accumulation); gate slices are
    #     128-lane aligned (gate k owns lanes [k*Hp, (k+1)*Hp)); row slices of the
    #     scratches are 8-sublane aligned.
    h = h0_ref[...]
    c = c0_ref[...]
    for t in range(seq_len):
        r0 = t * Bp
        gates = (px_scr[r0:r0 + Bp, :] + zg
                 + jnp.dot(h.astype(jnp.bfloat16), whh_ref[...],
                           preferred_element_type=jnp.float32))
        # sigmoid(x) == 0.5*tanh(0.5*x) + 0.5 -> exactly one EUP op per gate.
        i_g = 0.5 * jnp.tanh(0.5 * gates[:, 0 * Hp:1 * Hp]) + 0.5
        f_g = 0.5 * jnp.tanh(0.5 * gates[:, 1 * Hp:2 * Hp]) + 0.5
        g_g = jnp.tanh(gates[:, 2 * Hp:3 * Hp])
        o_g = 0.5 * jnp.tanh(0.5 * gates[:, 3 * Hp:4 * Hp]) + 0.5
        c = f_g * c + i_g * g_g
        h = o_g * jnp.tanh(c)
        hall_scr[r0:r0 + Bp, :] = h

    # (3) Output projection for ALL timesteps: one bf16 MXU matmul, one lane-dense
    #     (128-wide, unmasked) writeback.
    y_ref[...] = (jnp.dot(hall_scr[...].astype(jnp.bfloat16), wout_ref[...],
                          preferred_element_type=jnp.float32) + bout_ref[...])


def make_decoder(params, input_size, h_size, z_size, out_size):
    """Builds the padded/bf16 weight layouts ONCE and returns a jitted forward fn."""
    del z_size  # implied by params / z shape
    LANE, SUB = 128, 8
    H = h_size
    Hp = pl.cdiv(H, LANE) * LANE          # each gate gets its own lane block(s)
    Op = pl.cdiv(out_size, LANE) * LANE   # lane-dense output projection

    def pad_gate_cols(w):                 # (..., 4H) -> (..., 4Hp), zero-filled
        out = jnp.zeros(w.shape[:-1] + (4 * Hp,), jnp.float32)
        for k in range(4):
            out = out.at[..., k * Hp:k * Hp + H].set(w[..., k * H:(k + 1) * H])
        return out

    def pad_rows(a, rows):                # zero-pad leading dim
        return jnp.zeros((rows,) + a.shape[1:], a.dtype).at[:a.shape[0]].set(a)

    w_ih_x = params["w_ih"][:input_size]                            # (in, 4H)
    w_ih_z = params["w_ih"][input_size:]                            # (z,  4H)

    # ---- constant weight layouts (built once, not per call) ----
    w_ih_x_p = pad_gate_cols(w_ih_x).astype(jnp.bfloat16)                        # (in, 4Hp)
    w_hh_p = pad_rows(pad_gate_cols(params["w_hh"]), Hp).astype(jnp.bfloat16)    # (Hp, 4Hp)
    w_out_p = (jnp.zeros((Hp, Op), jnp.float32)
               .at[:H, :out_size].set(params["w_out"]).astype(jnp.bfloat16))     # (Hp, Op)
    b_out_p = jnp.zeros((1, Op), jnp.float32).at[:, :out_size].set(params["b_out"])
    w_fc, b_fc = params["w_fc"], params["b_fc"]
    b_lstm = params["b_lstm"]

    @jax.jit
    def forward(x, z):
        T0, B, in_sz = x.shape
        T = T0 + 1
        Bp = pl.cdiv(B, SUB) * SUB

        # ---- z-dependent glue (plain XLA, one-shot per call) ----
        hc = jnp.tanh(z @ w_fc + b_fc)                              # (B, 2H)
        h0, c0 = hc[:, :H], hc[:, H:]
        zg = z @ w_ih_z + b_lstm                                    # (B, 4H), time-invariant

        zg_p = pad_rows(pad_gate_cols(zg), Bp)                      # (Bp, 4Hp)
        h0_p = pad_rows(jnp.pad(h0, ((0, 0), (0, Hp - H))), Bp)     # (Bp, Hp)
        c0_p = pad_rows(jnp.pad(c0, ((0, 0), (0, Hp - H))), Bp)     # (Bp, Hp)

        # Fused SOS prepend + batch pad + flatten: one pad, one column set, one reshape.
        # SOS token = [0, 0, 1, 0, 0]; padded batch rows are discarded at the end.
        x_flat = (jnp.pad(x, ((1, 0), (0, Bp - B), (0, 0)))
                  .at[0, :, 2].set(1.0)
                  .reshape(T * Bp, in_sz)
                  .astype(jnp.bfloat16))

        kernel = functools.partial(_decoder_core_kernel, seq_len=T, b_pad=Bp, h_pad=Hp)
        vmem_spec = pl.BlockSpec(memory_space=pltpu.MemorySpace.VMEM)

        y_flat = pl.pallas_call(
            kernel,
            out_shape=jax.ShapeDtypeStruct((T * Bp, Op), jnp.float32),
            in_specs=[vmem_spec] * 8,
            out_specs=vmem_spec,
            scratch_shapes=[
                pltpu.VMEM((T * Bp, 4 * Hp), jnp.float32),   # pre-gates, all timesteps
                pltpu.VMEM((T * Bp, Hp), jnp.float32),       # hidden-state history
            ],
        )(x_flat, zg_p, h0_p, c0_p, w_ih_x_p, w_hh_p, w_out_p, b_out_p)

        return y_flat.reshape(T, Bp, Op)[:, :B, :out_size]

    return forward


def decoder_forward_ref(x, z, params):
    """Pure-JAX f32 reference of the same training-mode forward (for correctness)."""
    T0, B, input_size = x.shape
    z_size = z.shape[1]
    H = params["w_hh"].shape[0]

    sos = jnp.tile(jnp.array([0.0, 0.0, 1.0, 0.0, 0.0], jnp.float32)[None, None, :],
                   (1, B, 1))
    x_sos = jnp.concatenate([sos, x], axis=0)
    z_exp = jnp.broadcast_to(z[None], (x_sos.shape[0], B, z_size))
    x_z = jnp.concatenate([x_sos, z_exp], axis=2)

    hc = jnp.tanh(z @ params["w_fc"] + params["b_fc"][0])
    h0, c0 = hc[:, :H], hc[:, H:]

    def step(carry, x_t):
        h, c = carry
        gates = x_t @ params["w_ih"] + h @ params["w_hh"] + params["b_lstm"][0]
        i = jax.nn.sigmoid(gates[:, 0 * H:1 * H])
        f = jax.nn.sigmoid(gates[:, 1 * H:2 * H])
        g = jnp.tanh(gates[:, 2 * H:3 * H])
        o = jax.nn.sigmoid(gates[:, 3 * H:4 * H])
        c = f * c + i * g
        h = o * jnp.tanh(c)
        y = h @ params["w_out"] + params["b_out"][0]
        return (h, c), y

    _, ys = jax.lax.scan(step, (h0, c0), x_z)
    return ys


if __name__ == "__main__":
    # Module hyper-params (input_size must be 5 — the SOS token is length 5).
    input_size, h_size, z_size, out_size = 5, 32, 8, 16
    seq, batch = 8, 2

    key = jax.random.PRNGKey(0)
    keys = jax.random.split(key, 10)

    def u(k, shape, fan_in):
        bound = 1.0 / (fan_in ** 0.5)
        return jax.random.uniform(k, shape, jnp.float32, -bound, bound)

    # Deterministic, PyTorch-style (uniform +/- 1/sqrt(fan_in)) parameter init.
    # Weights are stored transposed vs PyTorch ((in, out)) so matmuls are (B,in)@(in,out).
    params = dict(
        w_fc=u(keys[0], (z_size, 2 * h_size), z_size),
        b_fc=u(keys[1], (1, 2 * h_size), z_size),
        w_ih=u(keys[2], (input_size + z_size, 4 * h_size), h_size),
        w_hh=u(keys[3], (h_size, 4 * h_size), h_size),
        b_lstm=u(keys[4], (1, 4 * h_size), h_size) + u(keys[5], (1, 4 * h_size), h_size),
        w_out=u(keys[6], (h_size, out_size), h_size),
        b_out=u(keys[7], (1, out_size), h_size),
    )

    x = jax.random.normal(keys[8], (seq, batch, input_size), jnp.float32)
    z = jax.random.normal(keys[9], (batch, z_size), jnp.float32)

    decoder_fwd = make_decoder(params, input_size, h_size, z_size, out_size)
    y = jax.block_until_ready(decoder_fwd(x, z))
    y_ref = decoder_forward_ref(x, z, params)

    assert y.shape == (seq + 1, batch, out_size), y.shape
    # Tolerance loosened vs the f32 reference: MXU operands are bf16 (accumulation and
    # all gate/state math remain f32).
    assert jnp.allclose(y, y_ref, atol=5e-2, rtol=5e-2), "mismatch vs reference"
    print("KERNEL_OK")
</pallas_src>

<mosaic_0001>
module attributes {stable_mosaic.version = 11 : i64} {
  func.func @_decoder_core_kernel(%arg0: memref<72x5xbf16, #tpu.memory_space<vmem>>, %arg1: memref<8x512xf32, #tpu.memory_space<vmem>>, %arg2: memref<8x128xf32, #tpu.memory_space<vmem>>, %arg3: memref<8x128xf32, #tpu.memory_space<vmem>>, %arg4: memref<5x512xbf16, #tpu.memory_space<vmem>>, %arg5: memref<128x512xbf16, #tpu.memory_space<vmem>>, %arg6: memref<128x128xbf16, #tpu.memory_space<vmem>>, %arg7: memref<1x128xf32, #tpu.memory_space<vmem>>, %arg8: memref<72x128xf32, #tpu.memory_space<vmem>>, %arg9: memref<72x512xf32, #tpu.memory_space<vmem>>, %arg10: memref<72x128xf32, #tpu.memory_space<vmem>>) attributes {dimension_semantics = [], scalar_prefetch = 0 : i64, scratch_operands = 2 : i64, tpu.core_type = #tpu.core_type<tc>} {
    %c0 = arith.constant 0 : index
    %c0_0 = arith.constant 0 : index
    %0 = vector.load %arg0[%c0, %c0_0] : memref<72x5xbf16, #tpu.memory_space<vmem>>, vector<72x5xbf16>
    %c0_1 = arith.constant 0 : index
    %c0_2 = arith.constant 0 : index
    %1 = vector.load %arg4[%c0_1, %c0_2] : memref<5x512xbf16, #tpu.memory_space<vmem>>, vector<5x512xbf16>
    %cst = arith.constant dense<0.000000e+00> : vector<72x512xf32>
    %2 = tpu.matmul %0, %1, %cst {dimension_numbers = #tpu.dot_dimension_numbers<[1], [0], [0], [1], [0, 0, 1, 1], [], []>} : vector<72x5xbf16>, vector<5x512xbf16>, vector<72x512xf32> -> vector<72x512xf32>
    %c0_3 = arith.constant 0 : index
    %c0_4 = arith.constant 0 : index
    %3 = vector.load %arg9[%c0_3, %c0_4] : memref<72x512xf32, #tpu.memory_space<vmem>>, vector<72x512xf32>
    tpu.vector_store %arg9[%c0_3, %c0_4], %2 {strides = array<i32>} : memref<72x512xf32, #tpu.memory_space<vmem>>, vector<72x512xf32>,
    %c0_5 = arith.constant 0 : index
    %c0_6 = arith.constant 0 : index
    %4 = vector.load %arg1[%c0_5, %c0_6] : memref<8x512xf32, #tpu.memory_space<vmem>>, vector<8x512xf32>
    %c0_7 = arith.constant 0 : index
    %c0_8 = arith.constant 0 : index
    %5 = vector.load %arg2[%c0_7, %c0_8] : memref<8x128xf32, #tpu.memory_space<vmem>>, vector<8x128xf32>
    %c0_9 = arith.constant 0 : index
    %c0_10 = arith.constant 0 : index
    %6 = vector.load %arg3[%c0_9, %c0_10] : memref<8x128xf32, #tpu.memory_space<vmem>>, vector<8x128xf32>
    %c0_11 = arith.constant 0 : index
    %c0_12 = arith.constant 0 : index
    %7 = vector.load %arg9[%c0_11, %c0_12] : memref<72x512xf32, #tpu.memory_space<vmem>>, vector<8x512xf32>
    %8 = arith.addf %7, %4 : vector<8x512xf32>
    %9 = arith.truncf %5 : vector<8x128xf32> to vector<8x128xbf16>
    %c0_13 = arith.constant 0 : index
    %c0_14 = arith.constant 0 : index
    %10 = vector.load %arg5[%c0_13, %c0_14] : memref<128x512xbf16, #tpu.memory_space<vmem>>, vector<128x512xbf16>
    %cst_15 = arith.constant dense<0.000000e+00> : vector<8x512xf32>
    %11 = tpu.matmul %9, %10, %cst_15 {dimension_numbers = #tpu.dot_dimension_numbers<[1], [0], [0], [1], [0, 0, 1, 1], [], []>} : vector<8x128xbf16>, vector<128x512xbf16>, vector<8x512xf32> -> vector<8x512xf32>
    %12 = arith.addf %8, %11 : vector<8x512xf32>
    %13 = vector.extract_strided_slice %12 {offsets = [0, 0], sizes = [8, 128], strides = [1, 1]} : vector<8x512xf32> to vector<8x128xf32>
    %cst_16 = arith.constant 5.000000e-01 : f32
    %14 = vector.broadcast %cst_16 : f32 to vector<8x128xf32>
    %15 = arith.mulf %14, %13 : vector<8x128xf32>
    %16 = math.tanh %15 : vector<8x128xf32>
    %cst_17 = arith.constant 5.000000e-01 : f32
    %17 = vector.broadcast %cst_17 : f32 to vector<8x128xf32>
    %18 = arith.mulf %17, %16 : vector<8x128xf32>
    %cst_18 = arith.constant 5.000000e-01 : f32
    %19 = vector.broadcast %cst_18 : f32 to vector<8x128xf32>
    %20 = arith.addf %18, %19 : vector<8x128xf32>
    %21 = vector.extract_strided_slice %12 {offsets = [0, 128], sizes = [8, 128], strides = [1, 1]} : vector<8x512xf32> to vector<8x128xf32>
    %cst_19 = arith.constant 5.000000e-01 : f32
    %22 = vector.broadcast %cst_19 : f32 to vector<8x128xf32>
    %23 = arith.mulf %22, %21 : vector<8x128xf32>
    %24 = math.tanh %23 : vector<8x128xf32>
    %cst_20 = arith.constant 5.000000e-01 : f32
    %25 = vector.broadcast %cst_20 : f32 to vector<8x128xf32>
    %26 = arith.mulf %25, %24 : vector<8x128xf32>
    %cst_21 = arith.constant 5.000000e-01 : f32
    %27 = vector.broadcast %cst_21 : f32 to vector<8x128xf32>
    %28 = arith.addf %26, %27 : vector<8x128xf32>
    %29 = vector.extract_strided_slice %12 {offsets = [0, 256], sizes = [8, 128], strides = [1, 1]} : vector<8x512xf32> to vector<8x128xf32>
    %30 = math.tanh %29 : vector<8x128xf32>
    %31 = vector.extract_strided_slice %12 {offsets = [0, 384], sizes = [8, 128], strides = [1, 1]} : vector<8x512xf32> to vector<8x128xf32>
    %cst_22 = arith.constant 5.000000e-01 : f32
    %32 = vector.broadcast %cst_22 : f32 to vector<8x128xf32>
    %33 = arith.mulf %32, %31 : vector<8x128xf32>
    %34 = math.tanh %33 : vector<8x128xf32>
    %cst_23 = arith.constant 5.000000e-01 : f32
    %35 = vector.broadcast %cst_23 : f32 to vector<8x128xf32>
    %36 = arith.mulf %35, %34 : vector<8x128xf32>
    %cst_24 = arith.constant 5.000000e-01 : f32
    %37 = vector.broadcast %cst_24 : f32 to vector<8x128xf32>
    %38 = arith.addf %36, %37 : vector<8x128xf32>
    %39 = arith.mulf %28, %6 : vector<8x128xf32>
    %40 = arith.mulf %20, %30 : vector<8x128xf32>
    %41 = arith.addf %39, %40 : vector<8x128xf32>
    %42 = math.tanh %41 : vector<8x128xf32>
    %43 = arith.mulf %38, %42 : vector<8x128xf32>
    %c0_25 = arith.constant 0 : index
    %c0_26 = arith.constant 0 : index
    %44 = vector.load %arg10[%c0_25, %c0_26] : memref<72x128xf32, #tpu.memory_space<vmem>>, vector<8x128xf32>
    tpu.vector_store %arg10[%c0_25, %c0_26], %43 {strides = array<i32>} : memref<72x128xf32, #tpu.memory_space<vmem>>, vector<8x128xf32>,
    %c8 = arith.constant 8 : index
    %c0_27 = arith.constant 0 : index
    %45 = vector.load %arg9[%c8, %c0_27] : memref<72x512xf32, #tpu.memory_space<vmem>>, vector<8x512xf32>
    %46 = arith.addf %45, %4 : vector<8x512xf32>
    %47 = arith.truncf %43 : vector<8x128xf32> to vector<8x128xbf16>
    %c0_28 = arith.constant 0 : index
    %c0_29 = arith.constant 0 : index
    %48 = vector.load %arg5[%c0_28, %c0_29] : memref<128x512xbf16, #tpu.memory_space<vmem>>, vector<128x512xbf16>
    %cst_30 = arith.constant dense<0.000000e+00> : vector<8x512xf32>
    %49 = tpu.matmul %47, %48, %cst_30 {dimension_numbers = #tpu.dot_dimension_numbers<[1], [0], [0], [1], [0, 0, 1, 1], [], []>} : vector<8x128xbf16>, vector<128x512xbf16>, vector<8x512xf32> -> vector<8x512xf32>
    %50 = arith.addf %46, %49 : vector<8x512xf32>
    %51 = vector.extract_strided_slice %50 {offsets = [0, 0], sizes = [8, 128], strides = [1, 1]} : vector<8x512xf32> to vector<8x128xf32>
    %cst_31 = arith.constant 5.000000e-01 : f32
    %52 = vector.broadcast %cst_31 : f32 to vector<8x128xf32>
    %53 = arith.mulf %52, %51 : vector<8x128xf32>
    %54 = math.tanh %53 : vector<8x128xf32>
    %cst_32 = arith.constant 5.000000e-01 : f32
    %55 = vector.broadcast %cst_32 : f32 to vector<8x128xf32>
    %56 = arith.mulf %55, %54 : vector<8x128xf32>
    %cst_33 = arith.constant 5.000000e-01 : f32
    %57 = vector.broadcast %cst_33 : f32 to vector<8x128xf32>
    %58 = arith.addf %56, %57 : vector<8x128xf32>
    %59 = vector.extract_strided_slice %50 {offsets = [0, 128], sizes = [8, 128], strides = [1, 1]} : vector<8x512xf32> to vector<8x128xf32>
    %cst_34 = arith.constant 5.000000e-01 : f32
    %60 = vector.broadcast %cst_34 : f32 to vector<8x128xf32>
    %61 = arith.mulf %60, %59 : vector<8x128xf32>
    %62 = math.tanh %61 : vector<8x128xf32>
    %cst_35 = arith.constant 5.000000e-01 : f32
    %63 = vector.broadcast %cst_35 : f32 to vector<8x128xf32>
    %64 = arith.mulf %63, %62 : vector<8x128xf32>
    %cst_36 = arith.constant 5.000000e-01 : f32
    %65 = vector.broadcast %cst_36 : f32 to vector<8x128xf32>
    %66 = arith.addf %64, %65 : vector<8x128xf32>
    %67 = vector.extract_strided_slice %50 {offsets = [0, 256], sizes = [8, 128], strides = [1, 1]} : vector<8x512xf32> to vector<8x128xf32>
    %68 = math.tanh %67 : vector<8x128xf32>
    %69 = vector.extract_strided_slice %50 {offsets = [0, 384], sizes = [8, 128], strides = [1, 1]} : vector<8x512xf32> to vector<8x128xf32>
    %cst_37 = arith.constant 5.000000e-01 : f32
    %70 = vector.broadcast %cst_37 : f32 to vector<8x128xf32>
    %71 = arith.mulf %70, %69 : vector<8x128xf32>
    %72 = math.tanh %71 : vector<8x128xf32>
    %cst_38 = arith.constant 5.000000e-01 : f32
    %73 = vector.broadcast %cst_38 : f32 to vector<8x128xf32>
    %74 = arith.mulf %73, %72 : vector<8x128xf32>
    %cst_39 = arith.constant 5.000000e-01 : f32
    %75 = vector.broadcast %cst_39 : f32 to vector<8x128xf32>
    %76 = arith.addf %74, %75 : vector<8x128xf32>
    %77 = arith.mulf %66, %41 : vector<8x128xf32>
    %78 = arith.mulf %58, %68 : vector<8x128xf32>
    %79 = arith.addf %77, %78 : vector<8x128xf32>
    %80 = math.tanh %79 : vector<8x128xf32>
    %81 = arith.mulf %76, %80 : vector<8x128xf32>
    %c8_40 = arith.constant 8 : index
    %c0_41 = arith.constant 0 : index
    %82 = vector.load %arg10[%c8_40, %c0_41] : memref<72x128xf32, #tpu.memory_space<vmem>>, vector<8x128xf32>
    tpu.vector_store %arg10[%c8_40, %c0_41], %81 {strides = array<i32>} : memref<72x128xf32, #tpu.memory_space<vmem>>, vector<8x128xf32>,
    %c16 = arith.constant 16 : index
    %c0_42 = arith.constant 0 : index
    %83 = vector.load %arg9[%c16, %c0_42] : memref<72x512xf32, #tpu.memory_space<vmem>>, vector<8x512xf32>
    %84 = arith.addf %83, %4 : vector<8x512xf32>
    %85 = arith.truncf %81 : vector<8x128xf32> to vector<8x128xbf16>
    %c0_43 = arith.constant 0 : index
    %c0_44 = arith.constant 0 : index
    %86 = vector.load %arg5[%c0_43, %c0_44] : memref<128x512xbf16, #tpu.memory_space<vmem>>, vector<128x512xbf16>
    %cst_45 = arith.constant dense<0.000000e+00> : vector<8x512xf32>
    %87 = tpu.matmul %85, %86, %cst_45 {dimension_numbers = #tpu.dot_dimension_numbers<[1], [0], [0], [1], [0, 0, 1, 1], [], []>} : vector<8x128xbf16>, vector<128x512xbf16>, vector<8x512xf32> -> vector<8x512xf32>
    %88 = arith.addf %84, %87 : vector<8x512xf32>
    %89 = vector.extract_strided_slice %88 {offsets = [0, 0], sizes = [8, 128], strides = [1, 1]} : vector<8x512xf32> to vector<8x128xf32>
    %cst_46 = arith.constant 5.000000e-01 : f32
    %90 = vector.broadcast %cst_46 : f32 to vector<8x128xf32>
    %91 = arith.mulf %90, %89 : vector<8x128xf32>
    %92 = math.tanh %91 : vector<8x128xf32>
    %cst_47 = arith.constant 5.000000e-01 : f32
    %93 = vector.broadcast %cst_47 : f32 to vector<8x128xf32>
    %94 = arith.mulf %93, %92 : vector<8x128xf32>
    %cst_48 = arith.constant 5.000000e-01 : f32
    %95 = vector.broadcast %cst_48 : f32 to vector<8x128xf32>
    %96 = arith.addf %94, %95 : vector<8x128xf32>
    %97 = vector.extract_strided_slice %88 {offsets = [0, 128], sizes = [8, 128], strides = [1, 1]} : vector<8x512xf32> to vector<8x128xf32>
    %cst_49 = arith.constant 5.000000e-01 : f32
    %98 = vector.broadcast %cst_49 : f32 to vector<8x128xf32>
    %99 = arith.mulf %98, %97 : vector<8x128xf32>
    %100 = math.tanh %99 : vector<8x128xf32>
    %cst_50 = arith.constant 5.000000e-01 : f32
    %101 = vector.broadcast %cst_50 : f32 to vector<8x128xf32>
    %102 = arith.mulf %101, %100 : vector<8x128xf32>
    %cst_51 = arith.constant 5.000000e-01 : f32
    %103 = vector.broadcast %cst_51 : f32 to vector<8x128xf32>
    %104 = arith.addf %102, %103 : vector<8x128xf32>
    %105 = vector.extract_strided_slice %88 {offsets = [0, 256], sizes = [8, 128], strides = [1, 1]} : vector<8x512xf32> to vector<8x128xf32>
    %106 = math.tanh %105 : vector<8x128xf32>
    %107 = vector.extract_strided_slice %88 {offsets = [0, 384], sizes = [8, 128], strides = [1, 1]} : vector<8x512xf32> to vector<8x128xf32>
    %cst_52 = arith.constant 5.000000e-01 : f32
    %108 = vector.broadcast %cst_52 : f32 to vector<8x128xf32>
    %109 = arith.mulf %108, %107 : vector<8x128xf32>
    %110 = math.tanh %109 : vector<8x128xf32>
    %cst_53 = arith.constant 5.000000e-01 : f32
    %111 = vector.broadcast %cst_53 : f32 to vector<8x128xf32>
    %112 = arith.mulf %111, %110 : vector<8x128xf32>
    %cst_54 = arith.constant 5.000000e-01 : f32
    %113 = vector.broadcast %cst_54 : f32 to vector<8x128xf32>
    %114 = arith.addf %112, %113 : vector<8x128xf32>
    %115 = arith.mulf %104, %79 : vector<8x128xf32>
    %116 = arith.mulf %96, %106 : vector<8x128xf32>
    %117 = arith.addf %115, %116 : vector<8x128xf32>
    %118 = math.tanh %117 : vector<8x128xf32>
    %119 = arith.mulf %114, %118 : vector<8x128xf32>
    %c16_55 = arith.constant 16 : index
    %c0_56 = arith.constant 0 : index
    %120 = vector.load %arg10[%c16_55, %c0_56] : memref<72x128xf32, #tpu.memory_space<vmem>>, vector<8x128xf32>
    tpu.vector_store %arg10[%c16_55, %c0_56], %119 {strides = array<i32>} : memref<72x128xf32, #tpu.memory_space<vmem>>, vector<8x128xf32>,
    %c24 = arith.constant 24 : index
    %c0_57 = arith.constant 0 : index
    %121 = vector.load %arg9[%c24, %c0_57] : memref<72x512xf32, #tpu.memory_space<vmem>>, vector<8x512xf32>
    %122 = arith.addf %121, %4 : vector<8x512xf32>
    %123 = arith.truncf %119 : vector<8x128xf32> to vector<8x128xbf16>
    %c0_58 = arith.constant 0 : index
    %c0_59 = arith.constant 0 : index
    %124 = vector.load %arg5[%c0_58, %c0_59] : memref<128x512xbf16, #tpu.memory_space<vmem>>, vector<128x512xbf16>
    %cst_60 = arith.constant dense<0.000000e+00> : vector<8x512xf32>
    %125 = tpu.matmul %123, %124, %cst_60 {dimension_numbers = #tpu.dot_dimension_numbers<[1], [0], [0], [1], [0, 0, 1, 1], [], []>} : vector<8x128xbf16>, vector<128x512xbf16>, vector<8x512xf32> -> vector<8x512xf32>
    %126 = arith.addf %122, %125 : vector<8x512xf32>
    %127 = vector.extract_strided_slice %126 {offsets = [0, 0], sizes = [8, 128], strides = [1, 1]} : vector<8x512xf32> to vector<8x128xf32>
    %cst_61 = arith.constant 5.000000e-01 : f32
    %128 = vector.broadcast %cst_61 : f32 to vector<8x128xf32>
    %129 = arith.mulf %128, %127 : vector<8x128xf32>
    %130 = math.tanh %129 : vector<8x128xf32>
    %cst_62 = arith.constant 5.000000e-01 : f32
    %131 = vector.broadcast %cst_62 : f32 to vector<8x128xf32>
    %132 = arith.mulf %131, %130 : vector<8x128xf32>
    %cst_63 = arith.constant 5.000000e-01 : f32
    %133 = vector.broadcast %cst_63 : f32 to vector<8x128xf32>
    %134 = arith.addf %132, %133 : vector<8x128xf32>
    %135 = vector.extract_strided_slice %126 {offsets = [0, 128], sizes = [8, 128], strides = [1, 1]} : vector<8x512xf32> to vector<8x128xf32>
    %cst_64 = arith.constant 5.000000e-01 : f32
    %136 = vector.broadcast %cst_64 : f32 to vector<8x128xf32>
    %137 = arith.mulf %136, %135 : vector<8x128xf32>
    %138 = math.tanh %137 : vector<8x128xf32>
    %cst_65 = arith.constant 5.000000e-01 : f32
    %139 = vector.broadcast %cst_65 : f32 to vector<8x128xf32>
    %140 = arith.mulf %139, %138 : vector<8x128xf32>
    %cst_66 = arith.constant 5.000000e-01 : f32
    %141 = vector.broadcast %cst_66 : f32 to vector<8x128xf32>
    %142 = arith.addf %140, %141 : vector<8x128xf32>
    %143 = vector.extract_strided_slice %126 {offsets = [0, 256], sizes = [8, 128], strides = [1, 1]} : vector<8x512xf32> to vector<8x128xf32>
    %144 = math.tanh %143 : vector<8x128xf32>
    %145 = vector.extract_strided_slice %126 {offsets = [0, 384], sizes = [8, 128], strides = [1, 1]} : vector<8x512xf32> to vector<8x128xf32>
    %cst_67 = arith.constant 5.000000e-01 : f32
    %146 = vector.broadcast %cst_67 : f32 to vector<8x128xf32>
    %147 = arith.mulf %146, %145 : vector<8x128xf32>
    %148 = math.tanh %147 : vector<8x128xf32>
    %cst_68 = arith.constant 5.000000e-01 : f32
    %149 = vector.broadcast %cst_68 : f32 to vector<8x128xf32>
    %150 = arith.mulf %149, %148 : vector<8x128xf32>
    %cst_69 = arith.constant 5.000000e-01 : f32
    %151 = vector.broadcast %cst_69 : f32 to vector<8x128xf32>
    %152 = arith.addf %150, %151 : vector<8x128xf32>
    %153 = arith.mulf %142, %117 : vector<8x128xf32>
    %154 = arith.mulf %134, %144 : vector<8x128xf32>
    %155 = arith.addf %153, %154 : vector<8x128xf32>
    %156 = math.tanh %155 : vector<8x128xf32>
    %157 = arith.mulf %152, %156 : vector<8x128xf32>
    %c24_70 = arith.constant 24 : index
    %c0_71 = arith.constant 0 : index
    %158 = vector.load %arg10[%c24_70, %c0_71] : memref<72x128xf32, #tpu.memory_space<vmem>>, vector<8x128xf32>
    tpu.vector_store %arg10[%c24_70, %c0_71], %157 {strides = array<i32>} : memref<72x128xf32, #tpu.memory_space<vmem>>, vector<8x128xf32>,
    %c32 = arith.constant 32 : index
    %c0_72 = arith.constant 0 : index
    %159 = vector.load %arg9[%c32, %c0_72] : memref<72x512xf32, #tpu.memory_space<vmem>>, vector<8x512xf32>
    %160 = arith.addf %159, %4 : vector<8x512xf32>
    %161 = arith.truncf %157 : vector<8x128xf32> to vector<8x128xbf16>
    %c0_73 = arith.constant 0 : index
    %c0_74 = arith.constant 0 : index
    %162 = vector.load %arg5[%c0_73, %c0_74] : memref<128x512xbf16, #tpu.memory_space<vmem>>, vector<128x512xbf16>
    %cst_75 = arith.constant dense<0.000000e+00> : vector<8x512xf32>
    %163 = tpu.matmul %161, %162, %cst_75 {dimension_numbers = #tpu.dot_dimension_numbers<[1], [0], [0], [1], [0, 0, 1, 1], [], []>} : vector<8x128xbf16>, vector<128x512xbf16>, vector<8x512xf32> -> vector<8x512xf32>
    %164 = arith.addf %160, %163 : vector<8x512xf32>
    %165 = vector.extract_strided_slice %164 {offsets = [0, 0], sizes = [8, 128], strides = [1, 1]} : vector<8x512xf32> to vector<8x128xf32>
    %cst_76 = arith.constant 5.000000e-01 : f32
    %166 = vector.broadcast %cst_76 : f32 to vector<8x128xf32>
    %167 = arith.mulf %166, %165 : vector<8x128xf32>
    %168 = math.tanh %167 : vector<8x128xf32>
    %cst_77 = arith.constant 5.000000e-01 : f32
    %169 = vector.broadcast %cst_77 : f32 to vector<8x128xf32>
    %170 = arith.mulf %169, %168 : vector<8x128xf32>
    %cst_78 = arith.constant 5.000000e-01 : f32
    %171 = vector.broadcast %cst_78 : f32 to vector<8x128xf32>
    %172 = arith.addf %170, %171 : vector<8x128xf32>
    %173 = vector.extract_strided_slice %164 {offsets = [0, 128], sizes = [8, 128], strides = [1, 1]} : vector<8x512xf32> to vector<8x128xf32>
    %cst_79 = arith.constant 5.000000e-01 : f32
    %174 = vector.broadcast %cst_79 : f32 to vector<8x128xf32>
    %175 = arith.mulf %174, %173 : vector<8x128xf32>
    %176 = math.tanh %175 : vector<8x128xf32>
    %cst_80 = arith.constant 5.000000e-01 : f32
    %177 = vector.broadcast %cst_80 : f32 to vector<8x128xf32>
    %178 = arith.mulf %177, %176 : vector<8x128xf32>
    %cst_81 = arith.constant 5.000000e-01 : f32
    %179 = vector.broadcast %cst_81 : f32 to vector<8x128xf32>
    %180 = arith.addf %178, %179 : vector<8x128xf32>
    %181 = vector.extract_strided_slice %164 {offsets = [0, 256], sizes = [8, 128], strides = [1, 1]} : vector<8x512xf32> to vector<8x128xf32>
    %182 = math.tanh %181 : vector<8x128xf32>
    %183 = vector.extract_strided_slice %164 {offsets = [0, 384], sizes = [8, 128], strides = [1, 1]} : vector<8x512xf32> to vector<8x128xf32>
    %cst_82 = arith.constant 5.000000e-01 : f32
    %184 = vector.broadcast %cst_82 : f32 to vector<8x128xf32>
    %185 = arith.mulf %184, %183 : vector<8x128xf32>
    %186 = math.tanh %185 : vector<8x128xf32>
    %cst_83 = arith.constant 5.000000e-01 : f32
    %187 = vector.broadcast %cst_83 : f32 to vector<8x128xf32>
    %188 = arith.mulf %187, %186 : vector<8x128xf32>
    %cst_84 = arith.constant 5.000000e-01 : f32
    %189 = vector.broadcast %cst_84 : f32 to vector<8x128xf32>
    %190 = arith.addf %188, %189 : vector<8x128xf32>
    %191 = arith.mulf %180, %155 : vector<8x128xf32>
    %192 = arith.mulf %172, %182 : vector<8x128xf32>
    %193 = arith.addf %191, %192 : vector<8x128xf32>
    %194 = math.tanh %193 : vector<8x128xf32>
    %195 = arith.mulf %190, %194 : vector<8x128xf32>
    %c32_85 = arith.constant 32 : index
    %c0_86 = arith.constant 0 : index
    %196 = vector.load %arg10[%c32_85, %c0_86] : memref<72x128xf32, #tpu.memory_space<vmem>>, vector<8x128xf32>
    tpu.vector_store %arg10[%c32_85, %c0_86], %195 {strides = array<i32>} : memref<72x128xf32, #tpu.memory_space<vmem>>, vector<8x128xf32>,
    %c40 = arith.constant 40 : index
    %c0_87 = arith.constant 0 : index
    %197 = vector.load %arg9[%c40, %c0_87] : memref<72x512xf32, #tpu.memory_space<vmem>>, vector<8x512xf32>
    %198 = arith.addf %197, %4 : vector<8x512xf32>
    %199 = arith.truncf %195 : vector<8x128xf32> to vector<8x128xbf16>
    %c0_88 = arith.constant 0 : index
    %c0_89 = arith.constant 0 : index
    %200 = vector.load %arg5[%c0_88, %c0_89] : memref<128x512xbf16, #tpu.memory_space<vmem>>, vector<128x512xbf16>
    %cst_90 = arith.constant dense<0.000000e+00> : vector<8x512xf32>
    %201 = tpu.matmul %199, %200, %cst_90 {dimension_numbers = #tpu.dot_dimension_numbers<[1], [0], [0], [1], [0, 0, 1, 1], [], []>} : vector<8x128xbf16>, vector<128x512xbf16>, vector<8x512xf32> -> vector<8x512xf32>
    %202 = arith.addf %198, %201 : vector<8x512xf32>
    %203 = vector.extract_strided_slice %202 {offsets = [0, 0], sizes = [8, 128], strides = [1, 1]} : vector<8x512xf32> to vector<8x128xf32>
    %cst_91 = arith.constant 5.000000e-01 : f32
    %204 = vector.broadcast %cst_91 : f32 to vector<8x128xf32>
    %205 = arith.mulf %204, %203 : vector<8x128xf32>
    %206 = math.tanh %205 : vector<8x128xf32>
    %cst_92 = arith.constant 5.000000e-01 : f32
    %207 = vector.broadcast %cst_92 : f32 to vector<8x128xf32>
    %208 = arith.mulf %207, %206 : vector<8x128xf32>
    %cst_93 = arith.constant 5.000000e-01 : f32
    %209 = vector.broadcast %cst_93 : f32 to vector<8x128xf32>
    %210 = arith.addf %208, %209 : vector<8x128xf32>
    %211 = vector.extract_strided_slice %202 {offsets = [0, 128], sizes = [8, 128], strides = [1, 1]} : vector<8x512xf32> to vector<8x128xf32>
    %cst_94 = arith.constant 5.000000e-01 : f32
    %212 = vector.broadcast %cst_94 : f32 to vector<8x128xf32>
    %213 = arith.mulf %212, %211 : vector<8x128xf32>
    %214 = math.tanh %213 : vector<8x128xf32>
    %cst_95 = arith.constant 5.000000e-01 : f32
    %215 = vector.broadcast %cst_95 : f32 to vector<8x128xf32>
    %216 = arith.mulf %215, %214 : vector<8x128xf32>
    %cst_96 = arith.constant 5.000000e-01 : f32
    %217 = vector.broadcast %cst_96 : f32 to vector<8x128xf32>
    %218 = arith.addf %216, %217 : vector<8x128xf32>
    %219 = vector.extract_strided_slice %202 {offsets = [0, 256], sizes = [8, 128], strides = [1, 1]} : vector<8x512xf32> to vector<8x128xf32>
    %220 = math.tanh %219 : vector<8x128xf32>
    %221 = vector.extract_strided_slice %202 {offsets = [0, 384], sizes = [8, 128], strides = [1, 1]} : vector<8x512xf32> to vector<8x128xf32>
    %cst_97 = arith.constant 5.000000e-01 : f32
    %222 = vector.broadcast %cst_97 : f32 to vector<8x128xf32>
    %223 = arith.mulf %222, %221 : vector<8x128xf32>
    %224 = math.tanh %223 : vector<8x128xf32>
    %cst_98 = arith.constant 5.000000e-01 : f32
    %225 = vector.broadcast %cst_98 : f32 to vector<8x128xf32>
    %226 = arith.mulf %225, %224 : vector<8x128xf32>
    %cst_99 = arith.constant 5.000000e-01 : f32
    %227 = vector.broadcast %cst_99 : f32 to vector<8x128xf32>
    %228 = arith.addf %226, %227 : vector<8x128xf32>
    %229 = arith.mulf %218, %193 : vector<8x128xf32>
    %230 = arith.mulf %210, %220 : vector<8x128xf32>
    %231 = arith.addf %229, %230 : vector<8x128xf32>
    %232 = math.tanh %231 : vector<8x128xf32>
    %233 = arith.mulf %228, %232 : vector<8x128xf32>
    %c40_100 = arith.constant 40 : index
    %c0_101 = arith.constant 0 : index
    %234 = vector.load %arg10[%c40_100, %c0_101] : memref<72x128xf32, #tpu.memory_space<vmem>>, vector<8x128xf32>
    tpu.vector_store %arg10[%c40_100, %c0_101], %233 {strides = array<i32>} : memref<72x128xf32, #tpu.memory_space<vmem>>, vector<8x128xf32>,
    %c48 = arith.constant 48 : index
    %c0_102 = arith.constant 0 : index
    %235 = vector.load %arg9[%c48, %c0_102] : memref<72x512xf32, #tpu.memory_space<vmem>>, vector<8x512xf32>
    %236 = arith.addf %235, %4 : vector<8x512xf32>
    %237 = arith.truncf %233 : vector<8x128xf32> to vector<8x128xbf16>
    %c0_103 = arith.constant 0 : index
    %c0_104 = arith.constant 0 : index
    %238 = vector.load %arg5[%c0_103, %c0_104] : memref<128x512xbf16, #tpu.memory_space<vmem>>, vector<128x512xbf16>
    %cst_105 = arith.constant dense<0.000000e+00> : vector<8x512xf32>
    %239 = tpu.matmul %237, %238, %cst_105 {dimension_numbers = #tpu.dot_dimension_numbers<[1], [0], [0], [1], [0, 0, 1, 1], [], []>} : vector<8x128xbf16>, vector<128x512xbf16>, vector<8x512xf32> -> vector<8x512xf32>
    %240 = arith.addf %236, %239 : vector<8x512xf32>
    %241 = vector.extract_strided_slice %240 {offsets = [0, 0], sizes = [8, 128], strides = [1, 1]} : vector<8x512xf32> to vector<8x128xf32>
    %cst_106 = arith.constant 5.000000e-01 : f32
    %242 = vector.broadcast %cst_106 : f32 to vector<8x128xf32>
    %243 = arith.mulf %242, %241 : vector<8x128xf32>
    %244 = math.tanh %243 : vector<8x128xf32>
    %cst_107 = arith.constant 5.000000e-01 : f32
    %245 = vector.broadcast %cst_107 : f32 to vector<8x128xf32>
    %246 = arith.mulf %245, %244 : vector<8x128xf32>
    %cst_108 = arith.constant 5.000000e-01 : f32
    %247 = vector.broadcast %cst_108 : f32 to vector<8x128xf32>
    %248 = arith.addf %246, %247 : vector<8x128xf32>
    %249 = vector.extract_strided_slice %240 {offsets = [0, 128], sizes = [8, 128], strides = [1, 1]} : vector<8x512xf32> to vector<8x128xf32>
    %cst_109 = arith.constant 5.000000e-01 : f32
    %250 = vector.broadcast %cst_109 : f32 to vector<8x128xf32>
    %251 = arith.mulf %250, %249 : vector<8x128xf32>
    %252 = math.tanh %251 : vector<8x128xf32>
    %cst_110 = arith.constant 5.000000e-01 : f32
    %253 = vector.broadcast %cst_110 : f32 to vector<8x128xf32>
    %254 = arith.mulf %253, %252 : vector<8x128xf32>
    %cst_111 = arith.constant 5.000000e-01 : f32
    %255 = vector.broadcast %cst_111 : f32 to vector<8x128xf32>
    %256 = arith.addf %254, %255 : vector<8x128xf32>
    %257 = vector.extract_strided_slice %240 {offsets = [0, 256], sizes = [8, 128], strides = [1, 1]} : vector<8x512xf32> to vector<8x128xf32>
    %258 = math.tanh %257 : vector<8x128xf32>
    %259 = vector.extract_strided_slice %240 {offsets = [0, 384], sizes = [8, 128], strides = [1, 1]} : vector<8x512xf32> to vector<8x128xf32>
    %cst_112 = arith.constant 5.000000e-01 : f32
    %260 = vector.broadcast %cst_112 : f32 to vector<8x128xf32>
    %261 = arith.mulf %260, %259 : vector<8x128xf32>
    %262 = math.tanh %261 : vector<8x128xf32>
    %cst_113 = arith.constant 5.000000e-01 : f32
    %263 = vector.broadcast %cst_113 : f32 to vector<8x128xf32>
    %264 = arith.mulf %263, %262 : vector<8x128xf32>
    %cst_114 = arith.constant 5.000000e-01 : f32
    %265 = vector.broadcast %cst_114 : f32 to vector<8x128xf32>
    %266 = arith.addf %264, %265 : vector<8x128xf32>
    %267 = arith.mulf %256, %231 : vector<8x128xf32>
    %268 = arith.mulf %248, %258 : vector<8x128xf32>
    %269 = arith.addf %267, %268 : vector<8x128xf32>
    %270 = math.tanh %269 : vector<8x128xf32>
    %271 = arith.mulf %266, %270 : vector<8x128xf32>
    %c48_115 = arith.constant 48 : index
    %c0_116 = arith.constant 0 : index
    %272 = vector.load %arg10[%c48_115, %c0_116] : memref<72x128xf32, #tpu.memory_space<vmem>>, vector<8x128xf32>
    tpu.vector_store %arg10[%c48_115, %c0_116], %271 {strides = array<i32>} : memref<72x128xf32, #tpu.memory_space<vmem>>, vector<8x128xf32>,
    %c56 = arith.constant 56 : index
    %c0_117 = arith.constant 0 : index
    %273 = vector.load %arg9[%c56, %c0_117] : memref<72x512xf32, #tpu.memory_space<vmem>>, vector<8x512xf32>
    %274 = arith.addf %273, %4 : vector<8x512xf32>
    %275 = arith.truncf %271 : vector<8x128xf32> to vector<8x128xbf16>
    %c0_118 = arith.constant 0 : index
    %c0_119 = arith.constant 0 : index
    %276 = vector.load %arg5[%c0_118, %c0_119] : memref<128x512xbf16, #tpu.memory_space<vmem>>, vector<128x512xbf16>
    %cst_120 = arith.constant dense<0.000000e+00> : vector<8x512xf32>
    %277 = tpu.matmul %275, %276, %cst_120 {dimension_numbers = #tpu.dot_dimension_numbers<[1], [0], [0], [1], [0, 0, 1, 1], [], []>} : vector<8x128xbf16>, vector<128x512xbf16>, vector<8x512xf32> -> vector<8x512xf32>
    %278 = arith.addf %274, %277 : vector<8x512xf32>
    %279 = vector.extract_strided_slice %278 {offsets = [0, 0], sizes = [8, 128], strides = [1, 1]} : vector<8x512xf32> to vector<8x128xf32>
    %cst_121 = arith.constant 5.000000e-01 : f32
    %280 = vector.broadcast %cst_121 : f32 to vector<8x128xf32>
    %281 = arith.mulf %280, %279 : vector<8x128xf32>
    %282 = math.tanh %281 : vector<8x128xf32>
    %cst_122 = arith.constant 5.000000e-01 : f32
    %283 = vector.broadcast %cst_122 : f32 to vector<8x128xf32>
    %284 = arith.mulf %283, %282 : vector<8x128xf32>
    %cst_123 = arith.constant 5.000000e-01 : f32
    %285 = vector.broadcast %cst_123 : f32 to vector<8x128xf32>
    %286 = arith.addf %284, %285 : vector<8x128xf32>
    %287 = vector.extract_strided_slice %278 {offsets = [0, 128], sizes = [8, 128], strides = [1, 1]} : vector<8x512xf32> to vector<8x128xf32>
    %cst_124 = arith.constant 5.000000e-01 : f32
    %288 = vector.broadcast %cst_124 : f32 to vector<8x128xf32>
    %289 = arith.mulf %288, %287 : vector<8x128xf32>
    %290 = math.tanh %289 : vector<8x128xf32>
    %cst_125 = arith.constant 5.000000e-01 : f32
    %291 = vector.broadcast %cst_125 : f32 to vector<8x128xf32>
    %292 = arith.mulf %291, %290 : vector<8x128xf32>
    %cst_126 = arith.constant 5.000000e-01 : f32
    %293 = vector.broadcast %cst_126 : f32 to vector<8x128xf32>
    %294 = arith.addf %292, %293 : vector<8x128xf32>
    %295 = vector.extract_strided_slice %278 {offsets = [0, 256], sizes = [8, 128], strides = [1, 1]} : vector<8x512xf32> to vector<8x128xf32>
    %296 = math.tanh %295 : vector<8x128xf32>
    %297 = vector.extract_strided_slice %278 {offsets = [0, 384], sizes = [8, 128], strides = [1, 1]} : vector<8x512xf32> to vector<8x128xf32>
    %cst_127 = arith.constant 5.000000e-01 : f32
    %298 = vector.broadcast %cst_127 : f32 to vector<8x128xf32>
    %299 = arith.mulf %298, %297 : vector<8x128xf32>
    %300 = math.tanh %299 : vector<8x128xf32>
    %cst_128 = arith.constant 5.000000e-01 : f32
    %301 = vector.broadcast %cst_128 : f32 to vector<8x128xf32>
    %302 = arith.mulf %301, %300 : vector<8x128xf32>
    %cst_129 = arith.constant 5.000000e-01 : f32
    %303 = vector.broadcast %cst_129 : f32 to vector<8x128xf32>
    %304 = arith.addf %302, %303 : vector<8x128xf32>
    %305 = arith.mulf %294, %269 : vector<8x128xf32>
    %306 = arith.mulf %286, %296 : vector<8x128xf32>
    %307 = arith.addf %305, %306 : vector<8x128xf32>
    %308 = math.tanh %307 : vector<8x128xf32>
    %309 = arith.mulf %304, %308 : vector<8x128xf32>
    %c56_130 = arith.constant 56 : index
    %c0_131 = arith.constant 0 : index
    %310 = vector.load %arg10[%c56_130, %c0_131] : memref<72x128xf32, #tpu.memory_space<vmem>>, vector<8x128xf32>
    tpu.vector_store %arg10[%c56_130, %c0_131], %309 {strides = array<i32>} : memref<72x128xf32, #tpu.memory_space<vmem>>, vector<8x128xf32>,
    %c64 = arith.constant 64 : index
    %c0_132 = arith.constant 0 : index
    %311 = vector.load %arg9[%c64, %c0_132] : memref<72x512xf32, #tpu.memory_space<vmem>>, vector<8x512xf32>
    %312 = arith.addf %311, %4 : vector<8x512xf32>
    %313 = arith.truncf %309 : vector<8x128xf32> to vector<8x128xbf16>
    %c0_133 = arith.constant 0 : index
    %c0_134 = arith.constant 0 : index
    %314 = vector.load %arg5[%c0_133, %c0_134] : memref<128x512xbf16, #tpu.memory_space<vmem>>, vector<128x512xbf16>
    %cst_135 = arith.constant dense<0.000000e+00> : vector<8x512xf32>
    %315 = tpu.matmul %313, %314, %cst_135 {dimension_numbers = #tpu.dot_dimension_numbers<[1], [0], [0], [1], [0, 0, 1, 1], [], []>} : vector<8x128xbf16>, vector<128x512xbf16>, vector<8x512xf32> -> vector<8x512xf32>
    %316 = arith.addf %312, %315 : vector<8x512xf32>
    %317 = vector.extract_strided_slice %316 {offsets = [0, 0], sizes = [8, 128], strides = [1, 1]} : vector<8x512xf32> to vector<8x128xf32>
    %cst_136 = arith.constant 5.000000e-01 : f32
    %318 = vector.broadcast %cst_136 : f32 to vector<8x128xf32>
    %319 = arith.mulf %318, %317 : vector<8x128xf32>
    %320 = math.tanh %319 : vector<8x128xf32>
    %cst_137 = arith.constant 5.000000e-01 : f32
    %321 = vector.broadcast %cst_137 : f32 to vector<8x128xf32>
    %322 = arith.mulf %321, %320 : vector<8x128xf32>
    %cst_138 = arith.constant 5.000000e-01 : f32
    %323 = vector.broadcast %cst_138 : f32 to vector<8x128xf32>
    %324 = arith.addf %322, %323 : vector<8x128xf32>
    %325 = vector.extract_strided_slice %316 {offsets = [0, 128], sizes = [8, 128], strides = [1, 1]} : vector<8x512xf32> to vector<8x128xf32>
    %cst_139 = arith.constant 5.000000e-01 : f32
    %326 = vector.broadcast %cst_139 : f32 to vector<8x128xf32>
    %327 = arith.mulf %326, %325 : vector<8x128xf32>
    %328 = math.tanh %327 : vector<8x128xf32>
    %cst_140 = arith.constant 5.000000e-01 : f32
    %329 = vector.broadcast %cst_140 : f32 to vector<8x128xf32>
    %330 = arith.mulf %329, %328 : vector<8x128xf32>
    %cst_141 = arith.constant 5.000000e-01 : f32
    %331 = vector.broadcast %cst_141 : f32 to vector<8x128xf32>
    %332 = arith.addf %330, %331 : vector<8x128xf32>
    %333 = vector.extract_strided_slice %316 {offsets = [0, 256], sizes = [8, 128], strides = [1, 1]} : vector<8x512xf32> to vector<8x128xf32>
    %334 = math.tanh %333 : vector<8x128xf32>
    %335 = vector.extract_strided_slice %316 {offsets = [0, 384], sizes = [8, 128], strides = [1, 1]} : vector<8x512xf32> to vector<8x128xf32>
    %cst_142 = arith.constant 5.000000e-01 : f32
    %336 = vector.broadcast %cst_142 : f32 to vector<8x128xf32>
    %337 = arith.mulf %336, %335 : vector<8x128xf32>
    %338 = math.tanh %337 : vector<8x128xf32>
    %cst_143 = arith.constant 5.000000e-01 : f32
    %339 = vector.broadcast %cst_143 : f32 to vector<8x128xf32>
    %340 = arith.mulf %339, %338 : vector<8x128xf32>
    %cst_144 = arith.constant 5.000000e-01 : f32
    %341 = vector.broadcast %cst_144 : f32 to vector<8x128xf32>
    %342 = arith.addf %340, %341 : vector<8x128xf32>
    %343 = arith.mulf %332, %307 : vector<8x128xf32>
    %344 = arith.mulf %324, %334 : vector<8x128xf32>
    %345 = arith.addf %343, %344 : vector<8x128xf32>
    %346 = math.tanh %345 : vector<8x128xf32>
    %347 = arith.mulf %342, %346 : vector<8x128xf32>
    %c64_145 = arith.constant 64 : index
    %c0_146 = arith.constant 0 : index
    %348 = vector.load %arg10[%c64_145, %c0_146] : memref<72x128xf32, #tpu.memory_space<vmem>>, vector<8x128xf32>
    tpu.vector_store %arg10[%c64_145, %c0_146], %347 {strides = array<i32>} : memref<72x128xf32, #tpu.memory_space<vmem>>, vector<8x128xf32>,
    %c0_147 = arith.constant 0 : index
    %c0_148 = arith.constant 0 : index
    %349 = vector.load %arg10[%c0_147, %c0_148] : memref<72x128xf32, #tpu.memory_space<vmem>>, vector<72x128xf32>
    %350 = arith.truncf %349 : vector<72x128xf32> to vector<72x128xbf16>
    %c0_149 = arith.constant 0 : index
    %c0_150 = arith.constant 0 : index
    %351 = vector.load %arg6[%c0_149, %c0_150] : memref<128x128xbf16, #tpu.memory_space<vmem>>, vector<128x128xbf16>
    %cst_151 = arith.constant dense<0.000000e+00> : vector<72x128xf32>
    %352 = tpu.matmul %350, %351, %cst_151 {dimension_numbers = #tpu.dot_dimension_numbers<[1], [0], [0], [1], [0, 0, 1, 1], [], []>} : vector<72x128xbf16>, vector<128x128xbf16>, vector<72x128xf32> -> vector<72x128xf32>
    %c0_152 = arith.constant 0 : index
    %c0_153 = arith.constant 0 : index
    %353 = vector.load %arg7[%c0_152, %c0_153] : memref<1x128xf32, #tpu.memory_space<vmem>>, vector<1x128xf32>
    %354 = vector.broadcast %353 : vector<1x128xf32> to vector<72x128xf32>
    %355 = arith.addf %352, %354 : vector<72x128xf32>
    %c0_154 = arith.constant 0 : index
    %c0_155 = arith.constant 0 : index
    %356 = vector.load %arg8[%c0_154, %c0_155] : memref<72x128xf32, #tpu.memory_space<vmem>>, vector<72x128xf32>
    tpu.vector_store %arg8[%c0_154, %c0_155], %355 {strides = array<i32>} : memref<72x128xf32, #tpu.memory_space<vmem>>, vector<72x128xf32>,
    return
  }
}

</mosaic_0001>

<llo_original>
// kernel: forward.1
$region0: #{forward.1}
  #allocation0 [shape = 'u32[]', space=smem, size = 0x4, offset = 0x4, fixed_abs, tag = 'smem constant byte address 0x4 - core index']
  #allocation1 [shape = 'u32[144,128]{1,0:T(1,128)}', space=vmem, size = 0x12000, scoped, tag = 'internal scratch']
  #allocation2 [shape = 'f32[72,512]{1,0:T(8,128)}', space=vmem, size = 0x24000, scoped, tag = 'scratch operand']
  #allocation3 [shape = 'f32[72,128]{1,0:T(8,128)}', space=vmem, size = 0x9000, scoped, tag = 'scratch operand']
  %s0 = inlined_call_operand.vmem [shape: bf16[72,5], index: 0, kind: input, shape index: {}]
  %s1 = inlined_call_operand.vmem [shape: f32[8,512], index: 1, kind: input, shape index: {}]
  %s2 = inlined_call_operand.vmem [shape: f32[8,128], index: 2, kind: input, shape index: {}]
  %s3 = inlined_call_operand.vmem [shape: f32[8,128], index: 3, kind: input, shape index: {}]
  %s4 = inlined_call_operand.vmem [shape: bf16[5,512], index: 4, kind: input, shape index: {}]
  %s5 = inlined_call_operand.vmem [shape: bf16[128,512], index: 5, kind: input, shape index: {}]
  %s6 = inlined_call_operand.vmem [shape: bf16[128,128], index: 6, kind: input, shape index: {}]
  %s7 = inlined_call_operand.vmem [shape: f32[1,128], index: 7, kind: input, shape index: {}]
  %s8 = inlined_call_operand.vmem [shape: f32[72,128], index: 8, kind: output, shape index: {}]
  %s9 = sld [smem:[#allocation0]]
  $region42: #{forward.1} parent=0
    _
  %s11 = ssub.s32 1, %s9
  %s12 = scalar_select 0, %s11, %s9
  // Predicated region
  $region2: #{forward.1} parent=0 // pred_check
    _
  $region3: #{forward.1} parent=0 // pred_check_branch
    %14 = sbr.rel (0) target = $region5
  $region4: #{forward.1} parent=0 // pred_region
    _
  $region5: #{forward.1} parent=0 // pred_fallthru
    _
  // Predicated region
  $region6: #{forward.1} parent=0 // pred_check
    _
  $region7: #{forward.1} parent=0 // pred_check_branch
    %16 = sbr.rel (0) target = $region9
  $region8: #{forward.1} parent=0 // pred_region
    _
  $region9: #{forward.1} parent=0 // pred_fallthru
    _
  // Predicated region
  $region10: #{forward.1} parent=0 // pred_check
    _
  $region11: #{forward.1} parent=0 // pred_check_branch
    %18 = sbr.rel (0) target = $region13
  $region12: #{forward.1} parent=0 // pred_region
    _
  $region13: #{forward.1} parent=0 // pred_fallthru
    _
  // Predicated region
  $region14: #{forward.1} parent=0 // pred_check
    _
  $region15: #{forward.1} parent=0 // pred_check_branch
    %20 = sbr.rel (0) target = $region17
  $region16: #{forward.1} parent=0 // pred_region
    _
  $region17: #{forward.1} parent=0 // pred_fallthru
    _
  // Predicated region
  $region18: #{forward.1} parent=0 // pred_check
    _
  $region19: #{forward.1} parent=0 // pred_check_branch
    %22 = sbr.rel (0) target = $region21
  $region20: #{forward.1} parent=0 // pred_region
    _
  $region21: #{forward.1} parent=0 // pred_fallthru
    _
  // Predicated region
  $region22: #{forward.1} parent=0 // pred_check
    _
  $region23: #{forward.1} parent=0 // pred_check_branch
    %24 = sbr.rel (0) target = $region25
  $region24: #{forward.1} parent=0 // pred_region
    _
  $region25: #{forward.1} parent=0 // pred_fallthru
    _
  // Predicated region
  $region26: #{forward.1} parent=0 // pred_check
    _
  $region27: #{forward.1} parent=0 // pred_check_branch
    %26 = sbr.rel (0) target = $region29
  $region28: #{forward.1} parent=0 // pred_region
    _
  $region29: #{forward.1} parent=0 // pred_fallthru
    _
  // Predicated region
  $region30: #{forward.1} parent=0 // pred_check
    _
  $region31: #{forward.1} parent=0 // pred_check_branch
    %28 = sbr.rel (0) target = $region33
  $region32: #{forward.1} parent=0 // pred_region
    _
  $region33: #{forward.1} parent=0 // pred_fallthru
    _
  %v30 = vld [vmem:[%s0] sm:$0xf]
  %v31 = vld [vmem:[%s0 + $0x4] sm:$0xf]
  %v32 = vld [vmem:[%s0 + $0x8] sm:$0xf]
  %v33 = vld [vmem:[%s0 + $0xc] sm:$0xf]
  %v34 = vld [vmem:[%s0 + $0x10] sm:$0xf]
  %v35 = vld [vmem:[%s0 + $0x14] sm:$0xf]
  %v36 = vld [vmem:[%s0 + $0x18] sm:$0xf]
  %v37 = vld [vmem:[%s0 + $0x1c] sm:$0xf]
  %v38 = vld [vmem:[%s0 + $0x20] sm:$0xf]
  %v39 = vld [vmem:[%s4] sm:$0x77]
  %v40 = vld [vmem:[%s4 + $0x8] sm:$0x77]
  %v50 = vunpack.c.l.b16 %v30
  %v51 = vunpack.c.l.b16 %v31
  %v52 = vunpack.c.l.b16 %v32
  %v53 = vunpack.c.l.b16 %v33
  %v54 = vunpack.c.l.b16 %v34
  %v55 = vunpack.c.l.b16 %v35
  %v56 = vunpack.c.l.b16 %v36
  %v57 = vunpack.c.l.b16 %v37
  %v58 = vunpack.c.l.b16 %v38
  %v59 = vpack.c.b16 %v51, %v50
  %v60 = vpack.c.b16 %v53, %v52
  %v61 = vpack.c.b16 %v55, %v54
  %v62 = vpack.c.b16 %v57, %v56
  %v63 = vpack.c.b16 %v58, %v58
  %v66 = vunpack.c.l.b16 %v39
  %v67 = vunpack.c.h.b16 %v39
  %v68 = vunpack.c.l.b16 %v40
  %v69 = vunpack.c.h.b16 %v40
  %v70 = vpack.c.b16 %v66, %v66
  %v71 = vpack.c.b16 %v67, %v67
  %v72 = vpack.c.b16 %v68, %v68
  %v73 = vpack.c.b16 %v69, %v69
  %vm74 = vcmask 39936
  %v76 = vsel %vm74, %v59, 0
  %v79 = vsel %vm74, %v60, 0
  %v82 = vsel %vm74, %v61, 0
  %v85 = vsel %vm74, %v62, 0
  %v88 = vsel %vm74, %v63, 0
  %vm90 = vcmask 1041408
  %vm91 = vcmask 1042432
  %v92 = vsel %vm90, 4294967295, 65535
  %v93 = vsel %vm91, %v92, 0
  %v95 = vand.u32 %v70, %v93
  %v98 = vand.u32 %v71, %v93
  %v101 = vand.u32 %v72, %v93
  %v104 = vand.u32 %v73, %v93
  %106 = vmatprep.subr.bf16.mxu0 %v98
  %107 = vmatpush1.bf16.msra.mxu0 %v95
  %108 = vmatprep.subr.bf16.mxu0 0
  %109 = vmatpush1.bf16.msra.mxu0 0
  %110 = vmatprep.subr.bf16.mxu0 0
  %111 = vmatpush1.bf16.msra.mxu0 0
  %112 = vmatprep.subr.bf16.mxu0 0
  %113 = vmatpush1.bf16.msra.mxu0 0
  %114 = vmatprep.subr.bf16.mxu0 0
  %115 = vmatpush1.bf16.msra.mxu0 0
  %116 = vmatprep.subr.bf16.mxu0 0
  %117 = vmatpush1.bf16.msra.mxu0 0
  %118 = vmatprep.subr.bf16.mxu0 0
  %119 = vmatpush1.bf16.msra.mxu0 0
  %120 = vmatprep.subr.bf16.mxu0 0
  %121 = vmatpush1.bf16.msra.mxu0 0
  %122 = vmatprep.subr.bf16.mxu0 0
  %123 = vmatpush1.bf16.msra.mxu0 0
  %124 = vmatprep.subr.bf16.mxu0 0
  %125 = vmatpush1.bf16.msra.mxu0 0
  %126 = vmatprep.subr.bf16.mxu0 0
  %127 = vmatpush1.bf16.msra.mxu0 0
  %128 = vmatprep.subr.bf16.mxu0 0
  %129 = vmatpush1.bf16.msra.mxu0 0
  %130 = vmatprep.subr.bf16.mxu0 0
  %131 = vmatpush1.bf16.msra.mxu0 0
  %132 = vmatprep.subr.bf16.mxu0 0
  %133 = vmatpush1.bf16.msra.mxu0 0
  %134 = vmatprep.subr.bf16.mxu0 0
  %135 = vmatpush1.bf16.msra.mxu0 0
  %136 = vmatprep.subr.bf16.mxu0 0
  %137 = vmatpush1.bf16.msra.mxu0 0
  %138 = vmatprep.mubr.bf16.mxu0 0
  %139 = vmatmul.mubr.bf16.gmra.mrb[0].mxu0 %v76
  %v140 = vpop.f32.mrb[0].mxu0
  %v141 = vadd.f32 0.0, %v140
  %v142 = vpop.f32.mrb[0].mxu0
  %v143 = vadd.f32 0.0, %v142
  %v144 = vpop.f32.mrb[0].mxu0
  %v145 = vadd.f32 0.0, %v144
  %v146 = vpop.f32.mrb[0].mxu0
  %v147 = vadd.f32 0.0, %v146
  %148 = vmatprep.mubr.bf16.mxu0 0
  %149 = vmatmul.mubr.bf16.gmra.mrb[0].mxu0 %v79
  %v150 = vpop.f32.mrb[0].mxu0
  %v151 = vadd.f32 0.0, %v150
  %v152 = vpop.f32.mrb[0].mxu0
  %v153 = vadd.f32 0.0, %v152
  %v154 = vpop.f32.mrb[0].mxu0
  %v155 = vadd.f32 0.0, %v154
  %v156 = vpop.f32.mrb[0].mxu0
  %v157 = vadd.f32 0.0, %v156
  %158 = vmatprep.mubr.bf16.mxu0 0
  %159 = vmatmul.mubr.bf16.gmra.mrb[0].mxu0 %v82
  %v160 = vpop.f32.mrb[0].mxu0
  %v161 = vadd.f32 0.0, %v160
  %v162 = vpop.f32.mrb[0].mxu0
  %v163 = vadd.f32 0.0, %v162
  %v164 = vpop.f32.mrb[0].mxu0
  %v165 = vadd.f32 0.0, %v164
  %v166 = vpop.f32.mrb[0].mxu0
  %v167 = vadd.f32 0.0, %v166
  %168 = vmatprep.mubr.bf16.mxu0 0
  %169 = vmatmul.mubr.bf16.gmra.mrb[0].mxu0 %v85
  %v170 = vpop.f32.mrb[0].mxu0
  %v171 = vadd.f32 0.0, %v170
  %v172 = vpop.f32.mrb[0].mxu0
  %v173 = vadd.f32 0.0, %v172
  %v174 = vpop.f32.mrb[0].mxu0
  %v175 = vadd.f32 0.0, %v174
  %v176 = vpop.f32.mrb[0].mxu0
  %v177 = vadd.f32 0.0, %v176
  %178 = vmatprep.mubr.bf16.mxu0 0
  %179 = vmatmul.mubr.bf16.gmra.mrb[0].mxu0 %v88
  %v180 = vpop.f32.mrb[0].mxu0
  %v181 = vadd.f32 0.0, %v180
  %v182 = vpop.f32.mrb[0].mxu0
  %v183 = vadd.f32 0.0, %v182
  %v184 = vpop.f32.mrb[0].mxu0
  %v185 = vpop.f32.mrb[0].mxu0
  %186 = vdwg.mxu0
  %187 = vmatprep.subr.bf16.mxu0 %v104
  %188 = vmatpush1.bf16.msra.mxu0 %v101
  %189 = vmatprep.subr.bf16.mxu0 0
  %190 = vmatpush1.bf16.msra.mxu0 0
  %191 = vmatprep.subr.bf16.mxu0 0
  %192 = vmatpush1.bf16.msra.mxu0 0
  %193 = vmatprep.subr.bf16.mxu0 0
  %194 = vmatpush1.bf16.msra.mxu0 0
  %195 = vmatprep.subr.bf16.mxu0 0
  %196 = vmatpush1.bf16.msra.mxu0 0
  %197 = vmatprep.subr.bf16.mxu0 0
  %198 = vmatpush1.bf16.msra.mxu0 0
  %199 = vmatprep.subr.bf16.mxu0 0
  %200 = vmatpush1.bf16.msra.mxu0 0
  %201 = vmatprep.subr.bf16.mxu0 0
  %202 = vmatpush1.bf16.msra.mxu0 0
  %203 = vmatprep.subr.bf16.mxu0 0
  %204 = vmatpush1.bf16.msra.mxu0 0
  %205 = vmatprep.subr.bf16.mxu0 0
  %206 = vmatpush1.bf16.msra.mxu0 0
  %207 = vmatprep.subr.bf16.mxu0 0
  %208 = vmatpush1.bf16.msra.mxu0 0
  %209 = vmatprep.subr.bf16.mxu0 0
  %210 = vmatpush1.bf16.msra.mxu0 0
  %211 = vmatprep.subr.bf16.mxu0 0
  %212 = vmatpush1.bf16.msra.mxu0 0
  %213 = vmatprep.subr.bf16.mxu0 0
  %214 = vmatpush1.bf16.msra.mxu0 0
  %215 = vmatprep.subr.bf16.mxu0 0
  %216 = vmatpush1.bf16.msra.mxu0 0
  %217 = vmatprep.subr.bf16.mxu0 0
  %218 = vmatpush1.bf16.msra.mxu0 0
  %219 = vmatprep.mubr.bf16.mxu0 0
  %220 = vmatmul.mubr.bf16.gmra.mrb[0].mxu0 %v76
  %v221 = vpop.f32.mrb[0].mxu0
  %v222 = vadd.f32 0.0, %v221
  %v223 = vpop.f32.mrb[0].mxu0
  %v224 = vadd.f32 0.0, %v223
  %v225 = vpop.f32.mrb[0].mxu0
  %v226 = vadd.f32 0.0, %v225
  %v227 = vpop.f32.mrb[0].mxu0
  %v228 = vadd.f32 0.0, %v227
  %229 = vmatprep.mubr.bf16.mxu0 0
  %230 = vmatmul.mubr.bf16.gmra.mrb[0].mxu0 %v79
  %v231 = vpop.f32.mrb[0].mxu0
  %v232 = vadd.f32 0.0, %v231
  %v233 = vpop.f32.mrb[0].mxu0
  %v234 = vadd.f32 0.0, %v233
  %v235 = vpop.f32.mrb[0].mxu0
  %v236 = vadd.f32 0.0, %v235
  %v237 = vpop.f32.mrb[0].mxu0
  %v238 = vadd.f32 0.0, %v237
  %239 = vmatprep.mubr.bf16.mxu0 0
  %240 = vmatmul.mubr.bf16.gmra.mrb[0].mxu0 %v82
  %v241 = vpop.f32.mrb[0].mxu0
  %v242 = vadd.f32 0.0, %v241
  %v243 = vpop.f32.mrb[0].mxu0
  %v244 = vadd.f32 0.0, %v243
  %v245 = vpop.f32.mrb[0].mxu0
  %v246 = vadd.f32 0.0, %v245
  %v247 = vpop.f32.mrb[0].mxu0
  %v248 = vadd.f32 0.0, %v247
  %249 = vmatprep.mubr.bf16.mxu0 0
  %250 = vmatmul.mubr.bf16.gmra.mrb[0].mxu0 %v85
  %v251 = vpop.f32.mrb[0].mxu0
  %v252 = vadd.f32 0.0, %v251
  %v253 = vpop.f32.mrb[0].mxu0
  %v254 = vadd.f32 0.0, %v253
  %v255 = vpop.f32.mrb[0].mxu0
  %v256 = vadd.f32 0.0, %v255
  %v257 = vpop.f32.mrb[0].mxu0
  %v258 = vadd.f32 0.0, %v257
  %259 = vmatprep.mubr.bf16.mxu0 0
  %260 = vmatmul.mubr.bf16.gmra.mrb[0].mxu0 %v88
  %v261 = vpop.f32.mrb[0].mxu0
  %v262 = vadd.f32 0.0, %v261
  %v263 = vpop.f32.mrb[0].mxu0
  %v264 = vadd.f32 0.0, %v263
  %v265 = vpop.f32.mrb[0].mxu0
  %v266 = vpop.f32.mrb[0].mxu0
  %267 = vdwg.mxu0
  %268 = vst [vmem:[#allocation2] sm:$0xff] %v141
  %269 = vst [vmem:[#allocation2 + $0x8] sm:$0xff] %v143
  %270 = vst [vmem:[#allocation2 + $0x10] sm:$0xff] %v222
  %271 = vst [vmem:[#allocation2 + $0x18] sm:$0xff] %v224
  %272 = vst [vmem:[#allocation2 + $0x20] sm:$0xff] %v145
  %273 = vst [vmem:[#allocation2 + $0x28] sm:$0xff] %v147
  %274 = vst [vmem:[#allocation2 + $0x30] sm:$0xff] %v226
  %275 = vst [vmem:[#allocation2 + $0x38] sm:$0xff] %v228
  %276 = vst [vmem:[#allocation2 + $0x40] sm:$0xff] %v151
  %277 = vst [vmem:[#allocation2 + $0x48] sm:$0xff] %v153
  %278 = vst [vmem:[#allocation2 + $0x50] sm:$0xff] %v232
  %279 = vst [vmem:[#allocation2 + $0x58] sm:$0xff] %v234
  %280 = vst [vmem:[#allocation2 + $0x60] sm:$0xff] %v155
  %281 = vst [vmem:[#allocation2 + $0x68] sm:$0xff] %v157
  %282 = vst [vmem:[#allocation2 + $0x70] sm:$0xff] %v236
  %283 = vst [vmem:[#allocation2 + $0x78] sm:$0xff] %v238
  %284 = vst [vmem:[#allocation2 + $0x80] sm:$0xff] %v161
  %285 = vst [vmem:[#allocation2 + $0x88] sm:$0xff] %v163
  %286 = vst [vmem:[#allocation2 + $0x90] sm:$0xff] %v242
  %287 = vst [vmem:[#allocation2 + $0x98] sm:$0xff] %v244
  %288 = vst [vmem:[#allocation2 + $0xa0] sm:$0xff] %v165
  %289 = vst [vmem:[#allocation2 + $0xa8] sm:$0xff] %v167
  %290 = vst [vmem:[#allocation2 + $0xb0] sm:$0xff] %v246
  %291 = vst [vmem:[#allocation2 + $0xb8] sm:$0xff] %v248
  %292 = vst [vmem:[#allocation2 + $0xc0] sm:$0xff] %v171
  %293 = vst [vmem:[#allocation2 + $0xc8] sm:$0xff] %v173
  %294 = vst [vmem:[#allocation2 + $0xd0] sm:$0xff] %v252
  %295 = vst [vmem:[#allocation2 + $0xd8] sm:$0xff] %v254
  %296 = vst [vmem:[#allocation2 + $0xe0] sm:$0xff] %v175
  %297 = vst [vmem:[#allocation2 + $0xe8] sm:$0xff] %v177
  %298 = vst [vmem:[#allocation2 + $0xf0] sm:$0xff] %v256
  %299 = vst [vmem:[#allocation2 + $0xf8] sm:$0xff] %v258
  %300 = vst [vmem:[#allocation2 + $0x100] sm:$0xff] %v181
  %301 = vst [vmem:[#allocation2 + $0x108] sm:$0xff] %v183
  %302 = vst [vmem:[#allocation2 + $0x110] sm:$0xff] %v262
  %303 = vst [vmem:[#allocation2 + $0x118] sm:$0xff] %v264
  %v304 = vld [vmem:[%s1] sm:$0xff]
  %v305 = vld [vmem:[%s1 + $0x8] sm:$0xff]
  %v306 = vld [vmem:[%s1 + $0x10] sm:$0xff]
  %v307 = vld [vmem:[%s1 + $0x18] sm:$0xff]
  %v308 = vld [vmem:[%s2] sm:$0xff]
  %v309 = vld [vmem:[%s3] sm:$0xff]
  %v310 = vld [vmem:[#allocation2] sm:$0xff]
  %v311 = vld [vmem:[#allocation2 + $0x8] sm:$0xff]
  %v312 = vld [vmem:[#allocation2 + $0x10] sm:$0xff]
  %v313 = vld [vmem:[#allocation2 + $0x18] sm:$0xff]
  %v314 = vadd.f32 %v310, %v304
  %v315 = vadd.f32 %v311, %v305
  %v316 = vadd.f32 %v312, %v306
  %v317 = vadd.f32 %v313, %v307
  %v318 = vpack.c.bf16 %v308, %v308
  %v319 = vld [vmem:[%s5] sm:$0xff]
  %v320 = vld [vmem:[%s5 + $0x8] sm:$0xff]
  %v321 = vld [vmem:[%s5 + $0x10] sm:$0xff]
  %v322 = vld [vmem:[%s5 + $0x18] sm:$0xff]
  %v323 = vld [vmem:[%s5 + $0x20] sm:$0xff]
  %v324 = vld [vmem:[%s5 + $0x28] sm:$0xff]
  %v325 = vld [vmem:[%s5 + $0x30] sm:$0xff]
  %v326 = vld [vmem:[%s5 + $0x38] sm:$0xff]
  %v327 = vld [vmem:[%s5 + $0x40] sm:$0xff]
  %v328 = vld [vmem:[%s5 + $0x48] sm:$0xff]
  %v329 = vld [vmem:[%s5 + $0x50] sm:$0xff]
  %v330 = vld [vmem:[%s5 + $0x58] sm:$0xff]
  %v331 = vld [vmem:[%s5 + $0x60] sm:$0xff]
  %v332 = vld [vmem:[%s5 + $0x68] sm:$0xff]
  %v333 = vld [vmem:[%s5 + $0x70] sm:$0xff]
  %v334 = vld [vmem:[%s5 + $0x78] sm:$0xff]
  %v335 = vld [vmem:[%s5 + $0x80] sm:$0xff]
  %v336 = vld [vmem:[%s5 + $0x88] sm:$0xff]
  %v337 = vld [vmem:[%s5 + $0x90] sm:$0xff]
  %v338 = vld [vmem:[%s5 + $0x98] sm:$0xff]
  %v339 = vld [vmem:[%s5 + $0xa0] sm:$0xff]
  %v340 = vld [vmem:[%s5 + $0xa8] sm:$0xff]
  %v341 = vld [vmem:[%s5 + $0xb0] sm:$0xff]
  %v342 = vld [vmem:[%s5 + $0xb8] sm:$0xff]
  %v343 = vld [vmem:[%s5 + $0xc0] sm:$0xff]
  %v344 = vld [vmem:[%s5 + $0xc8] sm:$0xff]
  %v345 = vld [vmem:[%s5 + $0xd0] sm:$0xff]
  %v346 = vld [vmem:[%s5 + $0xd8] sm:$0xff]
  %v347 = vld [vmem:[%s5 + $0xe0] sm:$0xff]
  %v348 = vld [vmem:[%s5 + $0xe8] sm:$0xff]
  %v349 = vld [vmem:[%s5 + $0xf0] sm:$0xff]
  %v350 = vld [vmem:[%s5 + $0xf8] sm:$0xff]
  %v383 = vunpack.c.l.b16 %v319
  %v384 = vunpack.c.h.b16 %v319
  %v385 = vunpack.c.l.b16 %v320
  %v386 = vunpack.c.h.b16 %v320
  %v387 = vunpack.c.l.b16 %v321
  %v388 = vunpack.c.h.b16 %v321
  %v389 = vunpack.c.l.b16 %v322
  %v390 = vunpack.c.h.b16 %v322
  %v391 = vunpack.c.l.b16 %v323
  %v392 = vunpack.c.h.b16 %v323
  %v393 = vunpack.c.l.b16 %v324
  %v394 = vunpack.c.h.b16 %v324
  %v395 = vunpack.c.l.b16 %v325
  %v396 = vunpack.c.h.b16 %v325
  %v397 = vunpack.c.l.b16 %v326
  %v398 = vunpack.c.h.b16 %v326
  %v399 = vunpack.c.l.b16 %v327
  %v400 = vunpack.c.h.b16 %v327
  %v401 = vunpack.c.l.b16 %v328
  %v402 = vunpack.c.h.b16 %v328
  %v403 = vunpack.c.l.b16 %v329
  %v404 = vunpack.c.h.b16 %v329
  %v405 = vunpack.c.l.b16 %v330
  %v406 = vunpack.c.h.b16 %v330
  %v407 = vunpack.c.l.b16 %v331
  %v408 = vunpack.c.h.b16 %v331
  %v409 = vunpack.c.l.b16 %v332
  %v410 = vunpack.c.h.b16 %v332
  %v411 = vunpack.c.l.b16 %v333
  %v412 = vunpack.c.h.b16 %v333
  %v413 = vunpack.c.l.b16 %v334
  %v414 = vunpack.c.h.b16 %v334
  %v415 = vunpack.c.l.b16 %v335
  %v416 = vunpack.c.h.b16 %v335
  %v417 = vunpack.c.l.b16 %v336
  %v418 = vunpack.c.h.b16 %v336
  %v419 = vunpack.c.l.b16 %v337
  %v420 = vunpack.c.h.b16 %v337
  %v421 = vunpack.c.l.b16 %v338
  %v422 = vunpack.c.h.b16 %v338
  %v423 = vunpack.c.l.b16 %v339
  %v424 = vunpack.c.h.b16 %v339
  %v425 = vunpack.c.l.b16 %v340
  %v426 = vunpack.c.h.b16 %v340
  %v427 = vunpack.c.l.b16 %v341
  %v428 = vunpack.c.h.b16 %v341
  %v429 = vunpack.c.l.b16 %v342
  %v430 = vunpack.c.h.b16 %v342
  %v431 = vunpack.c.l.b16 %v343
  %v432 = vunpack.c.h.b16 %v343
  %v433 = vunpack.c.l.b16 %v344
  %v434 = vunpack.c.h.b16 %v344
  %v435 = vunpack.c.l.b16 %v345
  %v436 = vunpack.c.h.b16 %v345
  %v437 = vunpack.c.l.b16 %v346
  %v438 = vunpack.c.h.b16 %v346
  %v439 = vunpack.c.l.b16 %v347
  %v440 = vunpack.c.h.b16 %v347
  %v441 = vunpack.c.l.b16 %v348
  %v442 = vunpack.c.h.b16 %v348
  %v443 = vunpack.c.l.b16 %v349
  %v444 = vunpack.c.h.b16 %v349
  %v445 = vunpack.c.l.b16 %v350
  %v446 = vunpack.c.h.b16 %v350
  %v447 = vpack.c.b16 %v387, %v383
  %v448 = vpack.c.b16 %v388, %v384
  %v449 = vpack.c.b16 %v389, %v385
  %v450 = vpack.c.b16 %v390, %v386
  %v451 = vpack.c.b16 %v395, %v391
  %v452 = vpack.c.b16 %v396, %v392
  %v453 = vpack.c.b16 %v397, %v393
  %v454 = vpack.c.b16 %v398, %v394
  %v455 = vpack.c.b16 %v403, %v399
  %v456 = vpack.c.b16 %v404, %v400
  %v457 = vpack.c.b16 %v405, %v401
  %v458 = vpack.c.b16 %v406, %v402
  %v459 = vpack.c.b16 %v411, %v407
  %v460 = vpack.c.b16 %v412, %v408
  %v461 = vpack.c.b16 %v413, %v409
  %v462 = vpack.c.b16 %v414, %v410
  %v463 = vpack.c.b16 %v419, %v415
  %v464 = vpack.c.b16 %v420, %v416
  %v465 = vpack.c.b16 %v421, %v417
  %v466 = vpack.c.b16 %v422, %v418
  %v467 = vpack.c.b16 %v427, %v423
  %v468 = vpack.c.b16 %v428, %v424
  %v469 = vpack.c.b16 %v429, %v425
  %v470 = vpack.c.b16 %v430, %v426
  %v471 = vpack.c.b16 %v435, %v431
  %v472 = vpack.c.b16 %v436, %v432
  %v473 = vpack.c.b16 %v437, %v433
  %v474 = vpack.c.b16 %v438, %v434
  %v475 = vpack.c.b16 %v443, %v439
  %v476 = vpack.c.b16 %v444, %v440
  %v477 = vpack.c.b16 %v445, %v441
  %v478 = vpack.c.b16 %v446, %v442
  %511 = vmatprep.subr.bf16.mxu0 %v448
  %512 = vmatpush1.bf16.msra.mxu0 %v447
  %513 = vmatprep.subr.bf16.mxu0 %v452
  %514 = vmatpush1.bf16.msra.mxu0 %v451
  %515 = vmatprep.subr.bf16.mxu0 %v456
  %516 = vmatpush1.bf16.msra.mxu0 %v455
  %517 = vmatprep.subr.bf16.mxu0 %v460
  %518 = vmatpush1.bf16.msra.mxu0 %v459
  %519 = vmatprep.subr.bf16.mxu0 %v464
  %520 = vmatpush1.bf16.msra.mxu0 %v463
  %521 = vmatprep.subr.bf16.mxu0 %v468
  %522 = vmatpush1.bf16.msra.mxu0 %v467
  %523 = vmatprep.subr.bf16.mxu0 %v472
  %524 = vmatpush1.bf16.msra.mxu0 %v471
  %525 = vmatprep.subr.bf16.mxu0 %v476
  %526 = vmatpush1.bf16.msra.mxu0 %v475
  %527 = vmatprep.subr.bf16.mxu0 0
  %528 = vmatpush1.bf16.msra.mxu0 0
  %529 = vmatprep.subr.bf16.mxu0 0
  %530 = vmatpush1.bf16.msra.mxu0 0
  %531 = vmatprep.subr.bf16.mxu0 0
  %532 = vmatpush1.bf16.msra.mxu0 0
  %533 = vmatprep.subr.bf16.mxu0 0
  %534 = vmatpush1.bf16.msra.mxu0 0
  %535 = vmatprep.subr.bf16.mxu0 0
  %536 = vmatpush1.bf16.msra.mxu0 0
  %537 = vmatprep.subr.bf16.mxu0 0
  %538 = vmatpush1.bf16.msra.mxu0 0
  %539 = vmatprep.subr.bf16.mxu0 0
  %540 = vmatpush1.bf16.msra.mxu0 0
  %541 = vmatprep.subr.bf16.mxu0 0
  %542 = vmatpush1.bf16.msra.mxu0 0
  %543 = vmatprep.mubr.bf16.mxu0 0
  %544 = vmatmul.mubr.bf16.gmra.mrb[0].mxu0 %v318
  %v545 = vpop.f32.mrb[0].mxu0
  %v546 = vadd.f32 0.0, %v545
  %v547 = vpop.f32.mrb[0].mxu0
  %v548 = vadd.f32 0.0, %v547
  %v549 = vpop.f32.mrb[0].mxu0
  %v550 = vpop.f32.mrb[0].mxu0
  %551 = vdwg.mxu0
  %552 = vmatprep.subr.bf16.mxu0 %v450
  %553 = vmatpush1.bf16.msra.mxu0 %v449
  %554 = vmatprep.subr.bf16.mxu0 %v454
  %555 = vmatpush1.bf16.msra.mxu0 %v453
  %556 = vmatprep.subr.bf16.mxu0 %v458
  %557 = vmatpush1.bf16.msra.mxu0 %v457
  %558 = vmatprep.subr.bf16.mxu0 %v462
  %559 = vmatpush1.bf16.msra.mxu0 %v461
  %560 = vmatprep.subr.bf16.mxu0 %v466
  %561 = vmatpush1.bf16.msra.mxu0 %v465
  %562 = vmatprep.subr.bf16.mxu0 %v470
  %563 = vmatpush1.bf16.msra.mxu0 %v469
  %564 = vmatprep.subr.bf16.mxu0 %v474
  %565 = vmatpush1.bf16.msra.mxu0 %v473
  %566 = vmatprep.subr.bf16.mxu0 %v478
  %567 = vmatpush1.bf16.msra.mxu0 %v477
  %568 = vmatprep.subr.bf16.mxu0 0
  %569 = vmatpush1.bf16.msra.mxu0 0
  %570 = vmatprep.subr.bf16.mxu0 0
  %571 = vmatpush1.bf16.msra.mxu0 0
  %572 = vmatprep.subr.bf16.mxu0 0
  %573 = vmatpush1.bf16.msra.mxu0 0
  %574 = vmatprep.subr.bf16.mxu0 0
  %575 = vmatpush1.bf16.msra.mxu0 0
  %576 = vmatprep.subr.bf16.mxu0 0
  %577 = vmatpush1.bf16.msra.mxu0 0
  %578 = vmatprep.subr.bf16.mxu0 0
  %579 = vmatpush1.bf16.msra.mxu0 0
  %580 = vmatprep.subr.bf16.mxu0 0
  %581 = vmatpush1.bf16.msra.mxu0 0
  %582 = vmatprep.subr.bf16.mxu0 0
  %583 = vmatpush1.bf16.msra.mxu0 0
  %584 = vmatprep.mubr.bf16.mxu0 0
  %585 = vmatmul.mubr.bf16.gmra.mrb[0].mxu0 %v318
  %v586 = vpop.f32.mrb[0].mxu0
  %v587 = vadd.f32 0.0, %v586
  %v588 = vpop.f32.mrb[0].mxu0
  %v589 = vadd.f32 0.0, %v588
  %v590 = vpop.f32.mrb[0].mxu0
  %v591 = vpop.f32.mrb[0].mxu0
  %592 = vdwg.mxu0
  %v593 = vadd.f32 %v314, %v546
  %v594 = vadd.f32 %v315, %v548
  %v595 = vadd.f32 %v316, %v587
  %v596 = vadd.f32 %v317, %v589
  %v597 = vmul.f32 %v593, 0.5
  %v598 = vtanh.pop %v597
  %v599 = vmul.f32 %v598, 0.5
  %v600 = vadd.f32 %v599, 0.5
  %v601 = vmul.f32 %v594, 0.5
  %v602 = vtanh.pop %v601
  %v603 = vmul.f32 %v602, 0.5
  %v604 = vadd.f32 %v603, 0.5
  %v605 = vtanh.pop %v595
  %v606 = vmul.f32 %v596, 0.5
  %v607 = vtanh.pop %v606
  %v608 = vmul.f32 %v607, 0.5
  %v609 = vadd.f32 %v608, 0.5
  %v610 = vmul.f32 %v604, %v309
  %v611 = vmul.f32 %v600, %v605
  %v612 = vadd.f32 %v610, %v611
  %v613 = vtanh.pop %v612
  %v614 = vmul.f32 %v609, %v613
  %615 = vst [vmem:[#allocation3] sm:$0xff] %v614
  %v616 = vld [vmem:[#allocation2 + $0x20] sm:$0xff]
  %v617 = vld [vmem:[#allocation2 + $0x28] sm:$0xff]
  %v618 = vld [vmem:[#allocation2 + $0x30] sm:$0xff]
  %v619 = vld [vmem:[#allocation2 + $0x38] sm:$0xff]
  %v620 = vadd.f32 %v616, %v304
  %v621 = vadd.f32 %v617, %v305
  %v622 = vadd.f32 %v618, %v306
  %v623 = vadd.f32 %v619, %v307
  %v624 = vpack.c.bf16 %v614, %v614
  %v625 = vld [vmem:[%s5] sm:$0xff]
  %v626 = vld [vmem:[%s5 + $0x8] sm:$0xff]
  %v627 = vld [vmem:[%s5 + $0x10] sm:$0xff]
  %v628 = vld [vmem:[%s5 + $0x18] sm:$0xff]
  %v629 = vld [vmem:[%s5 + $0x20] sm:$0xff]
  %v630 = vld [vmem:[%s5 + $0x28] sm:$0xff]
  %v631 = vld [vmem:[%s5 + $0x30] sm:$0xff]
  %v632 = vld [vmem:[%s5 + $0x38] sm:$0xff]
  %v633 = vld [vmem:[%s5 + $0x40] sm:$0xff]
  %v634 = vld [vmem:[%s5 + $0x48] sm:$0xff]
  %v635 = vld [vmem:[%s5 + $0x50] sm:$0xff]
  %v636 = vld [vmem:[%s5 + $0x58] sm:$0xff]
  %v637 = vld [vmem:[%s5 + $0x60] sm:$0xff]
  %v638 = vld [vmem:[%s5 + $0x68] sm:$0xff]
  %v639 = vld [vmem:[%s5 + $0x70] sm:$0xff]
  %v640 = vld [vmem:[%s5 + $0x78] sm:$0xff]
  %v641 = vld [vmem:[%s5 + $0x80] sm:$0xff]
  %v642 = vld [vmem:[%s5 + $0x88] sm:$0xff]
  %v643 = vld [vmem:[%s5 + $0x90] sm:$0xff]
  %v644 = vld [vmem:[%s5 + $0x98] sm:$0xff]
  %v645 = vld [vmem:[%s5 + $0xa0] sm:$0xff]
  %v646 = vld [vmem:[%s5 + $0xa8] sm:$0xff]
  %v647 = vld [vmem:[%s5 + $0xb0] sm:$0xff]
  %v648 = vld [vmem:[%s5 + $0xb8] sm:$0xff]
  %v649 = vld [vmem:[%s5 + $0xc0] sm:$0xff]
  %v650 = vld [vmem:[%s5 + $0xc8] sm:$0xff]
  %v651 = vld [vmem:[%s5 + $0xd0] sm:$0xff]
  %v652 = vld [vmem:[%s5 + $0xd8] sm:$0xff]
  %v653 = vld [vmem:[%s5 + $0xe0] sm:$0xff]
  %v654 = vld [vmem:[%s5 + $0xe8] sm:$0xff]
  %v655 = vld [vmem:[%s5 + $0xf0] sm:$0xff]
  %v656 = vld [vmem:[%s5 + $0xf8] sm:$0xff]
  %v689 = vunpack.c.l.b16 %v625
  %v690 = vunpack.c.h.b16 %v625
  %v691 = vunpack.c.l.b16 %v626
  %v692 = vunpack.c.h.b16 %v626
  %v693 = vunpack.c.l.b16 %v627
  %v694 = vunpack.c.h.b16 %v627
  %v695 = vunpack.c.l.b16 %v628
  %v696 = vunpack.c.h.b16 %v628
  %v697 = vunpack.c.l.b16 %v629
  %v698 = vunpack.c.h.b16 %v629
  %v699 = vunpack.c.l.b16 %v630
  %v700 = vunpack.c.h.b16 %v630
  %v701 = vunpack.c.l.b16 %v631
  %v702 = vunpack.c.h.b16 %v631
  %v703 = vunpack.c.l.b16 %v632
  %v704 = vunpack.c.h.b16 %v632
  %v705 = vunpack.c.l.b16 %v633
  %v706 = vunpack.c.h.b16 %v633
  %v707 = vunpack.c.l.b16 %v634
  %v708 = vunpack.c.h.b16 %v634
  %v709 = vunpack.c.l.b16 %v635
  %v710 = vunpack.c.h.b16 %v635
  %v711 = vunpack.c.l.b16 %v636
  %v712 = vunpack.c.h.b16 %v636
  %v713 = vunpack.c.l.b16 %v637
  %v714 = vunpack.c.h.b16 %v637
  %v715 = vunpack.c.l.b16 %v638
  %v716 = vunpack.c.h.b16 %v638
  %v717 = vunpack.c.l.b16 %v639
  %v718 = vunpack.c.h.b16 %v639
  %v719 = vunpack.c.l.b16 %v640
  %v720 = vunpack.c.h.b16 %v640
  %v721 = vunpack.c.l.b16 %v641
  %v722 = vunpack.c.h.b16 %v641
  %v723 = vunpack.c.l.b16 %v642
  %v724 = vunpack.c.h.b16 %v642
  %v725 = vunpack.c.l.b16 %v643
  %v726 = vunpack.c.h.b16 %v643
  %v727 = vunpack.c.l.b16 %v644
  %v728 = vunpack.c.h.b16 %v644
  %v729 = vunpack.c.l.b16 %v645
  %v730 = vunpack.c.h.b16 %v645
  %v731 = vunpack.c.l.b16 %v646
  %v732 = vunpack.c.h.b16 %v646
  %v733 = vunpack.c.l.b16 %v647
  %v734 = vunpack.c.h.b16 %v647
  %v735 = vunpack.c.l.b16 %v648
  %v736 = vunpack.c.h.b16 %v648
  %v737 = vunpack.c.l.b16 %v649
  %v738 = vunpack.c.h.b16 %v649
  %v739 = vunpack.c.l.b16 %v650
  %v740 = vunpack.c.h.b16 %v650
  %v741 = vunpack.c.l.b16 %v651
  %v742 = vunpack.c.h.b16 %v651
  %v743 = vunpack.c.l.b16 %v652
  %v744 = vunpack.c.h.b16 %v652
  %v745 = vunpack.c.l.b16 %v653
  %v746 = vunpack.c.h.b16 %v653
  %v747 = vunpack.c.l.b16 %v654
  %v748 = vunpack.c.h.b16 %v654
  %v749 = vunpack.c.l.b16 %v655
  %v750 = vunpack.c.h.b16 %v655
  %v751 = vunpack.c.l.b16 %v656
  %v752 = vunpack.c.h.b16 %v656
  %v753 = vpack.c.b16 %v693, %v689
  %v754 = vpack.c.b16 %v694, %v690
  %v755 = vpack.c.b16 %v695, %v691
  %v756 = vpack.c.b16 %v696, %v692
  %v757 = vpack.c.b16 %v701, %v697
  %v758 = vpack.c.b16 %v702, %v698
  %v759 = vpack.c.b16 %v703, %v699
  %v760 = vpack.c.b16 %v704, %v700
  %v761 = vpack.c.b16 %v709, %v705
  %v762 = vpack.c.b16 %v710, %v706
  %v763 = vpack.c.b16 %v711, %v707
  %v764 = vpack.c.b16 %v712, %v708
  %v765 = vpack.c.b16 %v717, %v713
  %v766 = vpack.c.b16 %v718, %v714
  %v767 = vpack.c.b16 %v719, %v715
  %v768 = vpack.c.b16 %v720, %v716
  %v769 = vpack.c.b16 %v725, %v721
  %v770 = vpack.c.b16 %v726, %v722
  %v771 = vpack.c.b16 %v727, %v723
  %v772 = vpack.c.b16 %v728, %v724
  %v773 = vpack.c.b16 %v733, %v729
  %v774 = vpack.c.b16 %v734, %v730
  %v775 = vpack.c.b16 %v735, %v731
  %v776 = vpack.c.b16 %v736, %v732
  %v777 = vpack.c.b16 %v741, %v737
  %v778 = vpack.c.b16 %v742, %v738
  %v779 = vpack.c.b16 %v743, %v739
  %v780 = vpack.c.b16 %v744, %v740
  %v781 = vpack.c.b16 %v749, %v745
  %v782 = vpack.c.b16 %v750, %v746
  %v783 = vpack.c.b16 %v751, %v747
  %v784 = vpack.c.b16 %v752, %v748
  %817 = vmatprep.subr.bf16.mxu0 %v754
  %818 = vmatpush1.bf16.msra.mxu0 %v753
  %819 = vmatprep.subr.bf16.mxu0 %v758
  %820 = vmatpush1.bf16.msra.mxu0 %v757
  %821 = vmatprep.subr.bf16.mxu0 %v762
  %822 = vmatpush1.bf16.msra.mxu0 %v761
  %823 = vmatprep.subr.bf16.mxu0 %v766
  %824 = vmatpush1.bf16.msra.mxu0 %v765
  %825 = vmatprep.subr.bf16.mxu0 %v770
  %826 = vmatpush1.bf16.msra.mxu0 %v769
  %827 = vmatprep.subr.bf16.mxu0 %v774
  %828 = vmatpush1.bf16.msra.mxu0 %v773
  %829 = vmatprep.subr.bf16.mxu0 %v778
  %830 = vmatpush1.bf16.msra.mxu0 %v777
  %831 = vmatprep.subr.bf16.mxu0 %v782
  %832 = vmatpush1.bf16.msra.mxu0 %v781
  %833 = vmatprep.subr.bf16.mxu0 0
  %834 = vmatpush1.bf16.msra.mxu0 0
  %835 = vmatprep.subr.bf16.mxu0 0
  %836 = vmatpush1.bf16.msra.mxu0 0
  %837 = vmatprep.subr.bf16.mxu0 0
  %838 = vmatpush1.bf16.msra.mxu0 0
  %839 = vmatprep.subr.bf16.mxu0 0
  %840 = vmatpush1.bf16.msra.mxu0 0
  %841 = vmatprep.subr.bf16.mxu0 0
  %842 = vmatpush1.bf16.msra.mxu0 0
  %843 = vmatprep.subr.bf16.mxu0 0
  %844 = vmatpush1.bf16.msra.mxu0 0
  %845 = vmatprep.subr.bf16.mxu0 0
  %846 = vmatpush1.bf16.msra.mxu0 0
  %847 = vmatprep.subr.bf16.mxu0 0
  %848 = vmatpush1.bf16.msra.mxu0 0
  %849 = vmatprep.mubr.bf16.mxu0 0
  %850 = vmatmul.mubr.bf16.gmra.mrb[0].mxu0 %v624
  %v851 = vpop.f32.mrb[0].mxu0
  %v852 = vadd.f32 0.0, %v851
  %v853 = vpop.f32.mrb[0].mxu0
  %v854 = vadd.f32 0.0, %v853
  %v855 = vpop.f32.mrb[0].mxu0
  %v856 = vpop.f32.mrb[0].mxu0
  %857 = vdwg.mxu0
  %858 = vmatprep.subr.bf16.mxu0 %v756
  %859 = vmatpush1.bf16.msra.mxu0 %v755
  %860 = vmatprep.subr.bf16.mxu0 %v760
  %861 = vmatpush1.bf16.msra.mxu0 %v759
  %862 = vmatprep.subr.bf16.mxu0 %v764
  %863 = vmatpush1.bf16.msra.mxu0 %v763
  %864 = vmatprep.subr.bf16.mxu0 %v768
  %865 = vmatpush1.bf16.msra.mxu0 %v767
  %866 = vmatprep.subr.bf16.mxu0 %v772
  %867 = vmatpush1.bf16.msra.mxu0 %v771
  %868 = vmatprep.subr.bf16.mxu0 %v776
  %869 = vmatpush1.bf16.msra.mxu0 %v775
  %870 = vmatprep.subr.bf16.mxu0 %v780
  %871 = vmatpush1.bf16.msra.mxu0 %v779
  %872 = vmatprep.subr.bf16.mxu0 %v784
  %873 = vmatpush1.bf16.msra.mxu0 %v783
  %874 = vmatprep.subr.bf16.mxu0 0
  %875 = vmatpush1.bf16.msra.mxu0 0
  %876 = vmatprep.subr.bf16.mxu0 0
  %877 = vmatpush1.bf16.msra.mxu0 0
  %878 = vmatprep.subr.bf16.mxu0 0
  %879 = vmatpush1.bf16.msra.mxu0 0
  %880 = vmatprep.subr.bf16.mxu0 0
  %881 = vmatpush1.bf16.msra.mxu0 0
  %882 = vmatprep.subr.bf16.mxu0 0
  %883 = vmatpush1.bf16.msra.mxu0 0
  %884 = vmatprep.subr.bf16.mxu0 0
  %885 = vmatpush1.bf16.msra.mxu0 0
  %886 = vmatprep.subr.bf16.mxu0 0
  %887 = vmatpush1.bf16.msra.mxu0 0
  %888 = vmatprep.subr.bf16.mxu0 0
  %889 = vmatpush1.bf16.msra.mxu0 0
  %890 = vmatprep.mubr.bf16.mxu0 0
  %891 = vmatmul.mubr.bf16.gmra.mrb[0].mxu0 %v624
  %v892 = vpop.f32.mrb[0].mxu0
  %v893 = vadd.f32 0.0, %v892
  %v894 = vpop.f32.mrb[0].mxu0
  %v895 = vadd.f32 0.0, %v894
  %v896 = vpop.f32.mrb[0].mxu0
  %v897 = vpop.f32.mrb[0].mxu0
  %898 = vdwg.mxu0
  %v899 = vadd.f32 %v620, %v852
  %v900 = vadd.f32 %v621, %v854
  %v901 = vadd.f32 %v622, %v893
  %v902 = vadd.f32 %v623, %v895
  %v903 = vmul.f32 %v899, 0.5
  %v904 = vtanh.pop %v903
  %v905 = vmul.f32 %v904, 0.5
  %v906 = vadd.f32 %v905, 0.5
  %v907 = vmul.f32 %v900, 0.5
  %v908 = vtanh.pop %v907
  %v909 = vmul.f32 %v908, 0.5
  %v910 = vadd.f32 %v909, 0.5
  %v911 = vtanh.pop %v901
  %v912 = vmul.f32 %v902, 0.5
  %v913 = vtanh.pop %v912
  %v914 = vmul.f32 %v913, 0.5
  %v915 = vadd.f32 %v914, 0.5
  %v916 = vmul.f32 %v910, %v612
  %v917 = vmul.f32 %v906, %v911
  %v918 = vadd.f32 %v916, %v917
  %v919 = vtanh.pop %v918
  %v920 = vmul.f32 %v915, %v919
  %921 = vst [vmem:[#allocation3 + $0x8] sm:$0xff] %v920
  %v922 = vld [vmem:[#allocation2 + $0x40] sm:$0xff]
  %v923 = vld [vmem:[#allocation2 + $0x48] sm:$0xff]
  %v924 = vld [vmem:[#allocation2 + $0x50] sm:$0xff]
  %v925 = vld [vmem:[#allocation2 + $0x58] sm:$0xff]
  %v926 = vadd.f32 %v922, %v304
  %v927 = vadd.f32 %v923, %v305
  %v928 = vadd.f32 %v924, %v306
  %v929 = vadd.f32 %v925, %v307
  %v930 = vpack.c.bf16 %v920, %v920
  %v931 = vld [vmem:[%s5] sm:$0xff]
  %v932 = vld [vmem:[%s5 + $0x8] sm:$0xff]
  %v933 = vld [vmem:[%s5 + $0x10] sm:$0xff]
  %v934 = vld [vmem:[%s5 + $0x18] sm:$0xff]
  %v935 = vld [vmem:[%s5 + $0x20] sm:$0xff]
  %v936 = vld [vmem:[%s5 + $0x28] sm:$0xff]
  %v937 = vld [vmem:[%s5 + $0x30] sm:$0xff]
  %v938 = vld [vmem:[%s5 + $0x38] sm:$0xff]
  %v939 = vld [vmem:[%s5 + $0x40] sm:$0xff]
  %v940 = vld [vmem:[%s5 + $0x48] sm:$0xff]
  %v941 = vld [vmem:[%s5 + $0x50] sm:$0xff]
  %v942 = vld [vmem:[%s5 + $0x58] sm:$0xff]
  %v943 = vld [vmem:[%s5 + $0x60] sm:$0xff]
  %v944 = vld [vmem:[%s5 + $0x68] sm:$0xff]
  %v945 = vld [vmem:[%s5 + $0x70] sm:$0xff]
  %v946 = vld [vmem:[%s5 + $0x78] sm:$0xff]
  %v947 = vld [vmem:[%s5 + $0x80] sm:$0xff]
  %v948 = vld [vmem:[%s5 + $0x88] sm:$0xff]
  %v949 = vld [vmem:[%s5 + $0x90] sm:$0xff]
  %v950 = vld [vmem:[%s5 + $0x98] sm:$0xff]
  %v951 = vld [vmem:[%s5 + $0xa0] sm:$0xff]
  %v952 = vld [vmem:[%s5 + $0xa8] sm:$0xff]
  %v953 = vld [vmem:[%s5 + $0xb0] sm:$0xff]
  %v954 = vld [vmem:[%s5 + $0xb8] sm:$0xff]
  %v955 = vld [vmem:[%s5 + $0xc0] sm:$0xff]
  %v956 = vld [vmem:[%s5 + $0xc8] sm:$0xff]
  %v957 = vld [vmem:[%s5 + $0xd0] sm:$0xff]
  %v958 = vld [vmem:[%s5 + $0xd8] sm:$0xff]
  %v959 = vld [vmem:[%s5 + $0xe0] sm:$0xff]
  %v960 = vld [vmem:[%s5 + $0xe8] sm:$0xff]
  %v961 = vld [vmem:[%s5 + $0xf0] sm:$0xff]
  %v962 = vld [vmem:[%s5 + $0xf8] sm:$0xff]
  %v995 = vunpack.c.l.b16 %v931
  %v996 = vunpack.c.h.b16 %v931
  %v997 = vunpack.c.l.b16 %v932
  %v998 = vunpack.c.h.b16 %v932
  %v999 = vunpack.c.l.b16 %v933
  %v1000 = vunpack.c.h.b16 %v933
  %v1001 = vunpack.c.l.b16 %v934
  %v1002 = vunpack.c.h.b16 %v934
  %v1003 = vunpack.c.l.b16 %v935
  %v1004 = vunpack.c.h.b16 %v935
  %v1005 = vunpack.c.l.b16 %v936
  %v1006 = vunpack.c.h.b16 %v936
  %v1007 = vunpack.c.l.b16 %v937
  %v1008 = vunpack.c.h.b16 %v937
  %v1009 = vunpack.c.l.b16 %v938
  %v1010 = vunpack.c.h.b16 %v938
  %v1011 = vunpack.c.l.b16 %v939
  %v1012 = vunpack.c.h.b16 %v939
  %v1013 = vunpack.c.l.b16 %v940
  %v1014 = vunpack.c.h.b16 %v940
  %v1015 = vunpack.c.l.b16 %v941
  %v1016 = vunpack.c.h.b16 %v941
  %v1017 = vunpack.c.l.b16 %v942
  %v1018 = vunpack.c.h.b16 %v942
  %v1019 = vunpack.c.l.b16 %v943
  %v1020 = vunpack.c.h.b16 %v943
  %v1021 = vunpack.c.l.b16 %v944
  %v1022 = vunpack.c.h.b16 %v944
  %v1023 = vunpack.c.l.b16 %v945
  %v1024 = vunpack.c.h.b16 %v945
  %v1025 = vunpack.c.l.b16 %v946
  %v1026 = vunpack.c.h.b16 %v946
  %v1027 = vunpack.c.l.b16 %v947
  %v1028 = vunpack.c.h.b16 %v947
  %v1029 = vunpack.c.l.b16 %v948
  %v1030 = vunpack.c.h.b16 %v948
  %v1031 = vunpack.c.l.b16 %v949
  %v1032 = vunpack.c.h.b16 %v949
  %v1033 = vunpack.c.l.b16 %v950
  %v1034 = vunpack.c.h.b16 %v950
  %v1035 = vunpack.c.l.b16 %v951
  %v1036 = vunpack.c.h.b16 %v951
  %v1037 = vunpack.c.l.b16 %v952
  %v1038 = vunpack.c.h.b16 %v952
  %v1039 = vunpack.c.l.b16 %v953
  %v1040 = vunpack.c.h.b16 %v953
  %v1041 = vunpack.c.l.b16 %v954
  %v1042 = vunpack.c.h.b16 %v954
  %v1043 = vunpack.c.l.b16 %v955
  %v1044 = vunpack.c.h.b16 %v955
  %v1045 = vunpack.c.l.b16 %v956
  %v1046 = vunpack.c.h.b16 %v956
  %v1047 = vunpack.c.l.b16 %v957
  %v1048 = vunpack.c.h.b16 %v957
  %v1049 = vunpack.c.l.b16 %v958
  %v1050 = vunpack.c.h.b16 %v958
  %v1051 = vunpack.c.l.b16 %v959
  %v1052 = vunpack.c.h.b16 %v959
  %v1053 = vunpack.c.l.b16 %v960
  %v1054 = vunpack.c.h.b16 %v960
  %v1055 = vunpack.c.l.b16 %v961
  %v1056 = vunpack.c.h.b16 %v961
  %v1057 = vunpack.c.l.b16 %v962
  %v1058 = vunpack.c.h.b16 %v962
  %v1059 = vpack.c.b16 %v999, %v995
  %v1060 = vpack.c.b16 %v1000, %v996
  %v1061 = vpack.c.b16 %v1001, %v997
  %v1062 = vpack.c.b16 %v1002, %v998
  %v1063 = vpack.c.b16 %v1007, %v1003
  %v1064 = vpack.c.b16 %v1008, %v1004
  %v1065 = vpack.c.b16 %v1009, %v1005
  %v1066 = vpack.c.b16 %v1010, %v1006
  %v1067 = vpack.c.b16 %v1015, %v1011
  %v1068 = vpack.c.b16 %v1016, %v1012
  %v1069 = vpack.c.b16 %v1017, %v1013
  %v1070 = vpack.c.b16 %v1018, %v1014
  %v1071 = vpack.c.b16 %v1023, %v1019
  %v1072 = vpack.c.b16 %v1024, %v1020
  %v1073 = vpack.c.b16 %v1025, %v1021
  %v1074 = vpack.c.b16 %v1026, %v1022
  %v1075 = vpack.c.b16 %v1031, %v1027
  %v1076 = vpack.c.b16 %v1032, %v1028
  %v1077 = vpack.c.b16 %v1033, %v1029
  %v1078 = vpack.c.b16 %v1034, %v1030
  %v1079 = vpack.c.b16 %v1039, %v1035
  %v1080 = vpack.c.b16 %v1040, %v1036
  %v1081 = vpack.c.b16 %v1041, %v1037
  %v1082 = vpack.c.b16 %v1042, %v1038
  %v1083 = vpack.c.b16 %v1047, %v1043
  %v1084 = vpack.c.b16 %v1048, %v1044
  %v1085 = vpack.c.b16 %v1049, %v1045
  %v1086 = vpack.c.b16 %v1050, %v1046
  %v1087 = vpack.c.b16 %v1055, %v1051
  %v1088 = vpack.c.b16 %v1056, %v1052
  %v1089 = vpack.c.b16 %v1057, %v1053
  %v1090 = vpack.c.b16 %v1058, %v1054
  %1123 = vmatprep.subr.bf16.mxu0 %v1060
  %1124 = vmatpush1.bf16.msra.mxu0 %v1059
  %1125 = vmatprep.subr.bf16.mxu0 %v1064
  %1126 = vmatpush1.bf16.msra.mxu0 %v1063
  %1127 = vmatprep.subr.bf16.mxu0 %v1068
  %1128 = vmatpush1.bf16.msra.mxu0 %v1067
  %1129 = vmatprep.subr.bf16.mxu0 %v1072
  %1130 = vmatpush1.bf16.msra.mxu0 %v1071
  %1131 = vmatprep.subr.bf16.mxu0 %v1076
  %1132 = vmatpush1.bf16.msra.mxu0 %v1075
  %1133 = vmatprep.subr.bf16.mxu0 %v1080
  %1134 = vmatpush1.bf16.msra.mxu0 %v1079
  %1135 = vmatprep.subr.bf16.mxu0 %v1084
  %1136 = vmatpush1.bf16.msra.mxu0 %v1083
  %1137 = vmatprep.subr.bf16.mxu0 %v1088
  %1138 = vmatpush1.bf16.msra.mxu0 %v1087
  %1139 = vmatprep.subr.bf16.mxu0 0
  %1140 = vmatpush1.bf16.msra.mxu0 0
  %1141 = vmatprep.subr.bf16.mxu0 0
  %1142 = vmatpush1.bf16.msra.mxu0 0
  %1143 = vmatprep.subr.bf16.mxu0 0
  %1144 = vmatpush1.bf16.msra.mxu0 0
  %1145 = vmatprep.subr.bf16.mxu0 0
  %1146 = vmatpush1.bf16.msra.mxu0 0
  %1147 = vmatprep.subr.bf16.mxu0 0
  %1148 = vmatpush1.bf16.msra.mxu0 0
  %1149 = vmatprep.subr.bf16.mxu0 0
  %1150 = vmatpush1.bf16.msra.mxu0 0
  %1151 = vmatprep.subr.bf16.mxu0 0
  %1152 = vmatpush1.bf16.msra.mxu0 0
  %1153 = vmatprep.subr.bf16.mxu0 0
  %1154 = vmatpush1.bf16.msra.mxu0 0
  %1155 = vmatprep.mubr.bf16.mxu0 0
  %1156 = vmatmul.mubr.bf16.gmra.mrb[0].mxu0 %v930
  %v1157 = vpop.f32.mrb[0].mxu0
  %v1158 = vadd.f32 0.0, %v1157
  %v1159 = vpop.f32.mrb[0].mxu0
  %v1160 = vadd.f32 0.0, %v1159
  %v1161 = vpop.f32.mrb[0].mxu0
  %v1162 = vpop.f32.mrb[0].mxu0
  %1163 = vdwg.mxu0
  %1164 = vmatprep.subr.bf16.mxu0 %v1062
  %1165 = vmatpush1.bf16.msra.mxu0 %v1061
  %1166 = vmatprep.subr.bf16.mxu0 %v1066
  %1167 = vmatpush1.bf16.msra.mxu0 %v1065
  %1168 = vmatprep.subr.bf16.mxu0 %v1070
  %1169 = vmatpush1.bf16.msra.mxu0 %v1069
  %1170 = vmatprep.subr.bf16.mxu0 %v1074
  %1171 = vmatpush1.bf16.msra.mxu0 %v1073
  %1172 = vmatprep.subr.bf16.mxu0 %v1078
  %1173 = vmatpush1.bf16.msra.mxu0 %v1077
  %1174 = vmatprep.subr.bf16.mxu0 %v1082
  %1175 = vmatpush1.bf16.msra.mxu0 %v1081
  %1176 = vmatprep.subr.bf16.mxu0 %v1086
  %1177 = vmatpush1.bf16.msra.mxu0 %v1085
  %1178 = vmatprep.subr.bf16.mxu0 %v1090
  %1179 = vmatpush1.bf16.msra.mxu0 %v1089
  %1180 = vmatprep.subr.bf16.mxu0 0
  %1181 = vmatpush1.bf16.msra.mxu0 0
  %1182 = vmatprep.subr.bf16.mxu0 0
  %1183 = vmatpush1.bf16.msra.mxu0 0
  %1184 = vmatprep.subr.bf16.mxu0 0
  %1185 = vmatpush1.bf16.msra.mxu0 0
  %1186 = vmatprep.subr.bf16.mxu0 0
  %1187 = vmatpush1.bf16.msra.mxu0 0
  %1188 = vmatprep.subr.bf16.mxu0 0
  %1189 = vmatpush1.bf16.msra.mxu0 0
  %1190 = vmatprep.subr.bf16.mxu0 0
  %1191 = vmatpush1.bf16.msra.mxu0 0
  %1192 = vmatprep.subr.bf16.mxu0 0
  %1193 = vmatpush1.bf16.msra.mxu0 0
  %1194 = vmatprep.subr.bf16.mxu0 0
  %1195 = vmatpush1.bf16.msra.mxu0 0
  %1196 = vmatprep.mubr.bf16.mxu0 0
  %1197 = vmatmul.mubr.bf16.gmra.mrb[0].mxu0 %v930
  %v1198 = vpop.f32.mrb[0].mxu0
  %v1199 = vadd.f32 0.0, %v1198
  %v1200 = vpop.f32.mrb[0].mxu0
  %v1201 = vadd.f32 0.0, %v1200
  %v1202 = vpop.f32.mrb[0].mxu0
  %v1203 = vpop.f32.mrb[0].mxu0
  %1204 = vdwg.mxu0
  %v1205 = vadd.f32 %v926, %v1158
  %v1206 = vadd.f32 %v927, %v1160
  %v1207 = vadd.f32 %v928, %v1199
  %v1208 = vadd.f32 %v929, %v1201
  %v1209 = vmul.f32 %v1205, 0.5
  %v1210 = vtanh.pop %v1209
  %v1211 = vmul.f32 %v1210, 0.5
  %v1212 = vadd.f32 %v1211, 0.5
  %v1213 = vmul.f32 %v1206, 0.5
  %v1214 = vtanh.pop %v1213
  %v1215 = vmul.f32 %v1214, 0.5
  %v1216 = vadd.f32 %v1215, 0.5
  %v1217 = vtanh.pop %v1207
  %v1218 = vmul.f32 %v1208, 0.5
  %v1219 = vtanh.pop %v1218
  %v1220 = vmul.f32 %v1219, 0.5
  %v1221 = vadd.f32 %v1220, 0.5
  %v1222 = vmul.f32 %v1216, %v918
  %v1223 = vmul.f32 %v1212, %v1217
  %v1224 = vadd.f32 %v1222, %v1223
  %v1225 = vtanh.pop %v1224
  %v1226 = vmul.f32 %v1221, %v1225
  %1227 = vst [vmem:[#allocation3 + $0x10] sm:$0xff] %v1226
  %v1228 = vld [vmem:[#allocation2 + $0x60] sm:$0xff]
  %v1229 = vld [vmem:[#allocation2 + $0x68] sm:$0xff]
  %v1230 = vld [vmem:[#allocation2 + $0x70] sm:$0xff]
  %v1231 = vld [vmem:[#allocation2 + $0x78] sm:$0xff]
  %v1232 = vadd.f32 %v1228, %v304
  %v1233 = vadd.f32 %v1229, %v305
  %v1234 = vadd.f32 %v1230, %v306
  %v1235 = vadd.f32 %v1231, %v307
  %v1236 = vpack.c.bf16 %v1226, %v1226
  %v1237 = vld [vmem:[%s5] sm:$0xff]
  %v1238 = vld [vmem:[%s5 + $0x8] sm:$0xff]
  %v1239 = vld [vmem:[%s5 + $0x10] sm:$0xff]
  %v1240 = vld [vmem:[%s5 + $0x18] sm:$0xff]
  %v1241 = vld [vmem:[%s5 + $0x20] sm:$0xff]
  %v1242 = vld [vmem:[%s5 + $0x28] sm:$0xff]
  %v1243 = vld [vmem:[%s5 + $0x30] sm:$0xff]
  %v1244 = vld [vmem:[%s5 + $0x38] sm:$0xff]
  %v1245 = vld [vmem:[%s5 + $0x40] sm:$0xff]
  %v1246 = vld [vmem:[%s5 + $0x48] sm:$0xff]
  %v1247 = vld [vmem:[%s5 + $0x50] sm:$0xff]
  %v1248 = vld [vmem:[%s5 + $0x58] sm:$0xff]
  %v1249 = vld [vmem:[%s5 + $0x60] sm:$0xff]
  %v1250 = vld [vmem:[%s5 + $0x68] sm:$0xff]
  %v1251 = vld [vmem:[%s5 + $0x70] sm:$0xff]
  %v1252 = vld [vmem:[%s5 + $0x78] sm:$0xff]
  %v1253 = vld [vmem:[%s5 + $0x80] sm:$0xff]
  %v1254 = vld [vmem:[%s5 + $0x88] sm:$0xff]
  %v1255 = vld [vmem:[%s5 + $0x90] sm:$0xff]
  %v1256 = vld [vmem:[%s5 + $0x98] sm:$0xff]
  %v1257 = vld [vmem:[%s5 + $0xa0] sm:$0xff]
  %v1258 = vld [vmem:[%s5 + $0xa8] sm:$0xff]
  %v1259 = vld [vmem:[%s5 + $0xb0] sm:$0xff]
  %v1260 = vld [vmem:[%s5 + $0xb8] sm:$0xff]
  %v1261 = vld [vmem:[%s5 + $0xc0] sm:$0xff]
  %v1262 = vld [vmem:[%s5 + $0xc8] sm:$0xff]
  %v1263 = vld [vmem:[%s5 + $0xd0] sm:$0xff]
  %v1264 = vld [vmem:[%s5 + $0xd8] sm:$0xff]
  %v1265 = vld [vmem:[%s5 + $0xe0] sm:$0xff]
  %v1266 = vld [vmem:[%s5 + $0xe8] sm:$0xff]
  %v1267 = vld [vmem:[%s5 + $0xf0] sm:$0xff]
  %v1268 = vld [vmem:[%s5 + $0xf8] sm:$0xff]
  %v1301 = vunpack.c.l.b16 %v1237
  %v1302 = vunpack.c.h.b16 %v1237
  %v1303 = vunpack.c.l.b16 %v1238
  %v1304 = vunpack.c.h.b16 %v1238
  %v1305 = vunpack.c.l.b16 %v1239
  %v1306 = vunpack.c.h.b16 %v1239
  %v1307 = vunpack.c.l.b16 %v1240
  %v1308 = vunpack.c.h.b16 %v1240
  %v1309 = vunpack.c.l.b16 %v1241
  %v1310 = vunpack.c.h.b16 %v1241
  %v1311 = vunpack.c.l.b16 %v1242
  %v1312 = vunpack.c.h.b16 %v1242
  %v1313 = vunpack.c.l.b16 %v1243
  %v1314 = vunpack.c.h.b16 %v1243
  %v1315 = vunpack.c.l.b16 %v1244
  %v1316 = vunpack.c.h.b16 %v1244
  %v1317 = vunpack.c.l.b16 %v1245
  %v1318 = vunpack.c.h.b16 %v1245
  %v1319 = vunpack.c.l.b16 %v1246
  %v1320 = vunpack.c.h.b16 %v1246
  %v1321 = vunpack.c.l.b16 %v1247
  %v1322 = vunpack.c.h.b16 %v1247
  %v1323 = vunpack.c.l.b16 %v1248
  %v1324 = vunpack.c.h.b16 %v1248
  %v1325 = vunpack.c.l.b16 %v1249
  %v1326 = vunpack.c.h.b16 %v1249
  %v1327 = vunpack.c.l.b16 %v1250
  %v1328 = vunpack.c.h.b16 %v1250
  %v1329 = vunpack.c.l.b16 %v1251
  %v1330 = vunpack.c.h.b16 %v1251
  %v1331 = vunpack.c.l.b16 %v1252
  %v1332 = vunpack.c.h.b16 %v1252
  %v1333 = vunpack.c.l.b16 %v1253
  %v1334 = vunpack.c.h.b16 %v1253
  %v1335 = vunpack.c.l.b16 %v1254
  %v1336 = vunpack.c.h.b16 %v1254
  %v1337 = vunpack.c.l.b16 %v1255
  %v1338 = vunpack.c.h.b16 %v1255
  %v1339 = vunpack.c.l.b16 %v1256
  %v1340 = vunpack.c.h.b16 %v1256
  %v1341 = vunpack.c.l.b16 %v1257
  %v1342 = vunpack.c.h.b16 %v1257
  %v1343 = vunpack.c.l.b16 %v1258
  %v1344 = vunpack.c.h.b16 %v1258
  %v1345 = vunpack.c.l.b16 %v1259
  %v1346 = vunpack.c.h.b16 %v1259
  %v1347 = vunpack.c.l.b16 %v1260
  %v1348 = vunpack.c.h.b16 %v1260
  %v1349 = vunpack.c.l.b16 %v1261
  %v1350 = vunpack.c.h.b16 %v1261
  %v1351 = vunpack.c.l.b16 %v1262
  %v1352 = vunpack.c.h.b16 %v1262
  %v1353 = vunpack.c.l.b16 %v1263
  %v1354 = vunpack.c.h.b16 %v1263
  %v1355 = vunpack.c.l.b16 %v1264
  %v1356 = vunpack.c.h.b16 %v1264
  %v1357 = vunpack.c.l.b16 %v1265
  %v1358 = vunpack.c.h.b16 %v1265
  %v1359 = vunpack.c.l.b16 %v1266
  %v1360 = vunpack.c.h.b16 %v1266
  %v1361 = vunpack.c.l.b16 %v1267
  %v1362 = vunpack.c.h.b16 %v1267
  %v1363 = vunpack.c.l.b16 %v1268
  %v1364 = vunpack.c.h.b16 %v1268
  %v1365 = vpack.c.b16 %v1305, %v1301
  %v1366 = vpack.c.b16 %v1306, %v1302
  %v1367 = vpack.c.b16 %v1307, %v1303
  %v1368 = vpack.c.b16 %v1308, %v1304
  %v1369 = vpack.c.b16 %v1313, %v1309
  %v1370 = vpack.c.b16 %v1314, %v1310
  %v1371 = vpack.c.b16 %v1315, %v1311
  %v1372 = vpack.c.b16 %v1316, %v1312
  %v1373 = vpack.c.b16 %v1321, %v1317
  %v1374 = vpack.c.b16 %v1322, %v1318
  %v1375 = vpack.c.b16 %v1323, %v1319
  %v1376 = vpack.c.b16 %v1324, %v1320
  %v1377 = vpack.c.b16 %v1329, %v1325
  %v1378 = vpack.c.b16 %v1330, %v1326
  %v1379 = vpack.c.b16 %v1331, %v1327
  %v1380 = vpack.c.b16 %v1332, %v1328
  %v1381 = vpack.c.b16 %v1337, %v1333
  %v1382 = vpack.c.b16 %v1338, %v1334
  %v1383 = vpack.c.b16 %v1339, %v1335
  %v1384 = vpack.c.b16 %v1340, %v1336
  %v1385 = vpack.c.b16 %v1345, %v1341
  %v1386 = vpack.c.b16 %v1346, %v1342
  %v1387 = vpack.c.b16 %v1347, %v1343
  %v1388 = vpack.c.b16 %v1348, %v1344
  %v1389 = vpack.c.b16 %v1353, %v1349
  %v1390 = vpack.c.b16 %v1354, %v1350
  %v1391 = vpack.c.b16 %v1355, %v1351
  %v1392 = vpack.c.b16 %v1356, %v1352
  %v1393 = vpack.c.b16 %v1361, %v1357
  %v1394 = vpack.c.b16 %v1362, %v1358
  %v1395 = vpack.c.b16 %v1363, %v1359
  %v1396 = vpack.c.b16 %v1364, %v1360
  %1429 = vmatprep.subr.bf16.mxu0 %v1366
  %1430 = vmatpush1.bf16.msra.mxu0 %v1365
  %1431 = vmatprep.subr.bf16.mxu0 %v1370
  %1432 = vmatpush1.bf16.msra.mxu0 %v1369
  %1433 = vmatprep.subr.bf16.mxu0 %v1374
  %1434 = vmatpush1.bf16.msra.mxu0 %v1373
  %1435 = vmatprep.subr.bf16.mxu0 %v1378
  %1436 = vmatpush1.bf16.msra.mxu0 %v1377
  %1437 = vmatprep.subr.bf16.mxu0 %v1382
  %1438 = vmatpush1.bf16.msra.mxu0 %v1381
  %1439 = vmatprep.subr.bf16.mxu0 %v1386
  %1440 = vmatpush1.bf16.msra.mxu0 %v1385
  %1441 = vmatprep.subr.bf16.mxu0 %v1390
  %1442 = vmatpush1.bf16.msra.mxu0 %v1389
  %1443 = vmatprep.subr.bf16.mxu0 %v1394
  %1444 = vmatpush1.bf16.msra.mxu0 %v1393
  %1445 = vmatprep.subr.bf16.mxu0 0
  %1446 = vmatpush1.bf16.msra.mxu0 0
  %1447 = vmatprep.subr.bf16.mxu0 0
  %1448 = vmatpush1.bf16.msra.mxu0 0
  %1449 = vmatprep.subr.bf16.mxu0 0
  %1450 = vmatpush1.bf16.msra.mxu0 0
  %1451 = vmatprep.subr.bf16.mxu0 0
  %1452 = vmatpush1.bf16.msra.mxu0 0
  %1453 = vmatprep.subr.bf16.mxu0 0
  %1454 = vmatpush1.bf16.msra.mxu0 0
  %1455 = vmatprep.subr.bf16.mxu0 0
  %1456 = vmatpush1.bf16.msra.mxu0 0
  %1457 = vmatprep.subr.bf16.mxu0 0
  %1458 = vmatpush1.bf16.msra.mxu0 0
  %1459 = vmatprep.subr.bf16.mxu0 0
  %1460 = vmatpush1.bf16.msra.mxu0 0
  %1461 = vmatprep.mubr.bf16.mxu0 0
  %1462 = vmatmul.mubr.bf16.gmra.mrb[0].mxu0 %v1236
  %v1463 = vpop.f32.mrb[0].mxu0
  %v1464 = vadd.f32 0.0, %v1463
  %v1465 = vpop.f32.mrb[0].mxu0
  %v1466 = vadd.f32 0.0, %v1465
  %v1467 = vpop.f32.mrb[0].mxu0
  %v1468 = vpop.f32.mrb[0].mxu0
  %1469 = vdwg.mxu0
  %1470 = vmatprep.subr.bf16.mxu0 %v1368
  %1471 = vmatpush1.bf16.msra.mxu0 %v1367
  %1472 = vmatprep.subr.bf16.mxu0 %v1372
  %1473 = vmatpush1.bf16.msra.mxu0 %v1371
  %1474 = vmatprep.subr.bf16.mxu0 %v1376
  %1475 = vmatpush1.bf16.msra.mxu0 %v1375
  %1476 = vmatprep.subr.bf16.mxu0 %v1380
  %1477 = vmatpush1.bf16.msra.mxu0 %v1379
  %1478 = vmatprep.subr.bf16.mxu0 %v1384
  %1479 = vmatpush1.bf16.msra.mxu0 %v1383
  %1480 = vmatprep.subr.bf16.mxu0 %v1388
  %1481 = vmatpush1.bf16.msra.mxu0 %v1387
  %1482 = vmatprep.subr.bf16.mxu0 %v1392
  %1483 = vmatpush1.bf16.msra.mxu0 %v1391
  %1484 = vmatprep.subr.bf16.mxu0 %v1396
  %1485 = vmatpush1.bf16.msra.mxu0 %v1395
  %1486 = vmatprep.subr.bf16.mxu0 0
  %1487 = vmatpush1.bf16.msra.mxu0 0
  %1488 = vmatprep.subr.bf16.mxu0 0
  %1489 = vmatpush1.bf16.msra.mxu0 0
  %1490 = vmatprep.subr.bf16.mxu0 0
  %1491 = vmatpush1.bf16.msra.mxu0 0
  %1492 = vmatprep.subr.bf16.mxu0 0
  %1493 = vmatpush1.bf16.msra.mxu0 0
  %1494 = vmatprep.subr.bf16.mxu0 0
  %1495 = vmatpush1.bf16.msra.mxu0 0
  %1496 = vmatprep.subr.bf16.mxu0 0
  %1497 = vmatpush1.bf16.msra.mxu0 0
  %1498 = vmatprep.subr.bf16.mxu0 0
  %1499 = vmatpush1.bf16.msra.mxu0 0
  %1500 = vmatprep.subr.bf16.mxu0 0
  %1501 = vmatpush1.bf16.msra.mxu0 0
  %1502 = vmatprep.mubr.bf16.mxu0 0
  %1503 = vmatmul.mubr.bf16.gmra.mrb[0].mxu0 %v1236
  %v1504 = vpop.f32.mrb[0].mxu0
  %v1505 = vadd.f32 0.0, %v1504
  %v1506 = vpop.f32.mrb[0].mxu0
  %v1507 = vadd.f32 0.0, %v1506
  %v1508 = vpop.f32.mrb[0].mxu0
  %v1509 = vpop.f32.mrb[0].mxu0
  %1510 = vdwg.mxu0
  %v1511 = vadd.f32 %v1232, %v1464
  %v1512 = vadd.f32 %v1233, %v1466
  %v1513 = vadd.f32 %v1234, %v1505
  %v1514 = vadd.f32 %v1235, %v1507
  %v1515 = vmul.f32 %v1511, 0.5
  %v1516 = vtanh.pop %v1515
  %v1517 = vmul.f32 %v1516, 0.5
  %v1518 = vadd.f32 %v1517, 0.5
  %v1519 = vmul.f32 %v1512, 0.5
  %v1520 = vtanh.pop %v1519
  %v1521 = vmul.f32 %v1520, 0.5
  %v1522 = vadd.f32 %v1521, 0.5
  %v1523 = vtanh.pop %v1513
  %v1524 = vmul.f32 %v1514, 0.5
  %v1525 = vtanh.pop %v1524
  %v1526 = vmul.f32 %v1525, 0.5
  %v1527 = vadd.f32 %v1526, 0.5
  %v1528 = vmul.f32 %v1522, %v1224
  %v1529 = vmul.f32 %v1518, %v1523
  %v1530 = vadd.f32 %v1528, %v1529
  %v1531 = vtanh.pop %v1530
  %v1532 = vmul.f32 %v1527, %v1531
  %1533 = vst [vmem:[#allocation3 + $0x18] sm:$0xff] %v1532
  %v1534 = vld [vmem:[#allocation2 + $0x80] sm:$0xff]
  %v1535 = vld [vmem:[#allocation2 + $0x88] sm:$0xff]
  %v1536 = vld [vmem:[#allocation2 + $0x90] sm:$0xff]
  %v1537 = vld [vmem:[#allocation2 + $0x98] sm:$0xff]
  %v1538 = vadd.f32 %v1534, %v304
  %v1539 = vadd.f32 %v1535, %v305
  %v1540 = vadd.f32 %v1536, %v306
  %v1541 = vadd.f32 %v1537, %v307
  %v1542 = vpack.c.bf16 %v1532, %v1532
  %v1543 = vld [vmem:[%s5] sm:$0xff]
  %v1544 = vld [vmem:[%s5 + $0x8] sm:$0xff]
  %v1545 = vld [vmem:[%s5 + $0x10] sm:$0xff]
  %v1546 = vld [vmem:[%s5 + $0x18] sm:$0xff]
  %v1547 = vld [vmem:[%s5 + $0x20] sm:$0xff]
  %v1548 = vld [vmem:[%s5 + $0x28] sm:$0xff]
  %v1549 = vld [vmem:[%s5 + $0x30] sm:$0xff]
  %v1550 = vld [vmem:[%s5 + $0x38] sm:$0xff]
  %v1551 = vld [vmem:[%s5 + $0x40] sm:$0xff]
  %v1552 = vld [vmem:[%s5 + $0x48] sm:$0xff]
  %v1553 = vld [vmem:[%s5 + $0x50] sm:$0xff]
  %v1554 = vld [vmem:[%s5 + $0x58] sm:$0xff]
  %v1555 = vld [vmem:[%s5 + $0x60] sm:$0xff]
  %v1556 = vld [vmem:[%s5 + $0x68] sm:$0xff]
  %v1557 = vld [vmem:[%s5 + $0x70] sm:$0xff]
  %v1558 = vld [vmem:[%s5 + $0x78] sm:$0xff]
  %v1559 = vld [vmem:[%s5 + $0x80] sm:$0xff]
  %v1560 = vld [vmem:[%s5 + $0x88] sm:$0xff]
  %v1561 = vld [vmem:[%s5 + $0x90] sm:$0xff]
  %v1562 = vld [vmem:[%s5 + $0x98] sm:$0xff]
  %v1563 = vld [vmem:[%s5 + $0xa0] sm:$0xff]
  %v1564 = vld [vmem:[%s5 + $0xa8] sm:$0xff]
  %v1565 = vld [vmem:[%s5 + $0xb0] sm:$0xff]
  %v1566 = vld [vmem:[%s5 + $0xb8] sm:$0xff]
  %v1567 = vld [vmem:[%s5 + $0xc0] sm:$0xff]
  %v1568 = vld [vmem:[%s5 + $0xc8] sm:$0xff]
  %v1569 = vld [vmem:[%s5 + $0xd0] sm:$0xff]
  %v1570 = vld [vmem:[%s5 + $0xd8] sm:$0xff]
  %v1571 = vld [vmem:[%s5 + $0xe0] sm:$0xff]
  %v1572 = vld [vmem:[%s5 + $0xe8] sm:$0xff]
  %v1573 = vld [vmem:[%s5 + $0xf0] sm:$0xff]
  %v1574 = vld [vmem:[%s5 + $0xf8] sm:$0xff]
  %v1607 = vunpack.c.l.b16 %v1543
  %v1608 = vunpack.c.h.b16 %v1543
  %v1609 = vunpack.c.l.b16 %v1544
  %v1610 = vunpack.c.h.b16 %v1544
  %v1611 = vunpack.c.l.b16 %v1545
  %v1612 = vunpack.c.h.b16 %v1545
  %v1613 = vunpack.c.l.b16 %v1546
  %v1614 = vunpack.c.h.b16 %v1546
  %v1615 = vunpack.c.l.b16 %v1547
  %v1616 = vunpack.c.h.b16 %v1547
  %v1617 = vunpack.c.l.b16 %v1548
  %v1618 = vunpack.c.h.b16 %v1548
  %v1619 = vunpack.c.l.b16 %v1549
  %v1620 = vunpack.c.h.b16 %v1549
  %v1621 = vunpack.c.l.b16 %v1550
  %v1622 = vunpack.c.h.b16 %v1550
  %v1623 = vunpack.c.l.b16 %v1551
  %v1624 = vunpack.c.h.b16 %v1551
  %v1625 = vunpack.c.l.b16 %v1552
  %v1626 = vunpack.c.h.b16 %v1552
  %v1627 = vunpack.c.l.b16 %v1553
  %v1628 = vunpack.c.h.b16 %v1553
  %v1629 = vunpack.c.l.b16 %v1554
  %v1630 = vunpack.c.h.b16 %v1554
  %v1631 = vunpack.c.l.b16 %v1555
  %v1632 = vunpack.c.h.b16 %v1555
  %v1633 = vunpack.c.l.b16 %v1556
  %v1634 = vunpack.c.h.b16 %v1556
  %v1635 = vunpack.c.l.b16 %v1557
  %v1636 = vunpack.c.h.b16 %v1557
  %v1637 = vunpack.c.l.b16 %v1558
  %v1638 = vunpack.c.h.b16 %v1558
  %v1639 = vunpack.c.l.b16 %v1559
  %v1640 = vunpack.c.h.b16 %v1559
  %v1641 = vunpack.c.l.b16 %v1560
  %v1642 = vunpack.c.h.b16 %v1560
  %v1643 = vunpack.c.l.b16 %v1561
  %v1644 = vunpack.c.h.b16 %v1561
  %v1645 = vunpack.c.l.b16 %v1562
  %v1646 = vunpack.c.h.b16 %v1562
  %v1647 = vunpack.c.l.b16 %v1563
  %v1648 = vunpack.c.h.b16 %v1563
  %v1649 = vunpack.c.l.b16 %v1564
  %v1650 = vunpack.c.h.b16 %v1564
  %v1651 = vunpack.c.l.b16 %v1565
  %v1652 = vunpack.c.h.b16 %v1565
  %v1653 = vunpack.c.l.b16 %v1566
  %v1654 = vunpack.c.h.b16 %v1566
  %v1655 = vunpack.c.l.b16 %v1567
  %v1656 = vunpack.c.h.b16 %v1567
  %v1657 = vunpack.c.l.b16 %v1568
  %v1658 = vunpack.c.h.b16 %v1568
  %v1659 = vunpack.c.l.b16 %v1569
  %v1660 = vunpack.c.h.b16 %v1569
  %v1661 = vunpack.c.l.b16 %v1570
  %v1662 = vunpack.c.h.b16 %v1570
  %v1663 = vunpack.c.l.b16 %v1571
  %v1664 = vunpack.c.h.b16 %v1571
  %v1665 = vunpack.c.l.b16 %v1572
  %v1666 = vunpack.c.h.b16 %v1572
  %v1667 = vunpack.c.l.b16 %v1573
  %v1668 = vunpack.c.h.b16 %v1573
  %v1669 = vunpack.c.l.b16 %v1574
  %v1670 = vunpack.c.h.b16 %v1574
  %v1671 = vpack.c.b16 %v1611, %v1607
  %v1672 = vpack.c.b16 %v1612, %v1608
  %v1673 = vpack.c.b16 %v1613, %v1609
  %v1674 = vpack.c.b16 %v1614, %v1610
  %v1675 = vpack.c.b16 %v1619, %v1615
  %v1676 = vpack.c.b16 %v1620, %v1616
  %v1677 = vpack.c.b16 %v1621, %v1617
  %v1678 = vpack.c.b16 %v1622, %v1618
  %v1679 = vpack.c.b16 %v1627, %v1623
  %v1680 = vpack.c.b16 %v1628, %v1624
  %v1681 = vpack.c.b16 %v1629, %v1625
  %v1682 = vpack.c.b16 %v1630, %v1626
  %v1683 = vpack.c.b16 %v1635, %v1631
  %v1684 = vpack.c.b16 %v1636, %v1632
  %v1685 = vpack.c.b16 %v1637, %v1633
  %v1686 = vpack.c.b16 %v1638, %v1634
  %v1687 = vpack.c.b16 %v1643, %v1639
  %v1688 = vpack.c.b16 %v1644, %v1640
  %v1689 = vpack.c.b16 %v1645, %v1641
  %v1690 = vpack.c.b16 %v1646, %v1642
  %v1691 = vpack.c.b16 %v1651, %v1647
  %v1692 = vpack.c.b16 %v1652, %v1648
  %v1693 = vpack.c.b16 %v1653, %v1649
  %v1694 = vpack.c.b16 %v1654, %v1650
  %v1695 = vpack.c.b16 %v1659, %v1655
  %v1696 = vpack.c.b16 %v1660, %v1656
  %v1697 = vpack.c.b16 %v1661, %v1657
  %v1698 = vpack.c.b16 %v1662, %v1658
  %v1699 = vpack.c.b16 %v1667, %v1663
  %v1700 = vpack.c.b16 %v1668, %v1664
  %v1701 = vpack.c.b16 %v1669, %v1665
  %v1702 = vpack.c.b16 %v1670, %v1666
  %1735 = vmatprep.subr.bf16.mxu0 %v1672
  %1736 = vmatpush1.bf16.msra.mxu0 %v1671
  %1737 = vmatprep.subr.bf16.mxu0 %v1676
  %1738 = vmatpush1.bf16.msra.mxu0 %v1675
  %1739 = vmatprep.subr.bf16.mxu0 %v1680
  %1740 = vmatpush1.bf16.msra.mxu0 %v1679
  %1741 = vmatprep.subr.bf16.mxu0 %v1684
  %1742 = vmatpush1.bf16.msra.mxu0 %v1683
  %1743 = vmatprep.subr.bf16.mxu0 %v1688
  %1744 = vmatpush1.bf16.msra.mxu0 %v1687
  %1745 = vmatprep.subr.bf16.mxu0 %v1692
  %1746 = vmatpush1.bf16.msra.mxu0 %v1691
  %1747 = vmatprep.subr.bf16.mxu0 %v1696
  %1748 = vmatpush1.bf16.msra.mxu0 %v1695
  %1749 = vmatprep.subr.bf16.mxu0 %v1700
  %1750 = vmatpush1.bf16.msra.mxu0 %v1699
  %1751 = vmatprep.subr.bf16.mxu0 0
  %1752 = vmatpush1.bf16.msra.mxu0 0
  %1753 = vmatprep.subr.bf16.mxu0 0
  %1754 = vmatpush1.bf16.msra.mxu0 0
  %1755 = vmatprep.subr.bf16.mxu0 0
  %1756 = vmatpush1.bf16.msra.mxu0 0
  %1757 = vmatprep.subr.bf16.mxu0 0
  %1758 = vmatpush1.bf16.msra.mxu0 0
  %1759 = vmatprep.subr.bf16.mxu0 0
  %1760 = vmatpush1.bf16.msra.mxu0 0
  %1761 = vmatprep.subr.bf16.mxu0 0
  %1762 = vmatpush1.bf16.msra.mxu0 0
  %1763 = vmatprep.subr.bf16.mxu0 0
  %1764 = vmatpush1.bf16.msra.mxu0 0
  %1765 = vmatprep.subr.bf16.mxu0 0
  %1766 = vmatpush1.bf16.msra.mxu0 0
  %1767 = vmatprep.mubr.bf16.mxu0 0
  %1768 = vmatmul.mubr.bf16.gmra.mrb[0].mxu0 %v1542
  %v1769 = vpop.f32.mrb[0].mxu0
  %v1770 = vadd.f32 0.0, %v1769
  %v1771 = vpop.f32.mrb[0].mxu0
  %v1772 = vadd.f32 0.0, %v1771
  %v1773 = vpop.f32.mrb[0].mxu0
  %v1774 = vpop.f32.mrb[0].mxu0
  %1775 = vdwg.mxu0
  %1776 = vmatprep.subr.bf16.mxu0 %v1674
  %1777 = vmatpush1.bf16.msra.mxu0 %v1673
  %1778 = vmatprep.subr.bf16.mxu0 %v1678
  %1779 = vmatpush1.bf16.msra.mxu0 %v1677
  %1780 = vmatprep.subr.bf16.mxu0 %v1682
  %1781 = vmatpush1.bf16.msra.mxu0 %v1681
  %1782 = vmatprep.subr.bf16.mxu0 %v1686
  %1783 = vmatpush1.bf16.msra.mxu0 %v1685
  %1784 = vmatprep.subr.bf16.mxu0 %v1690
  %1785 = vmatpush1.bf16.msra.mxu0 %v1689
  %1786 = vmatprep.subr.bf16.mxu0 %v1694
  %1787 = vmatpush1.bf16.msra.mxu0 %v1693
  %1788 = vmatprep.subr.bf16.mxu0 %v1698
  %1789 = vmatpush1.bf16.msra.mxu0 %v1697
  %1790 = vmatprep.subr.bf16.mxu0 %v1702
  %1791 = vmatpush1.bf16.msra.mxu0 %v1701
  %1792 = vmatprep.subr.bf16.mxu0 0
  %1793 = vmatpush1.bf16.msra.mxu0 0
  %1794 = vmatprep.subr.bf16.mxu0 0
  %1795 = vmatpush1.bf16.msra.mxu0 0
  %1796 = vmatprep.subr.bf16.mxu0 0
  %1797 = vmatpush1.bf16.msra.mxu0 0
  %1798 = vmatprep.subr.bf16.mxu0 0
  %1799 = vmatpush1.bf16.msra.mxu0 0
  %1800 = vmatprep.subr.bf16.mxu0 0
  %1801 = vmatpush1.bf16.msra.mxu0 0
  %1802 = vmatprep.subr.bf16.mxu0 0
  %1803 = vmatpush1.bf16.msra.mxu0 0
  %1804 = vmatprep.subr.bf16.mxu0 0
  %1805 = vmatpush1.bf16.msra.mxu0 0
  %1806 = vmatprep.subr.bf16.mxu0 0
  %1807 = vmatpush1.bf16.msra.mxu0 0
  %1808 = vmatprep.mubr.bf16.mxu0 0
  %1809 = vmatmul.mubr.bf16.gmra.mrb[0].mxu0 %v1542
  %v1810 = vpop.f32.mrb[0].mxu0
  %v1811 = vadd.f32 0.0, %v1810
  %v1812 = vpop.f32.mrb[0].mxu0
  %v1813 = vadd.f32 0.0, %v1812
  %v1814 = vpop.f32.mrb[0].mxu0
  %v1815 = vpop.f32.mrb[0].mxu0
  %1816 = vdwg.mxu0
  %v1817 = vadd.f32 %v1538, %v1770
  %v1818 = vadd.f32 %v1539, %v1772
  %v1819 = vadd.f32 %v1540, %v1811
  %v1820 = vadd.f32 %v1541, %v1813
  %v1821 = vmul.f32 %v1817, 0.5
  %v1822 = vtanh.pop %v1821
  %v1823 = vmul.f32 %v1822, 0.5
  %v1824 = vadd.f32 %v1823, 0.5
  %v1825 = vmul.f32 %v1818, 0.5
  %v1826 = vtanh.pop %v1825
  %v1827 = vmul.f32 %v1826, 0.5
  %v1828 = vadd.f32 %v1827, 0.5
  %v1829 = vtanh.pop %v1819
  %v1830 = vmul.f32 %v1820, 0.5
  %v1831 = vtanh.pop %v1830
  %v1832 = vmul.f32 %v1831, 0.5
  %v1833 = vadd.f32 %v1832, 0.5
  %v1834 = vmul.f32 %v1828, %v1530
  %v1835 = vmul.f32 %v1824, %v1829
  %v1836 = vadd.f32 %v1834, %v1835
  %v1837 = vtanh.pop %v1836
  %v1838 = vmul.f32 %v1833, %v1837
  %1839 = vst [vmem:[#allocation3 + $0x20] sm:$0xff] %v1838
  %v1840 = vld [vmem:[#allocation2 + $0xa0] sm:$0xff]
  %v1841 = vld [vmem:[#allocation2 + $0xa8] sm:$0xff]
  %v1842 = vld [vmem:[#allocation2 + $0xb0] sm:$0xff]
  %v1843 = vld [vmem:[#allocation2 + $0xb8] sm:$0xff]
  %v1844 = vadd.f32 %v1840, %v304
  %v1845 = vadd.f32 %v1841, %v305
  %v1846 = vadd.f32 %v1842, %v306
  %v1847 = vadd.f32 %v1843, %v307
  %v1848 = vpack.c.bf16 %v1838, %v1838
  %v1849 = vld [vmem:[%s5] sm:$0xff]
  %v1850 = vld [vmem:[%s5 + $0x8] sm:$0xff]
  %v1851 = vld [vmem:[%s5 + $0x10] sm:$0xff]
  %v1852 = vld [vmem:[%s5 + $0x18] sm:$0xff]
  %v1853 = vld [vmem:[%s5 + $0x20] sm:$0xff]
  %v1854 = vld [vmem:[%s5 + $0x28] sm:$0xff]
  %v1855 = vld [vmem:[%s5 + $0x30] sm:$0xff]
  %v1856 = vld [vmem:[%s5 + $0x38] sm:$0xff]
  %v1857 = vld [vmem:[%s5 + $0x40] sm:$0xff]
  %v1858 = vld [vmem:[%s5 + $0x48] sm:$0xff]
  %v1859 = vld [vmem:[%s5 + $0x50] sm:$0xff]
  %v1860 = vld [vmem:[%s5 + $0x58] sm:$0xff]
  %v1861 = vld [vmem:[%s5 + $0x60] sm:$0xff]
  %v1862 = vld [vmem:[%s5 + $0x68] sm:$0xff]
  %v1863 = vld [vmem:[%s5 + $0x70] sm:$0xff]
  %v1864 = vld [vmem:[%s5 + $0x78] sm:$0xff]
  %v1865 = vld [vmem:[%s5 + $0x80] sm:$0xff]
  %v1866 = vld [vmem:[%s5 + $0x88] sm:$0xff]
  %v1867 = vld [vmem:[%s5 + $0x90] sm:$0xff]
  %v1868 = vld [vmem:[%s5 + $0x98] sm:$0xff]
  %v1869 = vld [vmem:[%s5 + $0xa0] sm:$0xff]
  %v1870 = vld [vmem:[%s5 + $0xa8] sm:$0xff]
  %v1871 = vld [vmem:[%s5 + $0xb0] sm:$0xff]
  %v1872 = vld [vmem:[%s5 + $0xb8] sm:$0xff]
  %v1873 = vld [vmem:[%s5 + $0xc0] sm:$0xff]
  %v1874 = vld [vmem:[%s5 + $0xc8] sm:$0xff]
  %v1875 = vld [vmem:[%s5 + $0xd0] sm:$0xff]
  %v1876 = vld [vmem:[%s5 + $0xd8] sm:$0xff]
  %v1877 = vld [vmem:[%s5 + $0xe0] sm:$0xff]
  %v1878 = vld [vmem:[%s5 + $0xe8] sm:$0xff]
  %v1879 = vld [vmem:[%s5 + $0xf0] sm:$0xff]
  %v1880 = vld [vmem:[%s5 + $0xf8] sm:$0xff]
  %v1913 = vunpack.c.l.b16 %v1849
  %v1914 = vunpack.c.h.b16 %v1849
  %v1915 = vunpack.c.l.b16 %v1850
  %v1916 = vunpack.c.h.b16 %v1850
  %v1917 = vunpack.c.l.b16 %v1851
  %v1918 = vunpack.c.h.b16 %v1851
  %v1919 = vunpack.c.l.b16 %v1852
  %v1920 = vunpack.c.h.b16 %v1852
  %v1921 = vunpack.c.l.b16 %v1853
  %v1922 = vunpack.c.h.b16 %v1853
  %v1923 = vunpack.c.l.b16 %v1854
  %v1924 = vunpack.c.h.b16 %v1854
  %v1925 = vunpack.c.l.b16 %v1855
  %v1926 = vunpack.c.h.b16 %v1855
  %v1927 = vunpack.c.l.b16 %v1856
  %v1928 = vunpack.c.h.b16 %v1856
  %v1929 = vunpack.c.l.b16 %v1857
  %v1930 = vunpack.c.h.b16 %v1857
  %v1931 = vunpack.c.l.b16 %v1858
  %v1932 = vunpack.c.h.b16 %v1858
  %v1933 = vunpack.c.l.b16 %v1859
  %v1934 = vunpack.c.h.b16 %v1859
  %v1935 = vunpack.c.l.b16 %v1860
  %v1936 = vunpack.c.h.b16 %v1860
  %v1937 = vunpack.c.l.b16 %v1861
  %v1938 = vunpack.c.h.b16 %v1861
  %v1939 = vunpack.c.l.b16 %v1862
  %v1940 = vunpack.c.h.b16 %v1862
  %v1941 = vunpack.c.l.b16 %v1863
  %v1942 = vunpack.c.h.b16 %v1863
  %v1943 = vunpack.c.l.b16 %v1864
  %v1944 = vunpack.c.h.b16 %v1864
  %v1945 = vunpack.c.l.b16 %v1865
  %v1946 = vunpack.c.h.b16 %v1865
  %v1947 = vunpack.c.l.b16 %v1866
  %v1948 = vunpack.c.h.b16 %v1866
  %v1949 = vunpack.c.l.b16 %v1867
  %v1950 = vunpack.c.h.b16 %v1867
  %v1951 = vunpack.c.l.b16 %v1868
  %v1952 = vunpack.c.h.b16 %v1868
  %v1953 = vunpack.c.l.b16 %v1869
  %v1954 = vunpack.c.h.b16 %v1869
  %v1955 = vunpack.c.l.b16 %v1870
  %v1956 = vunpack.c.h.b16 %v1870
  %v1957 = vunpack.c.l.b16 %v1871
  %v1958 = vunpack.c.h.b16 %v1871
  %v1959 = vunpack.c.l.b16 %v1872
  %v1960 = vunpack.c.h.b16 %v1872
  %v1961 = vunpack.c.l.b16 %v1873
  %v1962 = vunpack.c.h.b16 %v1873
  %v1963 = vunpack.c.l.b16 %v1874
  %v1964 = vunpack.c.h.b16 %v1874
  %v1965 = vunpack.c.l.b16 %v1875
  %v1966 = vunpack.c.h.b16 %v1875
  %v1967 = vunpack.c.l.b16 %v1876
  %v1968 = vunpack.c.h.b16 %v1876
  %v1969 = vunpack.c.l.b16 %v1877
  %v1970 = vunpack.c.h.b16 %v1877
  %v1971 = vunpack.c.l.b16 %v1878
  %v1972 = vunpack.c.h.b16 %v1878
  %v1973 = vunpack.c.l.b16 %v1879
  %v1974 = vunpack.c.h.b16 %v1879
  %v1975 = vunpack.c.l.b16 %v1880
  %v1976 = vunpack.c.h.b16 %v1880
  %v1977 = vpack.c.b16 %v1917, %v1913
  %v1978 = vpack.c.b16 %v1918, %v1914
  %v1979 = vpack.c.b16 %v1919, %v1915
  %v1980 = vpack.c.b16 %v1920, %v1916
  %v1981 = vpack.c.b16 %v1925, %v1921
  %v1982 = vpack.c.b16 %v1926, %v1922
  %v1983 = vpack.c.b16 %v1927, %v1923
  %v1984 = vpack.c.b16 %v1928, %v1924
  %v1985 = vpack.c.b16 %v1933, %v1929
  %v1986 = vpack.c.b16 %v1934, %v1930
  %v1987 = vpack.c.b16 %v1935, %v1931
  %v1988 = vpack.c.b16 %v1936, %v1932
  %v1989 = vpack.c.b16 %v1941, %v1937
  %v1990 = vpack.c.b16 %v1942, %v1938
  %v1991 = vpack.c.b16 %v1943, %v1939
  %v1992 = vpack.c.b16 %v1944, %v1940
  %v1993 = vpack.c.b16 %v1949, %v1945
  %v1994 = vpack.c.b16 %v1950, %v1946
  %v1995 = vpack.c.b16 %v1951, %v1947
  %v1996 = vpack.c.b16 %v1952, %v1948
  %v1997 = vpack.c.b16 %v1957, %v1953
  %v1998 = vpack.c.b16 %v1958, %v1954
  %v1999 = vpack.c.b16 %v1959, %v1955
  %v2000 = vpack.c.b16 %v1960, %v1956
  %v2001 = vpack.c.b16 %v1965, %v1961
  %v2002 = vpack.c.b16 %v1966, %v1962
  %v2003 = vpack.c.b16 %v1967, %v1963
  %v2004 = vpack.c.b16 %v1968, %v1964
  %v2005 = vpack.c.b16 %v1973, %v1969
  %v2006 = vpack.c.b16 %v1974, %v1970
  %v2007 = vpack.c.b16 %v1975, %v1971
  %v2008 = vpack.c.b16 %v1976, %v1972
  %2041 = vmatprep.subr.bf16.mxu0 %v1978
  %2042 = vmatpush1.bf16.msra.mxu0 %v1977
  %2043 = vmatprep.subr.bf16.mxu0 %v1982
  %2044 = vmatpush1.bf16.msra.mxu0 %v1981
  %2045 = vmatprep.subr.bf16.mxu0 %v1986
  %2046 = vmatpush1.bf16.msra.mxu0 %v1985
  %2047 = vmatprep.subr.bf16.mxu0 %v1990
  %2048 = vmatpush1.bf16.msra.mxu0 %v1989
  %2049 = vmatprep.subr.bf16.mxu0 %v1994
  %2050 = vmatpush1.bf16.msra.mxu0 %v1993
  %2051 = vmatprep.subr.bf16.mxu0 %v1998
  %2052 = vmatpush1.bf16.msra.mxu0 %v1997
  %2053 = vmatprep.subr.bf16.mxu0 %v2002
  %2054 = vmatpush1.bf16.msra.mxu0 %v2001
  %2055 = vmatprep.subr.bf16.mxu0 %v2006
  %2056 = vmatpush1.bf16.msra.mxu0 %v2005
  %2057 = vmatprep.subr.bf16.mxu0 0
  %2058 = vmatpush1.bf16.msra.mxu0 0
  %2059 = vmatprep.subr.bf16.mxu0 0
  %2060 = vmatpush1.bf16.msra.mxu0 0
  %2061 = vmatprep.subr.bf16.mxu0 0
  %2062 = vmatpush1.bf16.msra.mxu0 0
  %2063 = vmatprep.subr.bf16.mxu0 0
  %2064 = vmatpush1.bf16.msra.mxu0 0
  %2065 = vmatprep.subr.bf16.mxu0 0
  %2066 = vmatpush1.bf16.msra.mxu0 0
  %2067 = vmatprep.subr.bf16.mxu0 0
  %2068 = vmatpush1.bf16.msra.mxu0 0
  %2069 = vmatprep.subr.bf16.mxu0 0
  %2070 = vmatpush1.bf16.msra.mxu0 0
  %2071 = vmatprep.subr.bf16.mxu0 0
  %2072 = vmatpush1.bf16.msra.mxu0 0
  %2073 = vmatprep.mubr.bf16.mxu0 0
  %2074 = vmatmul.mubr.bf16.gmra.mrb[0].mxu0 %v1848
  %v2075 = vpop.f32.mrb[0].mxu0
  %v2076 = vadd.f32 0.0, %v2075
  %v2077 = vpop.f32.mrb[0].mxu0
  %v2078 = vadd.f32 0.0, %v2077
  %v2079 = vpop.f32.mrb[0].mxu0
  %v2080 = vpop.f32.mrb[0].mxu0
  %2081 = vdwg.mxu0
  %2082 = vmatprep.subr.bf16.mxu0 %v1980
  %2083 = vmatpush1.bf16.msra.mxu0 %v1979
  %2084 = vmatprep.subr.bf16.mxu0 %v1984
  %2085 = vmatpush1.bf16.msra.mxu0 %v1983
  %2086 = vmatprep.subr.bf16.mxu0 %v1988
  %2087 = vmatpush1.bf16.msra.mxu0 %v1987
  %2088 = vmatprep.subr.bf16.mxu0 %v1992
  %2089 = vmatpush1.bf16.msra.mxu0 %v1991
  %2090 = vmatprep.subr.bf16.mxu0 %v1996
  %2091 = vmatpush1.bf16.msra.mxu0 %v1995
  %2092 = vmatprep.subr.bf16.mxu0 %v2000
  %2093 = vmatpush1.bf16.msra.mxu0 %v1999
  %2094 = vmatprep.subr.bf16.mxu0 %v2004
  %2095 = vmatpush1.bf16.msra.mxu0 %v2003
  %2096 = vmatprep.subr.bf16.mxu0 %v2008
  %2097 = vmatpush1.bf16.msra.mxu0 %v2007
  %2098 = vmatprep.subr.bf16.mxu0 0
  %2099 = vmatpush1.bf16.msra.mxu0 0
  %2100 = vmatprep.subr.bf16.mxu0 0
  %2101 = vmatpush1.bf16.msra.mxu0 0
  %2102 = vmatprep.subr.bf16.mxu0 0
  %2103 = vmatpush1.bf16.msra.mxu0 0
  %2104 = vmatprep.subr.bf16.mxu0 0
  %2105 = vmatpush1.bf16.msra.mxu0 0
  %2106 = vmatprep.subr.bf16.mxu0 0
  %2107 = vmatpush1.bf16.msra.mxu0 0
  %2108 = vmatprep.subr.bf16.mxu0 0
  %2109 = vmatpush1.bf16.msra.mxu0 0
  %2110 = vmatprep.subr.bf16.mxu0 0
  %2111 = vmatpush1.bf16.msra.mxu0 0
  %2112 = vmatprep.subr.bf16.mxu0 0
  %2113 = vmatpush1.bf16.msra.mxu0 0
  %2114 = vmatprep.mubr.bf16.mxu0 0
  %2115 = vmatmul.mubr.bf16.gmra.mrb[0].mxu0 %v1848
  %v2116 = vpop.f32.mrb[0].mxu0
  %v2117 = vadd.f32 0.0, %v2116
  %v2118 = vpop.f32.mrb[0].mxu0
  %v2119 = vadd.f32 0.0, %v2118
  %v2120 = vpop.f32.mrb[0].mxu0
  %v2121 = vpop.f32.mrb[0].mxu0
  %2122 = vdwg.mxu0
  %v2123 = vadd.f32 %v1844, %v2076
  %v2124 = vadd.f32 %v1845, %v2078
  %v2125 = vadd.f32 %v1846, %v2117
  %v2126 = vadd.f32 %v1847, %v2119
  %v2127 = vmul.f32 %v2123, 0.5
  %v2128 = vtanh.pop %v2127
  %v2129 = vmul.f32 %v2128, 0.5
  %v2130 = vadd.f32 %v2129, 0.5
  %v2131 = vmul.f32 %v2124, 0.5
  %v2132 = vtanh.pop %v2131
  %v2133 = vmul.f32 %v2132, 0.5
  %v2134 = vadd.f32 %v2133, 0.5
  %v2135 = vtanh.pop %v2125
  %v2136 = vmul.f32 %v2126, 0.5
  %v2137 = vtanh.pop %v2136
  %v2138 = vmul.f32 %v2137, 0.5
  %v2139 = vadd.f32 %v2138, 0.5
  %v2140 = vmul.f32 %v2134, %v1836
  %v2141 = vmul.f32 %v2130, %v2135
  %v2142 = vadd.f32 %v2140, %v2141
  %v2143 = vtanh.pop %v2142
  %v2144 = vmul.f32 %v2139, %v2143
  %2145 = vst [vmem:[#allocation3 + $0x28] sm:$0xff] %v2144
  %v2146 = vld [vmem:[#allocation2 + $0xc0] sm:$0xff]
  %v2147 = vld [vmem:[#allocation2 + $0xc8] sm:$0xff]
  %v2148 = vld [vmem:[#allocation2 + $0xd0] sm:$0xff]
  %v2149 = vld [vmem:[#allocation2 + $0xd8] sm:$0xff]
  %v2150 = vadd.f32 %v2146, %v304
  %v2151 = vadd.f32 %v2147, %v305
  %v2152 = vadd.f32 %v2148, %v306
  %v2153 = vadd.f32 %v2149, %v307
  %v2154 = vpack.c.bf16 %v2144, %v2144
  %v2155 = vld [vmem:[%s5] sm:$0xff]
  %v2156 = vld [vmem:[%s5 + $0x8] sm:$0xff]
  %v2157 = vld [vmem:[%s5 + $0x10] sm:$0xff]
  %v2158 = vld [vmem:[%s5 + $0x18] sm:$0xff]
  %v2159 = vld [vmem:[%s5 + $0x20] sm:$0xff]
  %v2160 = vld [vmem:[%s5 + $0x28] sm:$0xff]
  %v2161 = vld [vmem:[%s5 + $0x30] sm:$0xff]
  %v2162 = vld [vmem:[%s5 + $0x38] sm:$0xff]
  %v2163 = vld [vmem:[%s5 + $0x40] sm:$0xff]
  %v2164 = vld [vmem:[%s5 + $0x48] sm:$0xff]
  %v2165 = vld [vmem:[%s5 + $0x50] sm:$0xff]
  %v2166 = vld [vmem:[%s5 + $0x58] sm:$0xff]
  %v2167 = vld [vmem:[%s5 + $0x60] sm:$0xff]
  %v2168 = vld [vmem:[%s5 + $0x68] sm:$0xff]
  %v2169 = vld [vmem:[%s5 + $0x70] sm:$0xff]
  %v2170 = vld [vmem:[%s5 + $0x78] sm:$0xff]
  %v2171 = vld [vmem:[%s5 + $0x80] sm:$0xff]
  %v2172 = vld [vmem:[%s5 + $0x88] sm:$0xff]
  %v2173 = vld [vmem:[%s5 + $0x90] sm:$0xff]
  %v2174 = vld [vmem:[%s5 + $0x98] sm:$0xff]
  %v2175 = vld [vmem:[%s5 + $0xa0] sm:$0xff]
  %v2176 = vld [vmem:[%s5 + $0xa8] sm:$0xff]
  %v2177 = vld [vmem:[%s5 + $0xb0] sm:$0xff]
  %v2178 = vld [vmem:[%s5 + $0xb8] sm:$0xff]
  %v2179 = vld [vmem:[%s5 + $0xc0] sm:$0xff]
  %v2180 = vld [vmem:[%s5 + $0xc8] sm:$0xff]
  %v2181 = vld [vmem:[%s5 + $0xd0] sm:$0xff]
  %v2182 = vld [vmem:[%s5 + $0xd8] sm:$0xff]
  %v2183 = vld [vmem:[%s5 + $0xe0] sm:$0xff]
  %v2184 = vld [vmem:[%s5 + $0xe8] sm:$0xff]
  %v2185 = vld [vmem:[%s5 + $0xf0] sm:$0xff]
  %v2186 = vld [vmem:[%s5 + $0xf8] sm:$0xff]
  %v2219 = vunpack.c.l.b16 %v2155
  %v2220 = vunpack.c.h.b16 %v2155
  %v2221 = vunpack.c.l.b16 %v2156
  %v2222 = vunpack.c.h.b16 %v2156
  %v2223 = vunpack.c.l.b16 %v2157
  %v2224 = vunpack.c.h.b16 %v2157
  %v2225 = vunpack.c.l.b16 %v2158
  %v2226 = vunpack.c.h.b16 %v2158
  %v2227 = vunpack.c.l.b16 %v2159
  %v2228 = vunpack.c.h.b16 %v2159
  %v2229 = vunpack.c.l.b16 %v2160
  %v2230 = vunpack.c.h.b16 %v2160
  %v2231 = vunpack.c.l.b16 %v2161
  %v2232 = vunpack.c.h.b16 %v2161
  %v2233 = vunpack.c.l.b16 %v2162
  %v2234 = vunpack.c.h.b16 %v2162
  %v2235 = vunpack.c.l.b16 %v2163
  %v2236 = vunpack.c.h.b16 %v2163
  %v2237 = vunpack.c.l.b16 %v2164
  %v2238 = vunpack.c.h.b16 %v2164
  %v2239 = vunpack.c.l.b16 %v2165
  %v2240 = vunpack.c.h.b16 %v2165
  %v2241 = vunpack.c.l.b16 %v2166
  %v2242 = vunpack.c.h.b16 %v2166
  %v2243 = vunpack.c.l.b16 %v2167
  %v2244 = vunpack.c.h.b16 %v2167
  %v2245 = vunpack.c.l.b16 %v2168
  %v2246 = vunpack.c.h.b16 %v2168
  %v2247 = vunpack.c.l.b16 %v2169
  %v2248 = vunpack.c.h.b16 %v2169
  %v2249 = vunpack.c.l.b16 %v2170
  %v2250 = vunpack.c.h.b16 %v2170
  %v2251 = vunpack.c.l.b16 %v2171
  %v2252 = vunpack.c.h.b16 %v2171
  %v2253 = vunpack.c.l.b16 %v2172
  %v2254 = vunpack.c.h.b16 %v2172
  %v2255 = vunpack.c.l.b16 %v2173
  %v2256 = vunpack.c.h.b16 %v2173
  %v2257 = vunpack.c.l.b16 %v2174
  %v2258 = vunpack.c.h.b16 %v2174
  %v2259 = vunpack.c.l.b16 %v2175
  %v2260 = vunpack.c.h.b16 %v2175
  %v2261 = vunpack.c.l.b16 %v2176
  %v2262 = vunpack.c.h.b16 %v2176
  %v2263 = vunpack.c.l.b16 %v2177
  %v2264 = vunpack.c.h.b16 %v2177
  %v2265 = vunpack.c.l.b16 %v2178
  %v2266 = vunpack.c.h.b16 %v2178
  %v2267 = vunpack.c.l.b16 %v2179
  %v2268 = vunpack.c.h.b16 %v2179
  %v2269 = vunpack.c.l.b16 %v2180
  %v2270 = vunpack.c.h.b16 %v2180
  %v2271 = vunpack.c.l.b16 %v2181
  %v2272 = vunpack.c.h.b16 %v2181
  %v2273 = vunpack.c.l.b16 %v2182
  %v2274 = vunpack.c.h.b16 %v2182
  %v2275 = vunpack.c.l.b16 %v2183
  %v2276 = vunpack.c.h.b16 %v2183
  %v2277 = vunpack.c.l.b16 %v2184
  %v2278 = vunpack.c.h.b16 %v2184
  %v2279 = vunpack.c.l.b16 %v2185
  %v2280 = vunpack.c.h.b16 %v2185
  %v2281 = vunpack.c.l.b16 %v2186
  %v2282 = vunpack.c.h.b16 %v2186
  %v2283 = vpack.c.b16 %v2223, %v2219
  %v2284 = vpack.c.b16 %v2224, %v2220
  %v2285 = vpack.c.b16 %v2225, %v2221
  %v2286 = vpack.c.b16 %v2226, %v2222
  %v2287 = vpack.c.b16 %v2231, %v2227
  %v2288 = vpack.c.b16 %v2232, %v2228
  %v2289 = vpack.c.b16 %v2233, %v2229
  %v2290 = vpack.c.b16 %v2234, %v2230
  %v2291 = vpack.c.b16 %v2239, %v2235
  %v2292 = vpack.c.b16 %v2240, %v2236
  %v2293 = vpack.c.b16 %v2241, %v2237
  %v2294 = vpack.c.b16 %v2242, %v2238
  %v2295 = vpack.c.b16 %v2247, %v2243
  %v2296 = vpack.c.b16 %v2248, %v2244
  %v2297 = vpack.c.b16 %v2249, %v2245
  %v2298 = vpack.c.b16 %v2250, %v2246
  %v2299 = vpack.c.b16 %v2255, %v2251
  %v2300 = vpack.c.b16 %v2256, %v2252
  %v2301 = vpack.c.b16 %v2257, %v2253
  %v2302 = vpack.c.b16 %v2258, %v2254
  %v2303 = vpack.c.b16 %v2263, %v2259
  %v2304 = vpack.c.b16 %v2264, %v2260
  %v2305 = vpack.c.b16 %v2265, %v2261
  %v2306 = vpack.c.b16 %v2266, %v2262
  %v2307 = vpack.c.b16 %v2271, %v2267
  %v2308 = vpack.c.b16 %v2272, %v2268
  %v2309 = vpack.c.b16 %v2273, %v2269
  %v2310 = vpack.c.b16 %v2274, %v2270
  %v2311 = vpack.c.b16 %v2279, %v2275
  %v2312 = vpack.c.b16 %v2280, %v2276
  %v2313 = vpack.c.b16 %v2281, %v2277
  %v2314 = vpack.c.b16 %v2282, %v2278
  %2347 = vmatprep.subr.bf16.mxu0 %v2284
  %2348 = vmatpush1.bf16.msra.mxu0 %v2283
  %2349 = vmatprep.subr.bf16.mxu0 %v2288
  %2350 = vmatpush1.bf16.msra.mxu0 %v2287
  %2351 = vmatprep.subr.bf16.mxu0 %v2292
  %2352 = vmatpush1.bf16.msra.mxu0 %v2291
  %2353 = vmatprep.subr.bf16.mxu0 %v2296
  %2354 = vmatpush1.bf16.msra.mxu0 %v2295
  %2355 = vmatprep.subr.bf16.mxu0 %v2300
  %2356 = vmatpush1.bf16.msra.mxu0 %v2299
  %2357 = vmatprep.subr.bf16.mxu0 %v2304
  %2358 = vmatpush1.bf16.msra.mxu0 %v2303
  %2359 = vmatprep.subr.bf16.mxu0 %v2308
  %2360 = vmatpush1.bf16.msra.mxu0 %v2307
  %2361 = vmatprep.subr.bf16.mxu0 %v2312
  %2362 = vmatpush1.bf16.msra.mxu0 %v2311
  %2363 = vmatprep.subr.bf16.mxu0 0
  %2364 = vmatpush1.bf16.msra.mxu0 0
  %2365 = vmatprep.subr.bf16.mxu0 0
  %2366 = vmatpush1.bf16.msra.mxu0 0
  %2367 = vmatprep.subr.bf16.mxu0 0
  %2368 = vmatpush1.bf16.msra.mxu0 0
  %2369 = vmatprep.subr.bf16.mxu0 0
  %2370 = vmatpush1.bf16.msra.mxu0 0
  %2371 = vmatprep.subr.bf16.mxu0 0
  %2372 = vmatpush1.bf16.msra.mxu0 0
  %2373 = vmatprep.subr.bf16.mxu0 0
  %2374 = vmatpush1.bf16.msra.mxu0 0
  %2375 = vmatprep.subr.bf16.mxu0 0
  %2376 = vmatpush1.bf16.msra.mxu0 0
  %2377 = vmatprep.subr.bf16.mxu0 0
  %2378 = vmatpush1.bf16.msra.mxu0 0
  %2379 = vmatprep.mubr.bf16.mxu0 0
  %2380 = vmatmul.mubr.bf16.gmra.mrb[0].mxu0 %v2154
  %v2381 = vpop.f32.mrb[0].mxu0
  %v2382 = vadd.f32 0.0, %v2381
  %v2383 = vpop.f32.mrb[0].mxu0
  %v2384 = vadd.f32 0.0, %v2383
  %v2385 = vpop.f32.mrb[0].mxu0
  %v2386 = vpop.f32.mrb[0].mxu0
  %2387 = vdwg.mxu0
  %2388 = vmatprep.subr.bf16.mxu0 %v2286
  %2389 = vmatpush1.bf16.msra.mxu0 %v2285
  %2390 = vmatprep.subr.bf16.mxu0 %v2290
  %2391 = vmatpush1.bf16.msra.mxu0 %v2289
  %2392 = vmatprep.subr.bf16.mxu0 %v2294
  %2393 = vmatpush1.bf16.msra.mxu0 %v2293
  %2394 = vmatprep.subr.bf16.mxu0 %v2298
  %2395 = vmatpush1.bf16.msra.mxu0 %v2297
  %2396 = vmatprep.subr.bf16.mxu0 %v2302
  %2397 = vmatpush1.bf16.msra.mxu0 %v2301
  %2398 = vmatprep.subr.bf16.mxu0 %v2306
  %2399 = vmatpush1.bf16.msra.mxu0 %v2305
  %2400 = vmatprep.subr.bf16.mxu0 %v2310
  %2401 = vmatpush1.bf16.msra.mxu0 %v2309
  %2402 = vmatprep.subr.bf16.mxu0 %v2314
  %2403 = vmatpush1.bf16.msra.mxu0 %v2313
  %2404 = vmatprep.subr.bf16.mxu0 0
  %2405 = vmatpush1.bf16.msra.mxu0 0
  %2406 = vmatprep.subr.bf16.mxu0 0
  %2407 = vmatpush1.bf16.msra.mxu0 0
  %2408 = vmatprep.subr.bf16.mxu0 0
  %2409 = vmatpush1.bf16.msra.mxu0 0
  %2410 = vmatprep.subr.bf16.mxu0 0
  %2411 = vmatpush1.bf16.msra.mxu0 0
  %2412 = vmatprep.subr.bf16.mxu0 0
  %2413 = vmatpush1.bf16.msra.mxu0 0
  %2414 = vmatprep.subr.bf16.mxu0 0
  %2415 = vmatpush1.bf16.msra.mxu0 0
  %2416 = vmatprep.subr.bf16.mxu0 0
  %2417 = vmatpush1.bf16.msra.mxu0 0
  %2418 = vmatprep.subr.bf16.mxu0 0
  %2419 = vmatpush1.bf16.msra.mxu0 0
  %2420 = vmatprep.mubr.bf16.mxu0 0
  %2421 = vmatmul.mubr.bf16.gmra.mrb[0].mxu0 %v2154
  %v2422 = vpop.f32.mrb[0].mxu0
  %v2423 = vadd.f32 0.0, %v2422
  %v2424 = vpop.f32.mrb[0].mxu0
  %v2425 = vadd.f32 0.0, %v2424
  %v2426 = vpop.f32.mrb[0].mxu0
  %v2427 = vpop.f32.mrb[0].mxu0
  %2428 = vdwg.mxu0
  %v2429 = vadd.f32 %v2150, %v2382
  %v2430 = vadd.f32 %v2151, %v2384
  %v2431 = vadd.f32 %v2152, %v2423
  %v2432 = vadd.f32 %v2153, %v2425
  %v2433 = vmul.f32 %v2429, 0.5
  %v2434 = vtanh.pop %v2433
  %v2435 = vmul.f32 %v2434, 0.5
  %v2436 = vadd.f32 %v2435, 0.5
  %v2437 = vmul.f32 %v2430, 0.5
  %v2438 = vtanh.pop %v2437
  %v2439 = vmul.f32 %v2438, 0.5
  %v2440 = vadd.f32 %v2439, 0.5
  %v2441 = vtanh.pop %v2431
  %v2442 = vmul.f32 %v2432, 0.5
  %v2443 = vtanh.pop %v2442
  %v2444 = vmul.f32 %v2443, 0.5
  %v2445 = vadd.f32 %v2444, 0.5
  %v2446 = vmul.f32 %v2440, %v2142
  %v2447 = vmul.f32 %v2436, %v2441
  %v2448 = vadd.f32 %v2446, %v2447
  %v2449 = vtanh.pop %v2448
  %v2450 = vmul.f32 %v2445, %v2449
  %2451 = vst [vmem:[#allocation3 + $0x30] sm:$0xff] %v2450
  %v2452 = vld [vmem:[#allocation2 + $0xe0] sm:$0xff]
  %v2453 = vld [vmem:[#allocation2 + $0xe8] sm:$0xff]
  %v2454 = vld [vmem:[#allocation2 + $0xf0] sm:$0xff]
  %v2455 = vld [vmem:[#allocation2 + $0xf8] sm:$0xff]
  %v2456 = vadd.f32 %v2452, %v304
  %v2457 = vadd.f32 %v2453, %v305
  %v2458 = vadd.f32 %v2454, %v306
  %v2459 = vadd.f32 %v2455, %v307
  %v2460 = vpack.c.bf16 %v2450, %v2450
  %v2461 = vld [vmem:[%s5] sm:$0xff]
  %v2462 = vld [vmem:[%s5 + $0x8] sm:$0xff]
  %v2463 = vld [vmem:[%s5 + $0x10] sm:$0xff]
  %v2464 = vld [vmem:[%s5 + $0x18] sm:$0xff]
  %v2465 = vld [vmem:[%s5 + $0x20] sm:$0xff]
  %v2466 = vld [vmem:[%s5 + $0x28] sm:$0xff]
  %v2467 = vld [vmem:[%s5 + $0x30] sm:$0xff]
  %v2468 = vld [vmem:[%s5 + $0x38] sm:$0xff]
  %v2469 = vld [vmem:[%s5 + $0x40] sm:$0xff]
  %v2470 = vld [vmem:[%s5 + $0x48] sm:$0xff]
  %v2471 = vld [vmem:[%s5 + $0x50] sm:$0xff]
  %v2472 = vld [vmem:[%s5 + $0x58] sm:$0xff]
  %v2473 = vld [vmem:[%s5 + $0x60] sm:$0xff]
  %v2474 = vld [vmem:[%s5 + $0x68] sm:$0xff]
  %v2475 = vld [vmem:[%s5 + $0x70] sm:$0xff]
  %v2476 = vld [vmem:[%s5 + $0x78] sm:$0xff]
  %v2477 = vld [vmem:[%s5 + $0x80] sm:$0xff]
  %v2478 = vld [vmem:[%s5 + $0x88] sm:$0xff]
  %v2479 = vld [vmem:[%s5 + $0x90] sm:$0xff]
  %v2480 = vld [vmem:[%s5 + $0x98] sm:$0xff]
  %v2481 = vld [vmem:[%s5 + $0xa0] sm:$0xff]
  %v2482 = vld [vmem:[%s5 + $0xa8] sm:$0xff]
  %v2483 = vld [vmem:[%s5 + $0xb0] sm:$0xff]
  %v2484 = vld [vmem:[%s5 + $0xb8] sm:$0xff]
  %v2485 = vld [vmem:[%s5 + $0xc0] sm:$0xff]
  %v2486 = vld [vmem:[%s5 + $0xc8] sm:$0xff]
  %v2487 = vld [vmem:[%s5 + $0xd0] sm:$0xff]
  %v2488 = vld [vmem:[%s5 + $0xd8] sm:$0xff]
  %v2489 = vld [vmem:[%s5 + $0xe0] sm:$0xff]
  %v2490 = vld [vmem:[%s5 + $0xe8] sm:$0xff]
  %v2491 = vld [vmem:[%s5 + $0xf0] sm:$0xff]
  %v2492 = vld [vmem:[%s5 + $0xf8] sm:$0xff]
  %v2525 = vunpack.c.l.b16 %v2461
  %v2526 = vunpack.c.h.b16 %v2461
  %v2527 = vunpack.c.l.b16 %v2462
  %v2528 = vunpack.c.h.b16 %v2462
  %v2529 = vunpack.c.l.b16 %v2463
  %v2530 = vunpack.c.h.b16 %v2463
  %v2531 = vunpack.c.l.b16 %v2464
  %v2532 = vunpack.c.h.b16 %v2464
  %v2533 = vunpack.c.l.b16 %v2465
  %v2534 = vunpack.c.h.b16 %v2465
  %v2535 = vunpack.c.l.b16 %v2466
  %v2536 = vunpack.c.h.b16 %v2466
  %v2537 = vunpack.c.l.b16 %v2467
  %v2538 = vunpack.c.h.b16 %v2467
  %v2539 = vunpack.c.l.b16 %v2468
  %v2540 = vunpack.c.h.b16 %v2468
  %v2541 = vunpack.c.l.b16 %v2469
  %v2542 = vunpack.c.h.b16 %v2469
  %v2543 = vunpack.c.l.b16 %v2470
  %v2544 = vunpack.c.h.b16 %v2470
  %v2545 = vunpack.c.l.b16 %v2471
  %v2546 = vunpack.c.h.b16 %v2471
  %v2547 = vunpack.c.l.b16 %v2472
  %v2548 = vunpack.c.h.b16 %v2472
  %v2549 = vunpack.c.l.b16 %v2473
  %v2550 = vunpack.c.h.b16 %v2473
  %v2551 = vunpack.c.l.b16 %v2474
  %v2552 = vunpack.c.h.b16 %v2474
  %v2553 = vunpack.c.l.b16 %v2475
  %v2554 = vunpack.c.h.b16 %v2475
  %v2555 = vunpack.c.l.b16 %v2476
  %v2556 = vunpack.c.h.b16 %v2476
  %v2557 = vunpack.c.l.b16 %v2477
  %v2558 = vunpack.c.h.b16 %v2477
  %v2559 = vunpack.c.l.b16 %v2478
  %v2560 = vunpack.c.h.b16 %v2478
  %v2561 = vunpack.c.l.b16 %v2479
  %v2562 = vunpack.c.h.b16 %v2479
  %v2563 = vunpack.c.l.b16 %v2480
  %v2564 = vunpack.c.h.b16 %v2480
  %v2565 = vunpack.c.l.b16 %v2481
  %v2566 = vunpack.c.h.b16 %v2481
  %v2567 = vunpack.c.l.b16 %v2482
  %v2568 = vunpack.c.h.b16 %v2482
  %v2569 = vunpack.c.l.b16 %v2483
  %v2570 = vunpack.c.h.b16 %v2483
  %v2571 = vunpack.c.l.b16 %v2484
  %v2572 = vunpack.c.h.b16 %v2484
  %v2573 = vunpack.c.l.b16 %v2485
  %v2574 = vunpack.c.h.b16 %v2485
  %v2575 = vunpack.c.l.b16 %v2486
  %v2576 = vunpack.c.h.b16 %v2486
  %v2577 = vunpack.c.l.b16 %v2487
  %v2578 = vunpack.c.h.b16 %v2487
  %v2579 = vunpack.c.l.b16 %v2488
  %v2580 = vunpack.c.h.b16 %v2488
  %v2581 = vunpack.c.l.b16 %v2489
  %v2582 = vunpack.c.h.b16 %v2489
  %v2583 = vunpack.c.l.b16 %v2490
  %v2584 = vunpack.c.h.b16 %v2490
  %v2585 = vunpack.c.l.b16 %v2491
  %v2586 = vunpack.c.h.b16 %v2491
  %v2587 = vunpack.c.l.b16 %v2492
  %v2588 = vunpack.c.h.b16 %v2492
  %v2589 = vpack.c.b16 %v2529, %v2525
  %v2590 = vpack.c.b16 %v2530, %v2526
  %v2591 = vpack.c.b16 %v2531, %v2527
  %v2592 = vpack.c.b16 %v2532, %v2528
  %v2593 = vpack.c.b16 %v2537, %v2533
  %v2594 = vpack.c.b16 %v2538, %v2534
  %v2595 = vpack.c.b16 %v2539, %v2535
  %v2596 = vpack.c.b16 %v2540, %v2536
  %v2597 = vpack.c.b16 %v2545, %v2541
  %v2598 = vpack.c.b16 %v2546, %v2542
  %v2599 = vpack.c.b16 %v2547, %v2543
  %v2600 = vpack.c.b16 %v2548, %v2544
  %v2601 = vpack.c.b16 %v2553, %v2549
  %v2602 = vpack.c.b16 %v2554, %v2550
  %v2603 = vpack.c.b16 %v2555, %v2551
  %v2604 = vpack.c.b16 %v2556, %v2552
  %v2605 = vpack.c.b16 %v2561, %v2557
  %v2606 = vpack.c.b16 %v2562, %v2558
  %v2607 = vpack.c.b16 %v2563, %v2559
  %v2608 = vpack.c.b16 %v2564, %v2560
  %v2609 = vpack.c.b16 %v2569, %v2565
  %v2610 = vpack.c.b16 %v2570, %v2566
  %v2611 = vpack.c.b16 %v2571, %v2567
  %v2612 = vpack.c.b16 %v2572, %v2568
  %v2613 = vpack.c.b16 %v2577, %v2573
  %v2614 = vpack.c.b16 %v2578, %v2574
  %v2615 = vpack.c.b16 %v2579, %v2575
  %v2616 = vpack.c.b16 %v2580, %v2576
  %v2617 = vpack.c.b16 %v2585, %v2581
  %v2618 = vpack.c.b16 %v2586, %v2582
  %v2619 = vpack.c.b16 %v2587, %v2583
  %v2620 = vpack.c.b16 %v2588, %v2584
  %2653 = vmatprep.subr.bf16.mxu0 %v2590
  %2654 = vmatpush1.bf16.msra.mxu0 %v2589
  %2655 = vmatprep.subr.bf16.mxu0 %v2594
  %2656 = vmatpush1.bf16.msra.mxu0 %v2593
  %2657 = vmatprep.subr.bf16.mxu0 %v2598
  %2658 = vmatpush1.bf16.msra.mxu0 %v2597
  %2659 = vmatprep.subr.bf16.mxu0 %v2602
  %2660 = vmatpush1.bf16.msra.mxu0 %v2601
  %2661 = vmatprep.subr.bf16.mxu0 %v2606
  %2662 = vmatpush1.bf16.msra.mxu0 %v2605
  %2663 = vmatprep.subr.bf16.mxu0 %v2610
  %2664 = vmatpush1.bf16.msra.mxu0 %v2609
  %2665 = vmatprep.subr.bf16.mxu0 %v2614
  %2666 = vmatpush1.bf16.msra.mxu0 %v2613
  %2667 = vmatprep.subr.bf16.mxu0 %v2618
  %2668 = vmatpush1.bf16.msra.mxu0 %v2617
  %2669 = vmatprep.subr.bf16.mxu0 0
  %2670 = vmatpush1.bf16.msra.mxu0 0
  %2671 = vmatprep.subr.bf16.mxu0 0
  %2672 = vmatpush1.bf16.msra.mxu0 0
  %2673 = vmatprep.subr.bf16.mxu0 0
  %2674 = vmatpush1.bf16.msra.mxu0 0
  %2675 = vmatprep.subr.bf16.mxu0 0
  %2676 = vmatpush1.bf16.msra.mxu0 0
  %2677 = vmatprep.subr.bf16.mxu0 0
  %2678 = vmatpush1.bf16.msra.mxu0 0
  %2679 = vmatprep.subr.bf16.mxu0 0
  %2680 = vmatpush1.bf16.msra.mxu0 0
  %2681 = vmatprep.subr.bf16.mxu0 0
  %2682 = vmatpush1.bf16.msra.mxu0 0
  %2683 = vmatprep.subr.bf16.mxu0 0
  %2684 = vmatpush1.bf16.msra.mxu0 0
  %2685 = vmatprep.mubr.bf16.mxu0 0
  %2686 = vmatmul.mubr.bf16.gmra.mrb[0].mxu0 %v2460
  %v2687 = vpop.f32.mrb[0].mxu0
  %v2688 = vadd.f32 0.0, %v2687
  %v2689 = vpop.f32.mrb[0].mxu0
  %v2690 = vadd.f32 0.0, %v2689
  %v2691 = vpop.f32.mrb[0].mxu0
  %v2692 = vpop.f32.mrb[0].mxu0
  %2693 = vdwg.mxu0
  %2694 = vmatprep.subr.bf16.mxu0 %v2592
  %2695 = vmatpush1.bf16.msra.mxu0 %v2591
  %2696 = vmatprep.subr.bf16.mxu0 %v2596
  %2697 = vmatpush1.bf16.msra.mxu0 %v2595
  %2698 = vmatprep.subr.bf16.mxu0 %v2600
  %2699 = vmatpush1.bf16.msra.mxu0 %v2599
  %2700 = vmatprep.subr.bf16.mxu0 %v2604
  %2701 = vmatpush1.bf16.msra.mxu0 %v2603
  %2702 = vmatprep.subr.bf16.mxu0 %v2608
  %2703 = vmatpush1.bf16.msra.mxu0 %v2607
  %2704 = vmatprep.subr.bf16.mxu0 %v2612
  %2705 = vmatpush1.bf16.msra.mxu0 %v2611
  %2706 = vmatprep.subr.bf16.mxu0 %v2616
  %2707 = vmatpush1.bf16.msra.mxu0 %v2615
  %2708 = vmatprep.subr.bf16.mxu0 %v2620
  %2709 = vmatpush1.bf16.msra.mxu0 %v2619
  %2710 = vmatprep.subr.bf16.mxu0 0
  %2711 = vmatpush1.bf16.msra.mxu0 0
  %2712 = vmatprep.subr.bf16.mxu0 0
  %2713 = vmatpush1.bf16.msra.mxu0 0
  %2714 = vmatprep.subr.bf16.mxu0 0
  %2715 = vmatpush1.bf16.msra.mxu0 0
  %2716 = vmatprep.subr.bf16.mxu0 0
  %2717 = vmatpush1.bf16.msra.mxu0 0
  %2718 = vmatprep.subr.bf16.mxu0 0
  %2719 = vmatpush1.bf16.msra.mxu0 0
  %2720 = vmatprep.subr.bf16.mxu0 0
  %2721 = vmatpush1.bf16.msra.mxu0 0
  %2722 = vmatprep.subr.bf16.mxu0 0
  %2723 = vmatpush1.bf16.msra.mxu0 0
  %2724 = vmatprep.subr.bf16.mxu0 0
  %2725 = vmatpush1.bf16.msra.mxu0 0
  %2726 = vmatprep.mubr.bf16.mxu0 0
  %2727 = vmatmul.mubr.bf16.gmra.mrb[0].mxu0 %v2460
  %v2728 = vpop.f32.mrb[0].mxu0
  %v2729 = vadd.f32 0.0, %v2728
  %v2730 = vpop.f32.mrb[0].mxu0
  %v2731 = vadd.f32 0.0, %v2730
  %v2732 = vpop.f32.mrb[0].mxu0
  %v2733 = vpop.f32.mrb[0].mxu0
  %2734 = vdwg.mxu0
  %v2735 = vadd.f32 %v2456, %v2688
  %v2736 = vadd.f32 %v2457, %v2690
  %v2737 = vadd.f32 %v2458, %v2729
  %v2738 = vadd.f32 %v2459, %v2731
  %v2739 = vmul.f32 %v2735, 0.5
  %v2740 = vtanh.pop %v2739
  %v2741 = vmul.f32 %v2740, 0.5
  %v2742 = vadd.f32 %v2741, 0.5
  %v2743 = vmul.f32 %v2736, 0.5
  %v2744 = vtanh.pop %v2743
  %v2745 = vmul.f32 %v2744, 0.5
  %v2746 = vadd.f32 %v2745, 0.5
  %v2747 = vtanh.pop %v2737
  %v2748 = vmul.f32 %v2738, 0.5
  %v2749 = vtanh.pop %v2748
  %v2750 = vmul.f32 %v2749, 0.5
  %v2751 = vadd.f32 %v2750, 0.5
  %v2752 = vmul.f32 %v2746, %v2448
  %v2753 = vmul.f32 %v2742, %v2747
  %v2754 = vadd.f32 %v2752, %v2753
  %v2755 = vtanh.pop %v2754
  %v2756 = vmul.f32 %v2751, %v2755
  %2757 = vst [vmem:[#allocation3 + $0x38] sm:$0xff] %v2756
  %v2758 = vld [vmem:[#allocation2 + $0x100] sm:$0xff]
  %v2759 = vld [vmem:[#allocation2 + $0x108] sm:$0xff]
  %v2760 = vld [vmem:[#allocation2 + $0x110] sm:$0xff]
  %v2761 = vld [vmem:[#allocation2 + $0x118] sm:$0xff]
  %v2762 = vadd.f32 %v2758, %v304
  %v2763 = vadd.f32 %v2759, %v305
  %v2764 = vadd.f32 %v2760, %v306
  %v2765 = vadd.f32 %v2761, %v307
  %v2766 = vpack.c.bf16 %v2756, %v2756
  %v2767 = vld [vmem:[%s5] sm:$0xff]
  %v2768 = vld [vmem:[%s5 + $0x8] sm:$0xff]
  %v2769 = vld [vmem:[%s5 + $0x10] sm:$0xff]
  %v2770 = vld [vmem:[%s5 + $0x18] sm:$0xff]
  %v2771 = vld [vmem:[%s5 + $0x20] sm:$0xff]
  %v2772 = vld [vmem:[%s5 + $0x28] sm:$0xff]
  %v2773 = vld [vmem:[%s5 + $0x30] sm:$0xff]
  %v2774 = vld [vmem:[%s5 + $0x38] sm:$0xff]
  %v2775 = vld [vmem:[%s5 + $0x40] sm:$0xff]
  %v2776 = vld [vmem:[%s5 + $0x48] sm:$0xff]
  %v2777 = vld [vmem:[%s5 + $0x50] sm:$0xff]
  %v2778 = vld [vmem:[%s5 + $0x58] sm:$0xff]
  %v2779 = vld [vmem:[%s5 + $0x60] sm:$0xff]
  %v2780 = vld [vmem:[%s5 + $0x68] sm:$0xff]
  %v2781 = vld [vmem:[%s5 + $0x70] sm:$0xff]
  %v2782 = vld [vmem:[%s5 + $0x78] sm:$0xff]
  %v2783 = vld [vmem:[%s5 + $0x80] sm:$0xff]
  %v2784 = vld [vmem:[%s5 + $0x88] sm:$0xff]
  %v2785 = vld [vmem:[%s5 + $0x90] sm:$0xff]
  %v2786 = vld [vmem:[%s5 + $0x98] sm:$0xff]
  %v2787 = vld [vmem:[%s5 + $0xa0] sm:$0xff]
  %v2788 = vld [vmem:[%s5 + $0xa8] sm:$0xff]
  %v2789 = vld [vmem:[%s5 + $0xb0] sm:$0xff]
  %v2790 = vld [vmem:[%s5 + $0xb8] sm:$0xff]
  %v2791 = vld [vmem:[%s5 + $0xc0] sm:$0xff]
  %v2792 = vld [vmem:[%s5 + $0xc8] sm:$0xff]
  %v2793 = vld [vmem:[%s5 + $0xd0] sm:$0xff]
  %v2794 = vld [vmem:[%s5 + $0xd8] sm:$0xff]
  %v2795 = vld [vmem:[%s5 + $0xe0] sm:$0xff]
  %v2796 = vld [vmem:[%s5 + $0xe8] sm:$0xff]
  %v2797 = vld [vmem:[%s5 + $0xf0] sm:$0xff]
  %v2798 = vld [vmem:[%s5 + $0xf8] sm:$0xff]
  %v2831 = vunpack.c.l.b16 %v2767
  %v2832 = vunpack.c.h.b16 %v2767
  %v2833 = vunpack.c.l.b16 %v2768
  %v2834 = vunpack.c.h.b16 %v2768
  %v2835 = vunpack.c.l.b16 %v2769
  %v2836 = vunpack.c.h.b16 %v2769
  %v2837 = vunpack.c.l.b16 %v2770
  %v2838 = vunpack.c.h.b16 %v2770
  %v2839 = vunpack.c.l.b16 %v2771
  %v2840 = vunpack.c.h.b16 %v2771
  %v2841 = vunpack.c.l.b16 %v2772
  %v2842 = vunpack.c.h.b16 %v2772
  %v2843 = vunpack.c.l.b16 %v2773
  %v2844 = vunpack.c.h.b16 %v2773
  %v2845 = vunpack.c.l.b16 %v2774
  %v2846 = vunpack.c.h.b16 %v2774
  %v2847 = vunpack.c.l.b16 %v2775
  %v2848 = vunpack.c.h.b16 %v2775
  %v2849 = vunpack.c.l.b16 %v2776
  %v2850 = vunpack.c.h.b16 %v2776
  %v2851 = vunpack.c.l.b16 %v2777
  %v2852 = vunpack.c.h.b16 %v2777
  %v2853 = vunpack.c.l.b16 %v2778
  %v2854 = vunpack.c.h.b16 %v2778
  %v2855 = vunpack.c.l.b16 %v2779
  %v2856 = vunpack.c.h.b16 %v2779
  %v2857 = vunpack.c.l.b16 %v2780
  %v2858 = vunpack.c.h.b16 %v2780
  %v2859 = vunpack.c.l.b16 %v2781
  %v2860 = vunpack.c.h.b16 %v2781
  %v2861 = vunpack.c.l.b16 %v2782
  %v2862 = vunpack.c.h.b16 %v2782
  %v2863 = vunpack.c.l.b16 %v2783
  %v2864 = vunpack.c.h.b16 %v2783
  %v2865 = vunpack.c.l.b16 %v2784
  %v2866 = vunpack.c.h.b16 %v2784
  %v2867 = vunpack.c.l.b16 %v2785
  %v2868 = vunpack.c.h.b16 %v2785
  %v2869 = vunpack.c.l.b16 %v2786
  %v2870 = vunpack.c.h.b16 %v2786
  %v2871 = vunpack.c.l.b16 %v2787
  %v2872 = vunpack.c.h.b16 %v2787
  %v2873 = vunpack.c.l.b16 %v2788
  %v2874 = vunpack.c.h.b16 %v2788
  %v2875 = vunpack.c.l.b16 %v2789
  %v2876 = vunpack.c.h.b16 %v2789
  %v2877 = vunpack.c.l.b16 %v2790
  %v2878 = vunpack.c.h.b16 %v2790
  %v2879 = vunpack.c.l.b16 %v2791
  %v2880 = vunpack.c.h.b16 %v2791
  %v2881 = vunpack.c.l.b16 %v2792
  %v2882 = vunpack.c.h.b16 %v2792
  %v2883 = vunpack.c.l.b16 %v2793
  %v2884 = vunpack.c.h.b16 %v2793
  %v2885 = vunpack.c.l.b16 %v2794
  %v2886 = vunpack.c.h.b16 %v2794
  %v2887 = vunpack.c.l.b16 %v2795
  %v2888 = vunpack.c.h.b16 %v2795
  %v2889 = vunpack.c.l.b16 %v2796
  %v2890 = vunpack.c.h.b16 %v2796
  %v2891 = vunpack.c.l.b16 %v2797
  %v2892 = vunpack.c.h.b16 %v2797
  %v2893 = vunpack.c.l.b16 %v2798
  %v2894 = vunpack.c.h.b16 %v2798
  %v2895 = vpack.c.b16 %v2835, %v2831
  %v2896 = vpack.c.b16 %v2836, %v2832
  %v2897 = vpack.c.b16 %v2837, %v2833
  %v2898 = vpack.c.b16 %v2838, %v2834
  %v2899 = vpack.c.b16 %v2843, %v2839
  %v2900 = vpack.c.b16 %v2844, %v2840
  %v2901 = vpack.c.b16 %v2845, %v2841
  %v2902 = vpack.c.b16 %v2846, %v2842
  %v2903 = vpack.c.b16 %v2851, %v2847
  %v2904 = vpack.c.b16 %v2852, %v2848
  %v2905 = vpack.c.b16 %v2853, %v2849
  %v2906 = vpack.c.b16 %v2854, %v2850
  %v2907 = vpack.c.b16 %v2859, %v2855
  %v2908 = vpack.c.b16 %v2860, %v2856
  %v2909 = vpack.c.b16 %v2861, %v2857
  %v2910 = vpack.c.b16 %v2862, %v2858
  %v2911 = vpack.c.b16 %v2867, %v2863
  %v2912 = vpack.c.b16 %v2868, %v2864
  %v2913 = vpack.c.b16 %v2869, %v2865
  %v2914 = vpack.c.b16 %v2870, %v2866
  %v2915 = vpack.c.b16 %v2875, %v2871
  %v2916 = vpack.c.b16 %v2876, %v2872
  %v2917 = vpack.c.b16 %v2877, %v2873
  %v2918 = vpack.c.b16 %v2878, %v2874
  %v2919 = vpack.c.b16 %v2883, %v2879
  %v2920 = vpack.c.b16 %v2884, %v2880
  %v2921 = vpack.c.b16 %v2885, %v2881
  %v2922 = vpack.c.b16 %v2886, %v2882
  %v2923 = vpack.c.b16 %v2891, %v2887
  %v2924 = vpack.c.b16 %v2892, %v2888
  %v2925 = vpack.c.b16 %v2893, %v2889
  %v2926 = vpack.c.b16 %v2894, %v2890
  %2959 = vmatprep.subr.bf16.mxu0 %v2896
  %2960 = vmatpush1.bf16.msra.mxu0 %v2895
  %2961 = vmatprep.subr.bf16.mxu0 %v2900
  %2962 = vmatpush1.bf16.msra.mxu0 %v2899
  %2963 = vmatprep.subr.bf16.mxu0 %v2904
  %2964 = vmatpush1.bf16.msra.mxu0 %v2903
  %2965 = vmatprep.subr.bf16.mxu0 %v2908
  %2966 = vmatpush1.bf16.msra.mxu0 %v2907
  %2967 = vmatprep.subr.bf16.mxu0 %v2912
  %2968 = vmatpush1.bf16.msra.mxu0 %v2911
  %2969 = vmatprep.subr.bf16.mxu0 %v2916
  %2970 = vmatpush1.bf16.msra.mxu0 %v2915
  %2971 = vmatprep.subr.bf16.mxu0 %v2920
  %2972 = vmatpush1.bf16.msra.mxu0 %v2919
  %2973 = vmatprep.subr.bf16.mxu0 %v2924
  %2974 = vmatpush1.bf16.msra.mxu0 %v2923
  %2975 = vmatprep.subr.bf16.mxu0 0
  %2976 = vmatpush1.bf16.msra.mxu0 0
  %2977 = vmatprep.subr.bf16.mxu0 0
  %2978 = vmatpush1.bf16.msra.mxu0 0
  %2979 = vmatprep.subr.bf16.mxu0 0
  %2980 = vmatpush1.bf16.msra.mxu0 0
  %2981 = vmatprep.subr.bf16.mxu0 0
  %2982 = vmatpush1.bf16.msra.mxu0 0
  %2983 = vmatprep.subr.bf16.mxu0 0
  %2984 = vmatpush1.bf16.msra.mxu0 0
  %2985 = vmatprep.subr.bf16.mxu0 0
  %2986 = vmatpush1.bf16.msra.mxu0 0
  %2987 = vmatprep.subr.bf16.mxu0 0
  %2988 = vmatpush1.bf16.msra.mxu0 0
  %2989 = vmatprep.subr.bf16.mxu0 0
  %2990 = vmatpush1.bf16.msra.mxu0 0
  %2991 = vmatprep.mubr.bf16.mxu0 0
  %2992 = vmatmul.mubr.bf16.gmra.mrb[0].mxu0 %v2766
  %v2993 = vpop.f32.mrb[0].mxu0
  %v2994 = vadd.f32 0.0, %v2993
  %v2995 = vpop.f32.mrb[0].mxu0
  %v2996 = vadd.f32 0.0, %v2995
  %v2997 = vpop.f32.mrb[0].mxu0
  %v2998 = vpop.f32.mrb[0].mxu0
  %2999 = vdwg.mxu0
  %3000 = vmatprep.subr.bf16.mxu0 %v2898
  %3001 = vmatpush1.bf16.msra.mxu0 %v2897
  %3002 = vmatprep.subr.bf16.mxu0 %v2902
  %3003 = vmatpush1.bf16.msra.mxu0 %v2901
  %3004 = vmatprep.subr.bf16.mxu0 %v2906
  %3005 = vmatpush1.bf16.msra.mxu0 %v2905
  %3006 = vmatprep.subr.bf16.mxu0 %v2910
  %3007 = vmatpush1.bf16.msra.mxu0 %v2909
  %3008 = vmatprep.subr.bf16.mxu0 %v2914
  %3009 = vmatpush1.bf16.msra.mxu0 %v2913
  %3010 = vmatprep.subr.bf16.mxu0 %v2918
  %3011 = vmatpush1.bf16.msra.mxu0 %v2917
  %3012 = vmatprep.subr.bf16.mxu0 %v2922
  %3013 = vmatpush1.bf16.msra.mxu0 %v2921
  %3014 = vmatprep.subr.bf16.mxu0 %v2926
  %3015 = vmatpush1.bf16.msra.mxu0 %v2925
  %3016 = vmatprep.subr.bf16.mxu0 0
  %3017 = vmatpush1.bf16.msra.mxu0 0
  %3018 = vmatprep.subr.bf16.mxu0 0
  %3019 = vmatpush1.bf16.msra.mxu0 0
  %3020 = vmatprep.subr.bf16.mxu0 0
  %3021 = vmatpush1.bf16.msra.mxu0 0
  %3022 = vmatprep.subr.bf16.mxu0 0
  %3023 = vmatpush1.bf16.msra.mxu0 0
  %3024 = vmatprep.subr.bf16.mxu0 0
  %3025 = vmatpush1.bf16.msra.mxu0 0
  %3026 = vmatprep.subr.bf16.mxu0 0
  %3027 = vmatpush1.bf16.msra.mxu0 0
  %3028 = vmatprep.subr.bf16.mxu0 0
  %3029 = vmatpush1.bf16.msra.mxu0 0
  %3030 = vmatprep.subr.bf16.mxu0 0
  %3031 = vmatpush1.bf16.msra.mxu0 0
  %3032 = vmatprep.mubr.bf16.mxu0 0
  %3033 = vmatmul.mubr.bf16.gmra.mrb[0].mxu0 %v2766
  %v3034 = vpop.f32.mrb[0].mxu0
  %v3035 = vadd.f32 0.0, %v3034
  %v3036 = vpop.f32.mrb[0].mxu0
  %v3037 = vadd.f32 0.0, %v3036
  %v3038 = vpop.f32.mrb[0].mxu0
  %v3039 = vpop.f32.mrb[0].mxu0
  %3040 = vdwg.mxu0
  %v3041 = vadd.f32 %v2762, %v2994
  %v3042 = vadd.f32 %v2763, %v2996
  %v3043 = vadd.f32 %v2764, %v3035
  %v3044 = vadd.f32 %v2765, %v3037
  %v3045 = vmul.f32 %v3041, 0.5
  %v3046 = vtanh.pop %v3045
  %v3047 = vmul.f32 %v3046, 0.5
  %v3048 = vadd.f32 %v3047, 0.5
  %v3049 = vmul.f32 %v3042, 0.5
  %v3050 = vtanh.pop %v3049
  %v3051 = vmul.f32 %v3050, 0.5
  %v3052 = vadd.f32 %v3051, 0.5
  %v3053 = vtanh.pop %v3043
  %v3054 = vmul.f32 %v3044, 0.5
  %v3055 = vtanh.pop %v3054
  %v3056 = vmul.f32 %v3055, 0.5
  %v3057 = vadd.f32 %v3056, 0.5
  %v3058 = vmul.f32 %v3052, %v2754
  %v3059 = vmul.f32 %v3048, %v3053
  %v3060 = vadd.f32 %v3058, %v3059
  %v3061 = vtanh.pop %v3060
  %v3062 = vmul.f32 %v3057, %v3061
  %3063 = vst [vmem:[#allocation3 + $0x40] sm:$0xff] %v3062
  %v3064 = vld [vmem:[#allocation3] sm:$0xff]
  %v3065 = vld [vmem:[#allocation3 + $0x8] sm:$0xff]
  %v3066 = vld [vmem:[#allocation3 + $0x10] sm:$0xff]
  %v3067 = vld [vmem:[#allocation3 + $0x18] sm:$0xff]
  %v3068 = vld [vmem:[#allocation3 + $0x20] sm:$0xff]
  %v3069 = vld [vmem:[#allocation3 + $0x28] sm:$0xff]
  %v3070 = vld [vmem:[#allocation3 + $0x30] sm:$0xff]
  %v3071 = vld [vmem:[#allocation3 + $0x38] sm:$0xff]
  %v3072 = vld [vmem:[#allocation3 + $0x40] sm:$0xff]
  %v3073 = vpack.c.bf16 %v3065, %v3064
  %v3074 = vpack.c.bf16 %v3067, %v3066
  %v3075 = vpack.c.bf16 %v3069, %v3068
  %v3076 = vpack.c.bf16 %v3071, %v3070
  %v3077 = vpack.c.bf16 %v3072, %v3072
  %v3078 = vld [vmem:[%s6] sm:$0xf]
  %v3079 = vld [vmem:[%s6 + $0x4] sm:$0xf]
  %v3080 = vld [vmem:[%s6 + $0x8] sm:$0xf]
  %v3081 = vld [vmem:[%s6 + $0xc] sm:$0xf]
  %v3082 = vld [vmem:[%s6 + $0x10] sm:$0xf]
  %v3083 = vld [vmem:[%s6 + $0x14] sm:$0xf]
  %v3084 = vld [vmem:[%s6 + $0x18] sm:$0xf]
  %v3085 = vld [vmem:[%s6 + $0x1c] sm:$0xf]
  %v3086 = vld [vmem:[%s6 + $0x20] sm:$0xf]
  %v3087 = vld [vmem:[%s6 + $0x24] sm:$0xf]
  %v3088 = vld [vmem:[%s6 + $0x28] sm:$0xf]
  %v3089 = vld [vmem:[%s6 + $0x2c] sm:$0xf]
  %v3090 = vld [vmem:[%s6 + $0x30] sm:$0xf]
  %v3091 = vld [vmem:[%s6 + $0x34] sm:$0xf]
  %v3092 = vld [vmem:[%s6 + $0x38] sm:$0xf]
  %v3093 = vld [vmem:[%s6 + $0x3c] sm:$0xf]
  %v3094 = vld [vmem:[%s7] sm:$0x1]
  %v3096 = vlaneseq
  %v3097 = vshrl.u32 %v3096, 7
  %v3098 = vsub.s32 0, %v3097
  %v3099 = vrot.slane %v3094, %v3098
  %v3117 = vunpack.c.l.b16 %v3078
  %v3118 = vunpack.c.l.b16 %v3079
  %v3119 = vunpack.c.l.b16 %v3080
  %v3120 = vunpack.c.l.b16 %v3081
  %v3121 = vunpack.c.l.b16 %v3082
  %v3122 = vunpack.c.l.b16 %v3083
  %v3123 = vunpack.c.l.b16 %v3084
  %v3124 = vunpack.c.l.b16 %v3085
  %v3125 = vunpack.c.l.b16 %v3086
  %v3126 = vunpack.c.l.b16 %v3087
  %v3127 = vunpack.c.l.b16 %v3088
  %v3128 = vunpack.c.l.b16 %v3089
  %v3129 = vunpack.c.l.b16 %v3090
  %v3130 = vunpack.c.l.b16 %v3091
  %v3131 = vunpack.c.l.b16 %v3092
  %v3132 = vunpack.c.l.b16 %v3093
  %v3133 = vpack.c.b16 %v3118, %v3117
  %v3134 = vpack.c.b16 %v3120, %v3119
  %v3135 = vpack.c.b16 %v3122, %v3121
  %v3136 = vpack.c.b16 %v3124, %v3123
  %v3137 = vpack.c.b16 %v3126, %v3125
  %v3138 = vpack.c.b16 %v3128, %v3127
  %v3139 = vpack.c.b16 %v3130, %v3129
  %v3140 = vpack.c.b16 %v3132, %v3131
  %3149 = vmatprep.subr.bf16.mxu0 0
  %3150 = vmatpush1.bf16.msra.mxu0 %v3133
  %3151 = vmatprep.subr.bf16.mxu0 0
  %3152 = vmatpush1.bf16.msra.mxu0 %v3134
  %3153 = vmatprep.subr.bf16.mxu0 0
  %3154 = vmatpush1.bf16.msra.mxu0 %v3135
  %3155 = vmatprep.subr.bf16.mxu0 0
  %3156 = vmatpush1.bf16.msra.mxu0 %v3136
  %3157 = vmatprep.subr.bf16.mxu0 0
  %3158 = vmatpush1.bf16.msra.mxu0 %v3137
  %3159 = vmatprep.subr.bf16.mxu0 0
  %3160 = vmatpush1.bf16.msra.mxu0 %v3138
  %3161 = vmatprep.subr.bf16.mxu0 0
  %3162 = vmatpush1.bf16.msra.mxu0 %v3139
  %3163 = vmatprep.subr.bf16.mxu0 0
  %3164 = vmatpush1.bf16.msra.mxu0 %v3140
  %3165 = vmatprep.subr.bf16.mxu0 0
  %3166 = vmatpush1.bf16.msra.mxu0 0
  %3167 = vmatprep.subr.bf16.mxu0 0
  %3168 = vmatpush1.bf16.msra.mxu0 0
  %3169 = vmatprep.subr.bf16.mxu0 0
  %3170 = vmatpush1.bf16.msra.mxu0 0
  %3171 = vmatprep.subr.bf16.mxu0 0
  %3172 = vmatpush1.bf16.msra.mxu0 0
  %3173 = vmatprep.subr.bf16.mxu0 0
  %3174 = vmatpush1.bf16.msra.mxu0 0
  %3175 = vmatprep.subr.bf16.mxu0 0
  %3176 = vmatpush1.bf16.msra.mxu0 0
  %3177 = vmatprep.subr.bf16.mxu0 0
  %3178 = vmatpush1.bf16.msra.mxu0 0
  %3179 = vmatprep.subr.bf16.mxu0 0
  %3180 = vmatpush1.bf16.msra.mxu0 0
  %3181 = vmatprep.mubr.bf16.mxu0 0
  %3182 = vmatmul.mubr.bf16.gmra.mrb[0].mxu0 %v3073
  %v3183 = vpop.f32.mrb[0].mxu0
  %v3184 = vadd.f32 %v3099, %v3183
  %v3185 = vpop.f32.mrb[0].mxu0
  %v3186 = vpop.f32.mrb[0].mxu0
  %v3187 = vadd.f32 %v3099, %v3186
  %v3188 = vpop.f32.mrb[0].mxu0
  %3189 = vmatprep.mubr.bf16.mxu0 0
  %3190 = vmatmul.mubr.bf16.gmra.mrb[0].mxu0 %v3074
  %v3191 = vpop.f32.mrb[0].mxu0
  %v3192 = vadd.f32 %v3099, %v3191
  %v3193 = vpop.f32.mrb[0].mxu0
  %v3194 = vpop.f32.mrb[0].mxu0
  %v3195 = vadd.f32 %v3099, %v3194
  %v3196 = vpop.f32.mrb[0].mxu0
  %3197 = vmatprep.mubr.bf16.mxu0 0
  %3198 = vmatmul.mubr.bf16.gmra.mrb[0].mxu0 %v3075
  %v3199 = vpop.f32.mrb[0].mxu0
  %v3200 = vadd.f32 %v3099, %v3199
  %v3201 = vpop.f32.mrb[0].mxu0
  %v3202 = vpop.f32.mrb[0].mxu0
  %v3203 = vadd.f32 %v3099, %v3202
  %v3204 = vpop.f32.mrb[0].mxu0
  %3205 = vmatprep.mubr.bf16.mxu0 0
  %3206 = vmatmul.mubr.bf16.gmra.mrb[0].mxu0 %v3076
  %v3207 = vpop.f32.mrb[0].mxu0
  %v3208 = vadd.f32 %v3099, %v3207
  %v3209 = vpop.f32.mrb[0].mxu0
  %v3210 = vpop.f32.mrb[0].mxu0
  %v3211 = vadd.f32 %v3099, %v3210
  %v3212 = vpop.f32.mrb[0].mxu0
  %3213 = vmatprep.mubr.bf16.mxu0 0
  %3214 = vmatmul.mubr.bf16.gmra.mrb[0].mxu0 %v3077
  %v3215 = vpop.f32.mrb[0].mxu0
  %v3216 = vadd.f32 %v3099, %v3215
  %v3217 = vpop.f32.mrb[0].mxu0
  %v3218 = vpop.f32.mrb[0].mxu0
  %v3219 = vpop.f32.mrb[0].mxu0
  %3220 = vdwg.mxu0
  %3221 = vst [vmem:[%s8] sm:$0xff] %v3184
  %3222 = vst [vmem:[%s8 + $0x8] sm:$0xff] %v3187
  %3223 = vst [vmem:[%s8 + $0x10] sm:$0xff] %v3192
  %3224 = vst [vmem:[%s8 + $0x18] sm:$0xff] %v3195
  %3225 = vst [vmem:[%s8 + $0x20] sm:$0xff] %v3200
  %3226 = vst [vmem:[%s8 + $0x28] sm:$0xff] %v3203
  %3227 = vst [vmem:[%s8 + $0x30] sm:$0xff] %v3208
  %3228 = vst [vmem:[%s8 + $0x38] sm:$0xff] %v3211
  %3229 = vst [vmem:[%s8 + $0x40] sm:$0xff] %v3216
  // Predicated region
  $region34: #{forward.1} parent=0 // pred_check
    _
  $region35: #{forward.1} parent=0 // pred_check_branch
    %3231 = sbr.rel (0) target = $region37
  $region36: #{forward.1} parent=0 // pred_region
    _
  $region37: #{forward.1} parent=0 // pred_fallthru
    _
  // Predicated region
  $region38: #{forward.1} parent=0 // pred_check
    _
  $region39: #{forward.1} parent=0 // pred_check_branch
    %3233 = sbr.rel (0) target = $region41
  $region40: #{forward.1} parent=0 // pred_region
    _
  $region41: #{forward.1} parent=0 // pred_fallthru
    _

</llo_original>
